<compile_context>
chip_gen: v6e
topology: v6e:2x2x1
jax: 0.10.0
libtpu: 0.0.40
codegen_flags: <defaults>
</compile_context>

<pallas_src>
from functools import partial

import numpy as np
import jax
import jax.numpy as jnp
from jax import lax
from jax.experimental import pallas as pl
from jax.experimental.pallas import tpu as pltpu

# --- constants ---------------------------------------------------------------
CHALEARN13_SPATIAL_PATH = np.array(
    [[1, 0, 1], [0, 1, 2], [1, 2, 1], [4, 3, 1], [5, 4, 3], [6, 5, 4],
     [5, 6, 5], [8, 7, 1], [9, 8, 7], [10, 9, 8], [9, 10, 9]], dtype=np.int32)

SIG_DEPTH = 3
PATH_CH = 4                                       # 3 data channels + 1 time channel
SIG_CHANNELS = PATH_CH + PATH_CH ** 2 + PATH_CH ** 3   # 84
BN_EPS = 1e-5
LANE_PAD = 128                                    # lane-dense output width
BLK = 128                                         # rows per grid step (sweepable: 128/256/512)


# --- fused Pallas kernel ------------------------------------------------------
def _stem2_fused_kernel(feat_ref, w0_ref, reptile_ref, w23_ref, wf_ref,
                        fb_ref, fsh_ref, o_ref, *, c_out):
    f32 = jnp.float32

    def dot(u, v):
        return jnp.dot(u, v, preferred_element_type=f32)

    # One (BLK,28)x(28,224) matmul yields, for BOTH signature paths at once:
    #   cols [0,16)     raw-conv pre-activation (BN scale + bias folded)
    #   cols [16,32)    level-1 signature terms + every bias, already pushed
    #                   through the sig linears AND ps_fusion ("sigf_lin")
    #   cols [32,128)   R96 = [ra_s|ra_t|rb_s|rb_t|rc_s|rc_t]   (rep4->16)
    #   cols [128,224)  T96 = [ta_s|ta_t|tb_s|tb_t|tc_s|tc_t]   (tile4->16)
    z0 = dot(feat_ref[...], w0_ref[...])
    conv = jnp.maximum(z0[:, 0:c_out], 0.0)                    # raw branch post-ReLU
    sigf_lin = z0[:, c_out:2 * c_out]
    e0 = 2 * c_out
    R96 = z0[:, e0:e0 + 96]
    T96 = z0[:, e0 + 96:e0 + 192]
    RA, RB = R96[:, 0:32], R96[:, 32:64]
    TA, TB, TC = T96[:, 0:32], T96[:, 32:64], T96[:, 64:96]

    # Chen level 2 for both paths as lane-dense 32/96-wide VALU slabs.
    SQ = 0.5 * (R96 * T96)                                     # [A2 | B2 | C2]
    A2, B2, C2 = SQ[:, 0:32], SQ[:, 32:64], SQ[:, 64:96]
    AB2 = A2 + RA * TB + B2
    RAB = RA + RB
    S2 = AB2 + RAB * TC + C2                                   # [s2_spatial | s2_temporal]

    # Chen level 3 = five rank-1 terms per path, built by two merged
    # block-diagonal expansion dots (rep16->64 / tile16->64 for all 10 operands)
    # and one 640-lane elementwise multiply; reduced with 4 vreg-aligned adds.
    third = 1.0 / 3.0
    L_in = jnp.concatenate([A2, B2, AB2 + third * C2, RA, RAB], axis=-1)       # (BLK,160)
    R_in = jnp.concatenate([third * TA + TB, third * TB, TC, B2, C2], axis=-1)  # (BLK,160)
    L64 = dot(L_in, reptile_ref[:, 0:640])
    R64 = dot(R_in, reptile_ref[:, 640:1280])
    P = L64 * R64
    S3 = (P[:, 0:128] + P[:, 128:256] + P[:, 256:384]
          + P[:, 384:512] + P[:, 512:640])                     # [s3_spatial | s3_temporal]

    # ps_fusion is folded into the projection weights: one K=32 + one K=128 dot.
    w23 = w23_ref[...]
    sig_f = jnp.maximum(sigf_lin + dot(S2, w23[0:32, :]) + dot(S3, w23[32:160, :]), 0.0)

    # fusion: 1x1 conv -> ReLU -> BN (scale folded into wf, shift added post-ReLU)
    wf = wf_ref[...]
    y = jnp.maximum(dot(conv, wf[0:c_out, :]) + dot(sig_f, wf[c_out:2 * c_out, :])
                    + fb_ref[...], 0.0) + fsh_ref[...]
    o_ref[...] = y.astype(o_ref.dtype)


# --- parameter packing (one-time, outside jit) -------------------------------
def prepare_params(p, c_out):
    """Fold BN (eval mode), bottlenecks, basepoint differencing, time
    augmentation, the level-1 signature terms and ps_fusion into a handful of
    MXU-friendly matrices consumed by the fused kernel."""
    f32 = jnp.float32
    c_in = 3
    NF = 9 * c_in + 1                 # 27 gathered lanes + constant-1 lane
    NW = 2 * c_out + 12 * 16          # conv | sigf_lin | 12x 16-lane expansions

    def bn_fold(bn):
        scale = bn['gamma'] / jnp.sqrt(bn['var'] + BN_EPS)
        shift = bn['beta'] - bn['mean'] * scale
        return scale, shift

    s_r, sh_r = bn_fold(p['raw_bn'])
    s_p, sh_p = bn_fold(p['psf_bn'])
    s_f, sh_f = bn_fold(p['fus_bn'])
    # relu(z*s) == s*relu(z) requires s > 0 (true for eval BN with gamma > 0).
    for s in (s_r, s_p, s_f):
        assert bool(jnp.all(s > 0)), "BN fold requires gamma/sqrt(var+eps) > 0"

    # constant 0/1 replication / tiling matrices (exact)
    def rep_mat(n, times):            # out[c] = in[c // times]
        m = np.zeros((n, n * times), np.float32)
        for r in range(n):
            m[r, r * times:(r + 1) * times] = 1.0
        return m

    def tile_mat(n, times):           # out[c] = in[c % n]
        m = np.zeros((n, n * times), np.float32)
        for t in range(times):
            m[np.arange(n), t * n + np.arange(n)] = 1.0
        return m

    REP4, TILE4 = jnp.asarray(rep_mat(4, 4)), jnp.asarray(tile_mat(4, 4))     # (4,16)
    REP16, TILE16 = rep_mat(16, 4), tile_mat(16, 4)                           # (16,64)

    def block_diag(blk, n):
        r, c = blk.shape
        m = np.zeros((r * n, c * n), np.float32)
        for i in range(n):
            m[i * r:(i + 1) * r, i * c:(i + 1) * c] = blk
        return m

    # merged rep/tile expansion constants for the 10 level-3 operands (5 / path)
    reptile = jnp.asarray(np.concatenate(
        [block_diag(REP16, 10), block_diag(TILE16, 10)], axis=1))             # (160,1280)

    # affine maps feat(28) -> 4-channel path increments (bottleneck + basepoint
    # differencing + time channel folded; constants ride on the last feat lane)
    def inc_maps(rbase, wmat, bias):
        A_a = jnp.zeros((NF, 4), f32).at[rbase:rbase + 3, 0:3].set(wmat)
        A_a = A_a.at[NF - 1, 0:3].set(bias)
        A_b = jnp.zeros((NF, 4), f32).at[rbase:rbase + 3, 0:3].set(-wmat)
        A_b = A_b.at[rbase + 3:rbase + 6, 0:3].set(wmat).at[NF - 1, 3].set(0.5)
        A_c = jnp.zeros((NF, 4), f32).at[rbase + 3:rbase + 6, 0:3].set(-wmat)
        A_c = A_c.at[rbase + 6:rbase + 9, 0:3].set(wmat).at[NF - 1, 3].set(0.5)
        return A_a, A_b, A_c

    sA = inc_maps(9, p['sb_w'], p['sb_b'])       # spatial path  (feat lanes 9:18)
    tA = inc_maps(18, p['tb_w'], p['tb_b'])      # temporal path (feat lanes 18:27)

    # ps_fusion (BN scale folded) pushed into the per-level signature projections
    pws = p['psf_w'][0:c_out] * s_p[None, :]
    pwt = p['psf_w'][c_out:] * s_p[None, :]
    W1s, W2s, W3s = (p['ssig_w'][0:4] @ pws, p['ssig_w'][4:20] @ pws,
                     p['ssig_w'][20:84] @ pws)
    W1t, W2t, W3t = (p['tsig_w'][0:4] @ pwt, p['tsig_w'][4:20] @ pwt,
                     p['tsig_w'][20:84] @ pwt)
    bias_sig = p['ssig_b'] @ pws + p['tsig_b'] @ pwt + p['psf_b'] * s_p

    # --- W0 -------------------------------------------------------------------
    w0 = jnp.zeros((NF, NW), f32)
    # raw (1,3) conv (zero pad on T), BN scale folded, bias via the constant lane
    w9 = jnp.transpose(p['raw_w'][:, :, 0, :], (2, 1, 0)).reshape(3 * c_in, c_out)
    w0 = w0.at[0:3 * c_in, 0:c_out].set(w9 * s_r[None, :])
    w0 = w0.at[NF - 1, 0:c_out].set(p['raw_b'] * s_r)
    # level-1 signature terms of both paths (S1 = last augmented point) + biases
    w0 = w0.at[15:18, c_out:2 * c_out].add(p['sb_w'] @ W1s[0:3])
    w0 = w0.at[24:27, c_out:2 * c_out].add(p['tb_w'] @ W1t[0:3])
    w0 = w0.at[NF - 1, c_out:2 * c_out].add(
        p['sb_b'] @ W1s[0:3] + W1s[3] + p['tb_b'] @ W1t[0:3] + W1t[3] + bias_sig)
    # 12 x 16-lane rep/tile expansions of the six increments
    e0 = 2 * c_out
    incs = [sA[0], tA[0], sA[1], tA[1], sA[2], tA[2]]    # a_s a_t b_s b_t c_s c_t
    for m, A in enumerate(incs):
        w0 = w0.at[:, e0 + 16 * m:e0 + 16 * (m + 1)].add(A @ REP4)
        w0 = w0.at[:, e0 + 96 + 16 * m:e0 + 96 + 16 * (m + 1)].add(A @ TILE4)

    # level-2/3 projections (ps_fusion already applied); rows: [W2s|W2t|W3s|W3t]
    w23 = jnp.concatenate([W2s, W2t, W3s, W3t], axis=0)                        # (160, c_out)

    # fusion 1x1 conv: BN scale folded; raw/ps BN shifts folded into its bias
    wf = jnp.zeros((2 * c_out, LANE_PAD), f32)
    wf = wf.at[0:c_out, 0:c_out].set(p['fus_w'][0:c_out] * s_f[None, :])
    wf = wf.at[c_out:, 0:c_out].set(p['fus_w'][c_out:] * s_f[None, :])
    fb_eff = (p['fus_b'] + sh_r @ p['fus_w'][0:c_out] + sh_p @ p['fus_w'][c_out:]) * s_f
    fb = jnp.zeros((1, LANE_PAD), f32).at[0, 0:c_out].set(fb_eff)
    fsh = jnp.zeros((1, LANE_PAD), f32).at[0, 0:c_out].set(sh_f)

    return dict(w0=w0, reptile=reptile, w23=w23, wf=wf, fb=fb, fsh=fsh)


# --- forward (single pallas_call) --------------------------------------------
_W_NAMES = ['w0', 'reptile', 'w23', 'wf', 'fb', 'fsh']


def _full_spec(arr):
    nd = arr.ndim
    return pl.BlockSpec(arr.shape, lambda *i: (0,) * nd)


def stem2_forward(x, packed):
    B, C, J, T = x.shape
    assert C == 3 and J == 11, "STEM2 hard-codes 3 channels and the 11-joint graph"
    c_out = packed['wf'].shape[0] // 2
    M = B * J * T
    nblk = pl.cdiv(M, BLK)
    nblk += nblk % 2                   # even block count -> balanced 2-TC split on v7x
    M_pad = nblk * BLK

    # one-shot layout prep (compile-time-constant gathers / windows), all tiny
    xc = x.transpose(0, 2, 3, 1)                                        # (B, J, T, C)
    xz = jnp.pad(xc, ((0, 0), (0, 0), (1, 1), (0, 0)))                   # zero pad  (raw conv)
    xe = jnp.pad(xc, ((0, 0), (0, 0), (1, 1), (0, 0)), mode='edge')      # replicate (temporal path)
    patch = jnp.concatenate([xz[:, :, 0:T], xz[:, :, 1:T + 1], xz[:, :, 2:T + 2]], axis=-1)
    tpath = jnp.concatenate([xe[:, :, 0:T], xe[:, :, 1:T + 1], xe[:, :, 2:T + 2]], axis=-1)
    idx = jnp.asarray(CHALEARN13_SPATIAL_PATH)                           # (J, 3)
    spath = xc[:, idx].transpose(0, 1, 3, 2, 4).reshape(B, J, T, 3 * C)
    ones = jnp.ones((B, J, T, 1), jnp.float32)                           # bias lane
    feat = jnp.concatenate([patch, spath, tpath, ones], axis=-1).reshape(M, 9 * C + 1)
    feat = jnp.pad(feat, ((0, M_pad - M), (0, 0)))

    w_args = [packed[k] for k in _W_NAMES]
    out = pl.pallas_call(
        partial(_stem2_fused_kernel, c_out=c_out),
        out_shape=jax.ShapeDtypeStruct((M_pad, LANE_PAD), jnp.float32),
        grid=(nblk,),
        in_specs=[pl.BlockSpec((BLK, 9 * C + 1), lambda i: (i, 0))]
                 + [_full_spec(a) for a in w_args],
        out_specs=pl.BlockSpec((BLK, LANE_PAD), lambda i: (i, 0)),
        compiler_params=pltpu.CompilerParams(dimension_semantics=("parallel",)),
    )(feat, *w_args)

    return out[:M, :c_out].reshape(B, J, T, c_out).transpose(0, 3, 1, 2)


# --- pure-JAX reference (independent code path, mirrors the PyTorch module) ---
def _sig_linear_ref(pts, w, b):
    n = pts.shape[0]
    t = jnp.broadcast_to(jnp.array([0.0, 0.5, 1.0], pts.dtype)[None, :, None], (n, 3, 1))
    p = jnp.concatenate([pts, t], axis=-1)                    # (n, 3, 4)
    a, bb, c = p[:, 0], p[:, 1] - p[:, 0], p[:, 2] - p[:, 1]

    def o2(u, v):
        return jnp.einsum('ni,nj->nij', u, v).reshape(n, 16)

    def o3a(m, v):
        return jnp.einsum('nq,nk->nqk', m, v).reshape(n, 64)

    def o3b(u, m):
        return jnp.einsum('ni,nm->nim', u, m).reshape(n, 64)

    A2, B2, C2 = o2(a, a) / 2, o2(bb, bb) / 2, o2(c, c) / 2
    A3, B3, C3 = o3a(A2, a) / 3, o3a(B2, bb) / 3, o3a(C2, c) / 3
    AB1 = a + bb
    AB2 = A2 + o2(a, bb) + B2
    AB3 = A3 + o3a(A2, bb) + o3b(a, B2) + B3
    S1 = AB1 + c
    S2 = AB2 + o2(AB1, c) + C2
    S3 = AB3 + o3a(AB2, c) + o3b(AB1, C2) + C3
    sig = jnp.concatenate([S1, S2, S3], axis=1)
    return sig @ w + b


def stem2_reference(x, params):
    B, C, J, T = x.shape
    c_out = params['raw_b'].shape[0]

    def bn(z, bnp):
        scale = bnp['gamma'] / jnp.sqrt(bnp['var'] + BN_EPS)
        shift = bnp['beta'] - bnp['mean'] * scale
        return z * scale[None, :, None, None] + shift[None, :, None, None]

    # raw: conv(1,3), pad (0,1) -> ReLU -> BN
    x_conv = lax.conv_general_dilated(x, params['raw_w'], window_strides=(1, 1),
                                      padding=((0, 0), (1, 1)),
                                      dimension_numbers=('NCHW', 'OIHW', 'NCHW'))
    x_conv = x_conv + params['raw_b'][None, :, None, None]
    x_conv = bn(jax.nn.relu(x_conv), params['raw_bn'])

    # bottlenecks (1x1)
    xc = x.transpose(0, 2, 3, 1)                              # (B, J, T, C)
    x_sp = xc @ params['sb_w'] + params['sb_b']
    x_tp = xc @ params['tb_w'] + params['tb_b']

    # spatial signature branch
    idx = jnp.asarray(CHALEARN13_SPATIAL_PATH)
    sp_pts = x_sp[:, idx].transpose(1, 0, 3, 2, 4).reshape(J * B * T, 3, C)
    sp_sig = _sig_linear_ref(sp_pts, params['ssig_w'], params['ssig_b'])
    sp_sig = sp_sig.reshape(J, B, T, c_out).transpose(1, 3, 0, 2)

    # temporal signature branch (replicate padding on T)
    xe = jnp.pad(x_tp, ((0, 0), (0, 0), (1, 1), (0, 0)), mode='edge')
    tp_pts = jnp.stack([xe[:, :, i:i + 3, :] for i in range(T)], axis=0).reshape(T * B * J, 3, C)
    tp_sig = _sig_linear_ref(tp_pts, params['tsig_w'], params['tsig_b'])
    tp_sig = tp_sig.reshape(T, B, J, c_out).transpose(1, 3, 2, 0)

    # ps_fusion
    sig = jnp.concatenate([sp_sig, tp_sig], axis=1)
    z = jnp.einsum('bcjt,cd->bdjt', sig, params['psf_w']) + params['psf_b'][None, :, None, None]
    sig = bn(jax.nn.relu(z), params['psf_bn'])

    # fusion
    cat = jnp.concatenate([x_conv, sig], axis=1)
    z = jnp.einsum('bcjt,cd->bdjt', cat, params['fus_w']) + params['fus_b'][None, :, None, None]
    return bn(jax.nn.relu(z), params['fus_bn'])


# --- parameters ---------------------------------------------------------------
def init_params(key, c_in, c_out):
    assert c_in == 3
    ks = jax.random.split(key, 12)
    f32 = jnp.float32

    def rnd(k, shape, s):
        return (s * jax.random.normal(k, shape)).astype(f32)

    def bn_params(c):  # freshly-initialized eval-mode BatchNorm2d
        return dict(gamma=jnp.ones((c,), f32), beta=jnp.zeros((c,), f32),
                    mean=jnp.zeros((c,), f32), var=jnp.ones((c,), f32))

    return dict(
        raw_w=rnd(ks[0], (c_out, c_in, 1, 3), 0.2),           # OIHW
        raw_b=rnd(ks[1], (c_out,), 0.05),
        raw_bn=bn_params(c_out),
        sb_w=rnd(ks[2], (c_in, c_in), 0.4), sb_b=rnd(ks[3], (c_in,), 0.05),
        tb_w=rnd(ks[4], (c_in, c_in), 0.4), tb_b=rnd(ks[5], (c_in,), 0.05),
        ssig_w=rnd(ks[6], (SIG_CHANNELS, c_out), 0.1), ssig_b=rnd(ks[7], (c_out,), 0.05),
        tsig_w=rnd(ks[8], (SIG_CHANNELS, c_out), 0.1), tsig_b=rnd(ks[9], (c_out,), 0.05),
        psf_w=rnd(ks[10], (2 * c_out, c_out), 0.2), psf_b=jnp.zeros((c_out,), f32),
        psf_bn=bn_params(c_out),
        fus_w=rnd(ks[11], (2 * c_out, c_out), 0.2), fus_b=jnp.zeros((c_out,), f32),
        fus_bn=bn_params(c_out),
    )


# --- main ----------------------------------------------------------------------
if __name__ == "__main__":
    B, C_in, J, T = 2, 3, 11, 8          # J must be 11 (hand-crafted joint graph)
    C_out = 16

    key = jax.random.PRNGKey(0)
    kx, kp = jax.random.split(key)
    x = jax.random.normal(kx, (B, C_in, J, T), jnp.float32)
    params = init_params(kp, C_in, C_out)
    packed = prepare_params(params, C_out)   # one-time weight folding/packing

    fwd = jax.jit(stem2_forward)
    out = jax.block_until_ready(fwd(x, packed))
    assert out.shape == (B, C_out, J, T)
    assert bool(jnp.all(jnp.isfinite(out)))

    # end-to-end check against an independent pure-JAX implementation of the module
    want = jax.block_until_ready(stem2_reference(x, params))
    np.testing.assert_allclose(np.asarray(out), np.asarray(want), rtol=2e-3, atol=2e-3)

    print("KERNEL_OK")
</pallas_src>

<mosaic_0001>
module attributes {stable_mosaic.version = 11 : i64} {
  func.func @_stem2_fused_kernel(%arg0: i32, %arg1: memref<128x28xf32, #tpu.memory_space<vmem>>, %arg2: memref<28x224xf32, #tpu.memory_space<vmem>>, %arg3: memref<160x1280xf32, #tpu.memory_space<vmem>>, %arg4: memref<160x16xf32, #tpu.memory_space<vmem>>, %arg5: memref<32x128xf32, #tpu.memory_space<vmem>>, %arg6: memref<1x128xf32, #tpu.memory_space<vmem>>, %arg7: memref<1x128xf32, #tpu.memory_space<vmem>>, %arg8: memref<128x128xf32, #tpu.memory_space<vmem>>) attributes {dimension_semantics = [#tpu.dimension_semantics<parallel>], iteration_bounds = array<i64: 2>, scalar_prefetch = 0 : i64, scratch_operands = 0 : i64, tpu.core_type = #tpu.core_type<tc>, window_params = [{transform_indices = @transform_0, window_bounds = array<i64: 128, 28>}, {pipeline_mode = #tpu.pipeline_mode<synchronous>, transform_indices = @transform_1, window_bounds = array<i64: 28, 224>}, {pipeline_mode = #tpu.pipeline_mode<synchronous>, transform_indices = @transform_2, window_bounds = array<i64: 160, 1280>}, {pipeline_mode = #tpu.pipeline_mode<synchronous>, transform_indices = @transform_3, window_bounds = array<i64: 160, 16>}, {pipeline_mode = #tpu.pipeline_mode<synchronous>, transform_indices = @transform_4, window_bounds = array<i64: 32, 128>}, {pipeline_mode = #tpu.pipeline_mode<synchronous>, transform_indices = @transform_5, window_bounds = array<i64: 1, 128>}, {pipeline_mode = #tpu.pipeline_mode<synchronous>, transform_indices = @transform_6, window_bounds = array<i64: 1, 128>}, {transform_indices = @transform_7, window_bounds = array<i64: 128, 128>}]} {
    %c0 = arith.constant 0 : index
    %c0_0 = arith.constant 0 : index
    %0 = vector.load %arg1[%c0, %c0_0] : memref<128x28xf32, #tpu.memory_space<vmem>>, vector<128x28xf32>
    %c0_1 = arith.constant 0 : index
    %c0_2 = arith.constant 0 : index
    %1 = vector.load %arg2[%c0_1, %c0_2] : memref<28x224xf32, #tpu.memory_space<vmem>>, vector<28x224xf32>
    %cst = arith.constant dense<0.000000e+00> : vector<128x224xf32>
    %2 = tpu.matmul %0, %1, %cst {dimension_numbers = #tpu.dot_dimension_numbers<[1], [0], [0], [1], [0, 0, 1, 1], [], []>} : vector<128x28xf32>, vector<28x224xf32>, vector<128x224xf32> -> vector<128x224xf32>
    %3 = vector.extract_strided_slice %2 {offsets = [0, 0], sizes = [128, 16], strides = [1, 1]} : vector<128x224xf32> to vector<128x16xf32>
    %cst_3 = arith.constant 0.000000e+00 : f32
    %4 = vector.broadcast %cst_3 : f32 to vector<128x16xf32>
    %5 = arith.maximumf %3, %4 : vector<128x16xf32>
    %6 = vector.extract_strided_slice %2 {offsets = [0, 16], sizes = [128, 16], strides = [1, 1]} : vector<128x224xf32> to vector<128x16xf32>
    %7 = vector.extract_strided_slice %2 {offsets = [0, 32], sizes = [128, 96], strides = [1, 1]} : vector<128x224xf32> to vector<128x96xf32>
    %8 = vector.extract_strided_slice %2 {offsets = [0, 128], sizes = [128, 96], strides = [1, 1]} : vector<128x224xf32> to vector<128x96xf32>
    %9 = vector.extract_strided_slice %7 {offsets = [0, 0], sizes = [128, 32], strides = [1, 1]} : vector<128x96xf32> to vector<128x32xf32>
    %10 = vector.extract_strided_slice %7 {offsets = [0, 32], sizes = [128, 32], strides = [1, 1]} : vector<128x96xf32> to vector<128x32xf32>
    %11 = vector.extract_strided_slice %8 {offsets = [0, 0], sizes = [128, 32], strides = [1, 1]} : vector<128x96xf32> to vector<128x32xf32>
    %12 = vector.extract_strided_slice %8 {offsets = [0, 32], sizes = [128, 32], strides = [1, 1]} : vector<128x96xf32> to vector<128x32xf32>
    %13 = vector.extract_strided_slice %8 {offsets = [0, 64], sizes = [128, 32], strides = [1, 1]} : vector<128x96xf32> to vector<128x32xf32>
    %14 = arith.mulf %7, %8 : vector<128x96xf32>
    %cst_4 = arith.constant 5.000000e-01 : f32
    %15 = vector.broadcast %cst_4 : f32 to vector<128x96xf32>
    %16 = arith.mulf %15, %14 : vector<128x96xf32>
    %17 = vector.extract_strided_slice %16 {offsets = [0, 0], sizes = [128, 32], strides = [1, 1]} : vector<128x96xf32> to vector<128x32xf32>
    %18 = vector.extract_strided_slice %16 {offsets = [0, 32], sizes = [128, 32], strides = [1, 1]} : vector<128x96xf32> to vector<128x32xf32>
    %19 = vector.extract_strided_slice %16 {offsets = [0, 64], sizes = [128, 32], strides = [1, 1]} : vector<128x96xf32> to vector<128x32xf32>
    %20 = arith.mulf %9, %12 : vector<128x32xf32>
    %21 = arith.addf %17, %20 : vector<128x32xf32>
    %22 = arith.addf %21, %18 : vector<128x32xf32>
    %23 = arith.addf %9, %10 : vector<128x32xf32>
    %24 = arith.mulf %23, %13 : vector<128x32xf32>
    %25 = arith.addf %22, %24 : vector<128x32xf32>
    %26 = arith.addf %25, %19 : vector<128x32xf32>
    %cst_5 = arith.constant 0.333333343 : f32
    %27 = vector.broadcast %cst_5 : f32 to vector<128x32xf32>
    %28 = arith.mulf %27, %19 : vector<128x32xf32>
    %29 = arith.addf %22, %28 : vector<128x32xf32>
    %30 = tpu.concatenate %17, %18, %29, %9, %23 in 1 : vector<128x32xf32>, vector<128x32xf32>, vector<128x32xf32>, vector<128x32xf32>, vector<128x32xf32> -> vector<128x160xf32>
    %cst_6 = arith.constant 0.333333343 : f32
    %31 = vector.broadcast %cst_6 : f32 to vector<128x32xf32>
    %32 = arith.mulf %31, %11 : vector<128x32xf32>
    %33 = arith.addf %32, %12 : vector<128x32xf32>
    %cst_7 = arith.constant 0.333333343 : f32
    %34 = vector.broadcast %cst_7 : f32 to vector<128x32xf32>
    %35 = arith.mulf %34, %12 : vector<128x32xf32>
    %36 = tpu.concatenate %33, %35, %13, %18, %19 in 1 : vector<128x32xf32>, vector<128x32xf32>, vector<128x32xf32>, vector<128x32xf32>, vector<128x32xf32> -> vector<128x160xf32>
    %c0_8 = arith.constant 0 : index
    %c0_9 = arith.constant 0 : index
    %37 = vector.load %arg3[%c0_8, %c0_9] : memref<160x1280xf32, #tpu.memory_space<vmem>>, vector<160x640xf32>
    %cst_10 = arith.constant dense<0.000000e+00> : vector<128x640xf32>
    %38 = tpu.matmul %30, %37, %cst_10 {dimension_numbers = #tpu.dot_dimension_numbers<[1], [0], [0], [1], [0, 0, 1, 1], [], []>} : vector<128x160xf32>, vector<160x640xf32>, vector<128x640xf32> -> vector<128x640xf32>
    %c0_11 = arith.constant 0 : index
    %c640 = arith.constant 640 : index
    %39 = vector.load %arg3[%c0_11, %c640] : memref<160x1280xf32, #tpu.memory_space<vmem>>, vector<160x640xf32>
    %cst_12 = arith.constant dense<0.000000e+00> : vector<128x640xf32>
    %40 = tpu.matmul %36, %39, %cst_12 {dimension_numbers = #tpu.dot_dimension_numbers<[1], [0], [0], [1], [0, 0, 1, 1], [], []>} : vector<128x160xf32>, vector<160x640xf32>, vector<128x640xf32> -> vector<128x640xf32>
    %41 = arith.mulf %38, %40 : vector<128x640xf32>
    %42 = vector.extract_strided_slice %41 {offsets = [0, 0], sizes = [128, 128], strides = [1, 1]} : vector<128x640xf32> to vector<128x128xf32>
    %43 = vector.extract_strided_slice %41 {offsets = [0, 128], sizes = [128, 128], strides = [1, 1]} : vector<128x640xf32> to vector<128x128xf32>
    %44 = arith.addf %42, %43 : vector<128x128xf32>
    %45 = vector.extract_strided_slice %41 {offsets = [0, 256], sizes = [128, 128], strides = [1, 1]} : vector<128x640xf32> to vector<128x128xf32>
    %46 = arith.addf %44, %45 : vector<128x128xf32>
    %47 = vector.extract_strided_slice %41 {offsets = [0, 384], sizes = [128, 128], strides = [1, 1]} : vector<128x640xf32> to vector<128x128xf32>
    %48 = arith.addf %46, %47 : vector<128x128xf32>
    %49 = vector.extract_strided_slice %41 {offsets = [0, 512], sizes = [128, 128], strides = [1, 1]} : vector<128x640xf32> to vector<128x128xf32>
    %50 = arith.addf %48, %49 : vector<128x128xf32>
    %c0_13 = arith.constant 0 : index
    %c0_14 = arith.constant 0 : index
    %51 = vector.load %arg4[%c0_13, %c0_14] : memref<160x16xf32, #tpu.memory_space<vmem>>, vector<160x16xf32>
    %52 = vector.extract_strided_slice %51 {offsets = [0, 0], sizes = [32, 16], strides = [1, 1]} : vector<160x16xf32> to vector<32x16xf32>
    %cst_15 = arith.constant dense<0.000000e+00> : vector<128x16xf32>
    %53 = tpu.matmul %26, %52, %cst_15 {dimension_numbers = #tpu.dot_dimension_numbers<[1], [0], [0], [1], [0, 0, 1, 1], [], []>} : vector<128x32xf32>, vector<32x16xf32>, vector<128x16xf32> -> vector<128x16xf32>
    %54 = arith.addf %6, %53 : vector<128x16xf32>
    %55 = vector.extract_strided_slice %51 {offsets = [32, 0], sizes = [128, 16], strides = [1, 1]} : vector<160x16xf32> to vector<128x16xf32>
    %cst_16 = arith.constant dense<0.000000e+00> : vector<128x16xf32>
    %56 = tpu.matmul %50, %55, %cst_16 {dimension_numbers = #tpu.dot_dimension_numbers<[1], [0], [0], [1], [0, 0, 1, 1], [], []>} : vector<128x128xf32>, vector<128x16xf32>, vector<128x16xf32> -> vector<128x16xf32>
    %57 = arith.addf %54, %56 : vector<128x16xf32>
    %cst_17 = arith.constant 0.000000e+00 : f32
    %58 = vector.broadcast %cst_17 : f32 to vector<128x16xf32>
    %59 = arith.maximumf %57, %58 : vector<128x16xf32>
    %c0_18 = arith.constant 0 : index
    %c0_19 = arith.constant 0 : index
    %60 = vector.load %arg5[%c0_18, %c0_19] : memref<32x128xf32, #tpu.memory_space<vmem>>, vector<32x128xf32>
    %61 = vector.extract_strided_slice %60 {offsets = [0, 0], sizes = [16, 128], strides = [1, 1]} : vector<32x128xf32> to vector<16x128xf32>
    %cst_20 = arith.constant dense<0.000000e+00> : vector<128x128xf32>
    %62 = tpu.matmul %5, %61, %cst_20 {dimension_numbers = #tpu.dot_dimension_numbers<[1], [0], [0], [1], [0, 0, 1, 1], [], []>} : vector<128x16xf32>, vector<16x128xf32>, vector<128x128xf32> -> vector<128x128xf32>
    %63 = vector.extract_strided_slice %60 {offsets = [16, 0], sizes = [16, 128], strides = [1, 1]} : vector<32x128xf32> to vector<16x128xf32>
    %cst_21 = arith.constant dense<0.000000e+00> : vector<128x128xf32>
    %64 = tpu.matmul %59, %63, %cst_21 {dimension_numbers = #tpu.dot_dimension_numbers<[1], [0], [0], [1], [0, 0, 1, 1], [], []>} : vector<128x16xf32>, vector<16x128xf32>, vector<128x128xf32> -> vector<128x128xf32>
    %65 = arith.addf %62, %64 : vector<128x128xf32>
    %c0_22 = arith.constant 0 : index
    %c0_23 = arith.constant 0 : index
    %66 = vector.load %arg6[%c0_22, %c0_23] : memref<1x128xf32, #tpu.memory_space<vmem>>, vector<1x128xf32>
    %67 = vector.broadcast %66 : vector<1x128xf32> to vector<128x128xf32>
    %68 = arith.addf %65, %67 : vector<128x128xf32>
    %cst_24 = arith.constant 0.000000e+00 : f32
    %69 = vector.broadcast %cst_24 : f32 to vector<128x128xf32>
    %70 = arith.maximumf %68, %69 : vector<128x128xf32>
    %c0_25 = arith.constant 0 : index
    %c0_26 = arith.constant 0 : index
    %71 = vector.load %arg7[%c0_25, %c0_26] : memref<1x128xf32, #tpu.memory_space<vmem>>, vector<1x128xf32>
    %72 = vector.broadcast %71 : vector<1x128xf32> to vector<128x128xf32>
    %73 = arith.addf %70, %72 : vector<128x128xf32>
    %c0_27 = arith.constant 0 : index
    %c0_28 = arith.constant 0 : index
    %74 = vector.load %arg8[%c0_27, %c0_28] : memref<128x128xf32, #tpu.memory_space<vmem>>, vector<128x128xf32>
    tpu.vector_store %arg8[%c0_27, %c0_28], %73 {strides = array<i32>} : memref<128x128xf32, #tpu.memory_space<vmem>>, vector<128x128xf32>,
    return
  }
  func.func @transform_0(%arg0: i32) -> (i32, i32) {
    %c0_i32 = arith.constant 0 : i32
    %c0_i32_0 = arith.constant 0 : i32
    return %arg0, %c0_i32 : i32, i32
  }
  func.func @transform_1(%arg0: i32) -> (i32, i32) {
    %c0_i32 = arith.constant 0 : i32
    %c0_i32_0 = arith.constant 0 : i32
    %c0_i32_1 = arith.constant 0 : i32
    return %c0_i32, %c0_i32_0 : i32, i32
  }
  func.func @transform_2(%arg0: i32) -> (i32, i32) {
    %c0_i32 = arith.constant 0 : i32
    %c0_i32_0 = arith.constant 0 : i32
    %c0_i32_1 = arith.constant 0 : i32
    return %c0_i32, %c0_i32_0 : i32, i32
  }
  func.func @transform_3(%arg0: i32) -> (i32, i32) {
    %c0_i32 = arith.constant 0 : i32
    %c0_i32_0 = arith.constant 0 : i32
    %c0_i32_1 = arith.constant 0 : i32
    return %c0_i32, %c0_i32_0 : i32, i32
  }
  func.func @transform_4(%arg0: i32) -> (i32, i32) {
    %c0_i32 = arith.constant 0 : i32
    %c0_i32_0 = arith.constant 0 : i32
    %c0_i32_1 = arith.constant 0 : i32
    return %c0_i32, %c0_i32_0 : i32, i32
  }
  func.func @transform_5(%arg0: i32) -> (i32, i32) {
    %c0_i32 = arith.constant 0 : i32
    %c0_i32_0 = arith.constant 0 : i32
    %c0_i32_1 = arith.constant 0 : i32
    return %c0_i32, %c0_i32_0 : i32, i32
  }
  func.func @transform_6(%arg0: i32) -> (i32, i32) {
    %c0_i32 = arith.constant 0 : i32
    %c0_i32_0 = arith.constant 0 : i32
    %c0_i32_1 = arith.constant 0 : i32
    return %c0_i32, %c0_i32_0 : i32, i32
  }
  func.func @transform_7(%arg0: i32) -> (i32, i32) {
    %c0_i32 = arith.constant 0 : i32
    %c0_i32_0 = arith.constant 0 : i32
    return %arg0, %c0_i32 : i32, i32
  }
}

</mosaic_0001>

<llo_original>
// kernel: stem2_forward.1
$region0: #{stem2_forward.1}
  #allocation0 [shape = 'u32[]', space=smem, size = 0x4, offset = 0x4, fixed_abs, tag = 'smem constant byte address 0x4 - core index']
  #allocation1 [shape = 'u32[144,128]{1,0:T(1,128)}', space=vmem, size = 0x12000, scoped, tag = 'internal scratch']
  %s0 = inlined_call_operand.vmem [shape: f32[256,28], index: 0, kind: input, shape index: {}]
  %s1 = inlined_call_operand.vmem [shape: f32[28,224], index: 1, kind: input, shape index: {}]
  %s2 = inlined_call_operand.vmem [shape: f32[160,1280], index: 2, kind: input, shape index: {}]
  %s3 = inlined_call_operand.vmem [shape: f32[160,16], index: 3, kind: input, shape index: {}]
  %s4 = inlined_call_operand.vmem [shape: f32[32,128], index: 4, kind: input, shape index: {}]
  %s5 = inlined_call_operand.vmem [shape: f32[1,128], index: 5, kind: input, shape index: {}]
  %s6 = inlined_call_operand.vmem [shape: f32[1,128], index: 6, kind: input, shape index: {}]
  %s7 = inlined_call_operand.vmem [shape: f32[256,128], index: 7, kind: output, shape index: {}]
  %s8 = sld [smem:[#allocation0]]
  $region61: #{stem2_forward.1} parent=0
    _
  %s10 = ssub.s32 1, %s8
  %s11 = scalar_select 0, %s10, %s8
  loop: start=0, step=1, limit=4
  $region2: #{stem2_forward.1} parent=0 // loop_pre_header
    _
  $region3: #{stem2_forward.1} parent=0 // loop_header
    %s13 = sphi 0, %s17
    %p14 = scmp.ge.s32.totalorder %s13, 4
    %s23 = sphi 0, %s25
    %s26 = sphi 0, %s23
    %s27 = sphi 0, %s26
    %s43 = sphi 0, %s27
    %s47 = sphi 0, %s47
    %s49 = sphi 0, %s47
    %s50 = sphi 0, %s49
    %s64 = sphi 0, %s50
    %s68 = sphi 0, %s68
    %s70 = sphi 0, %s68
    %s71 = sphi 0, %s70
    %s85 = sphi 0, %s71
    %s89 = sphi 0, %s89
    %s91 = sphi 0, %s89
    %s92 = sphi 0, %s91
    %s106 = sphi 0, %s92
    %s110 = sphi 0, %s110
    %s112 = sphi 0, %s110
    %s113 = sphi 0, %s112
    %s127 = sphi 0, %s113
    %s131 = sphi 0, %s131
    %s133 = sphi 0, %s131
    %s134 = sphi 0, %s133
    %s148 = sphi 0, %s134
    %s152 = sphi 0, %s152
    %s154 = sphi 0, %s152
    %s155 = sphi 0, %s154
    %s169 = sphi 0, %s155
    %s175 = sphi 0, %s177
    %s178 = sphi 0, %s175
    %s179 = sphi 0, %s178
    %s195 = sphi 0, %s179
  $region4: #{stem2_forward.1} parent=0 // loop_header_branch
    %16 = sbr.rel (%p14) target = $region8
  $region5: #{stem2_forward.1} parent=0 // loop_body
    %s18 = ssub.s32 %s13, 1
    %s19 = ssub.s32 %s13, 2
    %s20 = sadd.s32 %s13, 1
    %s21 = ssub.s32 %s13, %s20
    %p22 = scmp.eq.s32.totalorder %s21, 0
    %s24 = sadd.s32 %s23, 1
    %s25 = scalar_select %p22, %s23, %s24
    %p28 = pneg %p22
    %p29 = scmp.eq.s32.totalorder %s13, 1
    %p30 = por %p28, %p29
    %p31 = scmp.ne.s32.totalorder %s23, %s26
    %p32 = scmp.eq.s32.totalorder %s13, 0
    %p33 = por %p31, %p32
    %p34 = scmp.ne.s32.totalorder %s23, %s26
    %p35 = scmp.eq.s32.totalorder %s18, 1
    %p36 = por %p34, %p35
    %p37 = scmp.ne.s32.totalorder %s26, %s27
    %p38 = scmp.eq.s32.totalorder %s18, 0
    %p39 = por %p37, %p38
    %p40 = scmp.ne.s32.totalorder %s26, %s27
    %p41 = scmp.eq.s32.totalorder %s19, 1
    %p42 = por %p40, %p41
    %p44 = scmp.ne.s32.totalorder %s27, %s43
    %p45 = scmp.eq.s32.totalorder %s19, 0
    %p46 = por %p44, %p45
    %s48 = sadd.s32 %s47, 1
    %p51 = scmp.eq.s32.totalorder %s13, 1
    %p52 = scmp.ne.s32.totalorder %s47, %s49
    %p53 = scmp.eq.s32.totalorder %s13, 0
    %p54 = por %p52, %p53
    %p55 = scmp.ne.s32.totalorder %s47, %s49
    %p56 = scmp.eq.s32.totalorder %s18, 1
    %p57 = por %p55, %p56
    %p58 = scmp.ne.s32.totalorder %s49, %s50
    %p59 = scmp.eq.s32.totalorder %s18, 0
    %p60 = por %p58, %p59
    %p61 = scmp.ne.s32.totalorder %s49, %s50
    %p62 = scmp.eq.s32.totalorder %s19, 1
    %p63 = por %p61, %p62
    %p65 = scmp.ne.s32.totalorder %s50, %s64
    %p66 = scmp.eq.s32.totalorder %s19, 0
    %p67 = por %p65, %p66
    %s69 = sadd.s32 %s68, 1
    %p72 = scmp.eq.s32.totalorder %s13, 1
    %p73 = scmp.ne.s32.totalorder %s68, %s70
    %p74 = scmp.eq.s32.totalorder %s13, 0
    %p75 = por %p73, %p74
    %p76 = scmp.ne.s32.totalorder %s68, %s70
    %p77 = scmp.eq.s32.totalorder %s18, 1
    %p78 = por %p76, %p77
    %p79 = scmp.ne.s32.totalorder %s70, %s71
    %p80 = scmp.eq.s32.totalorder %s18, 0
    %p81 = por %p79, %p80
    %p82 = scmp.ne.s32.totalorder %s70, %s71
    %p83 = scmp.eq.s32.totalorder %s19, 1
    %p84 = por %p82, %p83
    %p86 = scmp.ne.s32.totalorder %s71, %s85
    %p87 = scmp.eq.s32.totalorder %s19, 0
    %p88 = por %p86, %p87
    %s90 = sadd.s32 %s89, 1
    %p93 = scmp.eq.s32.totalorder %s13, 1
    %p94 = scmp.ne.s32.totalorder %s89, %s91
    %p95 = scmp.eq.s32.totalorder %s13, 0
    %p96 = por %p94, %p95
    %p97 = scmp.ne.s32.totalorder %s89, %s91
    %p98 = scmp.eq.s32.totalorder %s18, 1
    %p99 = por %p97, %p98
    %p100 = scmp.ne.s32.totalorder %s91, %s92
    %p101 = scmp.eq.s32.totalorder %s18, 0
    %p102 = por %p100, %p101
    %p103 = scmp.ne.s32.totalorder %s91, %s92
    %p104 = scmp.eq.s32.totalorder %s19, 1
    %p105 = por %p103, %p104
    %p107 = scmp.ne.s32.totalorder %s92, %s106
    %p108 = scmp.eq.s32.totalorder %s19, 0
    %p109 = por %p107, %p108
    %s111 = sadd.s32 %s110, 1
    %p114 = scmp.eq.s32.totalorder %s13, 1
    %p115 = scmp.ne.s32.totalorder %s110, %s112
    %p116 = scmp.eq.s32.totalorder %s13, 0
    %p117 = por %p115, %p116
    %p118 = scmp.ne.s32.totalorder %s110, %s112
    %p119 = scmp.eq.s32.totalorder %s18, 1
    %p120 = por %p118, %p119
    %p121 = scmp.ne.s32.totalorder %s112, %s113
    %p122 = scmp.eq.s32.totalorder %s18, 0
    %p123 = por %p121, %p122
    %p124 = scmp.ne.s32.totalorder %s112, %s113
    %p125 = scmp.eq.s32.totalorder %s19, 1
    %p126 = por %p124, %p125
    %p128 = scmp.ne.s32.totalorder %s113, %s127
    %p129 = scmp.eq.s32.totalorder %s19, 0
    %p130 = por %p128, %p129
    %s132 = sadd.s32 %s131, 1
    %p135 = scmp.eq.s32.totalorder %s13, 1
    %p136 = scmp.ne.s32.totalorder %s131, %s133
    %p137 = scmp.eq.s32.totalorder %s13, 0
    %p138 = por %p136, %p137
    %p139 = scmp.ne.s32.totalorder %s131, %s133
    %p140 = scmp.eq.s32.totalorder %s18, 1
    %p141 = por %p139, %p140
    %p142 = scmp.ne.s32.totalorder %s133, %s134
    %p143 = scmp.eq.s32.totalorder %s18, 0
    %p144 = por %p142, %p143
    %p145 = scmp.ne.s32.totalorder %s133, %s134
    %p146 = scmp.eq.s32.totalorder %s19, 1
    %p147 = por %p145, %p146
    %p149 = scmp.ne.s32.totalorder %s134, %s148
    %p150 = scmp.eq.s32.totalorder %s19, 0
    %p151 = por %p149, %p150
    %s153 = sadd.s32 %s152, 1
    %p156 = scmp.eq.s32.totalorder %s13, 1
    %p157 = scmp.ne.s32.totalorder %s152, %s154
    %p158 = scmp.eq.s32.totalorder %s13, 0
    %p159 = por %p157, %p158
    %p160 = scmp.ne.s32.totalorder %s152, %s154
    %p161 = scmp.eq.s32.totalorder %s18, 1
    %p162 = por %p160, %p161
    %p163 = scmp.ne.s32.totalorder %s154, %s155
    %p164 = scmp.eq.s32.totalorder %s18, 0
    %p165 = por %p163, %p164
    %p166 = scmp.ne.s32.totalorder %s154, %s155
    %p167 = scmp.eq.s32.totalorder %s19, 1
    %p168 = por %p166, %p167
    %p170 = scmp.ne.s32.totalorder %s155, %s169
    %p171 = scmp.eq.s32.totalorder %s19, 0
    %p172 = por %p170, %p171
    %s173 = ssub.s32 %s13, %s20
    %p174 = scmp.eq.s32.totalorder %s173, 0
    %s176 = sadd.s32 %s175, 1
    %s177 = scalar_select %p174, %s175, %s176
    %p180 = pneg %p174
    %p181 = scmp.eq.s32.totalorder %s13, 1
    %p182 = por %p180, %p181
    %p183 = scmp.ne.s32.totalorder %s175, %s178
    %p184 = scmp.eq.s32.totalorder %s13, 0
    %p185 = por %p183, %p184
    %p186 = scmp.ne.s32.totalorder %s175, %s178
    %p187 = scmp.eq.s32.totalorder %s18, 1
    %p188 = por %p186, %p187
    %p189 = scmp.ne.s32.totalorder %s178, %s179
    %p190 = scmp.eq.s32.totalorder %s18, 0
    %p191 = por %p189, %p190
    %p192 = scmp.ne.s32.totalorder %s178, %s179
    %p193 = scmp.eq.s32.totalorder %s19, 1
    %p194 = por %p192, %p193
    %p196 = scmp.ne.s32.totalorder %s179, %s195
    %p197 = scmp.eq.s32.totalorder %s19, 0
    %p198 = por %p196, %p197
    %p199 = scmp.le.s32.totalorder 1, %s13
    %p200 = scmp.lt.s32.totalorder %s13, 3
    %p201 = pnand %p199, %p200
    %p202 = pneg %p201
    // Predicated region
    $region9: #{stem2_forward.1} parent=5 // pred_check
      _
    $region10: #{stem2_forward.1} parent=5 // pred_check_branch
      %204 = sbr.rel (%p201) target = $region12
    $region11: #{stem2_forward.1} parent=5 // pred_region
      %s205 = ssub.s32 %s13, 1
      // Predicated region
      $region13: #{stem2_forward.1} parent=11 // pred_check
        %p206 = pneg %p60
      $region14: #{stem2_forward.1} parent=11 // pred_check_branch
        %208 = sbr.rel (%p206) target = $region16
      $region15: #{stem2_forward.1} parent=11 // pred_region
        _
      $region16: #{stem2_forward.1} parent=11 // pred_fallthru
        _
      // Predicated region
      $region17: #{stem2_forward.1} parent=11 // pred_check
        %p209 = pneg %p81
      $region18: #{stem2_forward.1} parent=11 // pred_check_branch
        %211 = sbr.rel (%p209) target = $region20
      $region19: #{stem2_forward.1} parent=11 // pred_region
        _
      $region20: #{stem2_forward.1} parent=11 // pred_fallthru
        _
      // Predicated region
      $region21: #{stem2_forward.1} parent=11 // pred_check
        %p212 = pneg %p102
      $region22: #{stem2_forward.1} parent=11 // pred_check_branch
        %214 = sbr.rel (%p212) target = $region24
      $region23: #{stem2_forward.1} parent=11 // pred_region
        _
      $region24: #{stem2_forward.1} parent=11 // pred_fallthru
        _
      // Predicated region
      $region25: #{stem2_forward.1} parent=11 // pred_check
        %p215 = pneg %p123
      $region26: #{stem2_forward.1} parent=11 // pred_check_branch
        %217 = sbr.rel (%p215) target = $region28
      $region27: #{stem2_forward.1} parent=11 // pred_region
        _
      $region28: #{stem2_forward.1} parent=11 // pred_fallthru
        _
      // Predicated region
      $region29: #{stem2_forward.1} parent=11 // pred_check
        %p218 = pneg %p144
      $region30: #{stem2_forward.1} parent=11 // pred_check_branch
        %220 = sbr.rel (%p218) target = $region32
      $region31: #{stem2_forward.1} parent=11 // pred_region
        _
      $region32: #{stem2_forward.1} parent=11 // pred_fallthru
        _
      // Predicated region
      $region33: #{stem2_forward.1} parent=11 // pred_check
        %p221 = pneg %p165
      $region34: #{stem2_forward.1} parent=11 // pred_check_branch
        %223 = sbr.rel (%p221) target = $region36
      $region35: #{stem2_forward.1} parent=11 // pred_region
        _
      $region36: #{stem2_forward.1} parent=11 // pred_fallthru
        _
    $region12: #{stem2_forward.1} parent=5 // pred_fallthru
      _
    %p224 = scmp.lt.s32.totalorder %s13, 2
    // Predicated region
    $region37: #{stem2_forward.1} parent=5 // pred_check
      %p225 = pneg %p224
    $region38: #{stem2_forward.1} parent=5 // pred_check_branch
      %227 = sbr.rel (%p225) target = $region40
    $region39: #{stem2_forward.1} parent=5 // pred_region
      // Predicated region
      $region41: #{stem2_forward.1} parent=39 // pred_check
        %p228 = pneg %p33
      $region42: #{stem2_forward.1} parent=39 // pred_check_branch
        %230 = sbr.rel (%p228) target = $region44
      $region43: #{stem2_forward.1} parent=39 // pred_region
        %s231 = smul.u32 16, %s13
        %p232 = scmp.lt.s32.totalorder %s231, 31
        %s233 = scalar_select %p232, %s231, 31
        %s234 = smul.addr %s233, 8
        %s235 = scalar_lea.vmem %s0, %s234
        %s236 = smul.u32 16, %s13
      $region44: #{stem2_forward.1} parent=39 // pred_fallthru
        _
    $region40: #{stem2_forward.1} parent=5 // pred_fallthru
      _
    %p237 = scmp.le.s32.totalorder 1, %s13
    %p238 = scmp.lt.s32.totalorder %s13, 3
    %p239 = pnand %p237, %p238
    %p240 = pneg %p239
    // Predicated region
    $region45: #{stem2_forward.1} parent=5 // pred_check
      _
    $region46: #{stem2_forward.1} parent=5 // pred_check_branch
      %242 = sbr.rel (%p239) target = $region48
    $region47: #{stem2_forward.1} parent=5 // pred_region
      %s243 = ssub.s32 %s13, 1
      %s244 = smul.u32 16, %s18
      %p245 = scmp.lt.s32.totalorder %s244, 31
      %s246 = scalar_select %p245, %s244, 31
      %s247 = smul.addr %s246, 8
      %s248 = scalar_lea.vmem %s0, %s247
      %p249 = pneg %p39
      %p250 = pneg %p36
      %p251 = pneg %p60
      %p252 = pneg %p57
      %p253 = pneg %p81
      %p254 = pneg %p78
      %p255 = pneg %p102
      %p256 = pneg %p99
      %p257 = pneg %p123
      %p258 = pneg %p120
      %p259 = pneg %p144
      %p260 = pneg %p141
      %p261 = pneg %p165
      %p262 = pneg %p162
      %p263 = pneg %p191
      %p264 = pneg %p188
      %s265 = smul.u32 16, %s18
      %p266 = scmp.lt.s32.totalorder %s265, 31
      %s267 = scalar_select %p266, %s265, 31
      %s268 = smul.addr %s267, 8
      %s269 = scalar_lea.vmem %s7, %s268
      %s270 = smul.u32 16, %s18
      %p271 = scmp.lt.s32.totalorder %s270, 31
      %s272 = scalar_select %p271, %s270, 31
      %s273 = smul.addr %s272, 8
      %s274 = scalar_lea.vmem %s0, %s273
      %s275 = smul.u32 16, %s18
      %s276 = smul.u32 16, %s18
      %p277 = scmp.lt.s32.totalorder %s276, 31
      %s278 = scalar_select %p277, %s276, 31
      %s279 = smul.addr %s278, 8
      %s280 = scalar_lea.vmem %s7, %s279
      %s281 = smul.u32 16, %s18
      %v282 = vld [vmem:[%s274] sm:$0xff]
      %v283 = vld [vmem:[%s274 + $0x8] sm:$0xff]
      %v284 = vld [vmem:[%s274 + $0x10] sm:$0xff]
      %v285 = vld [vmem:[%s274 + $0x18] sm:$0xff]
      %v286 = vld [vmem:[%s274 + $0x20] sm:$0xff]
      %v287 = vld [vmem:[%s274 + $0x28] sm:$0xff]
      %v288 = vld [vmem:[%s274 + $0x30] sm:$0xff]
      %v289 = vld [vmem:[%s274 + $0x38] sm:$0xff]
      %v290 = vld [vmem:[%s274 + $0x40] sm:$0xff]
      %v291 = vld [vmem:[%s274 + $0x48] sm:$0xff]
      %v292 = vld [vmem:[%s274 + $0x50] sm:$0xff]
      %v293 = vld [vmem:[%s274 + $0x58] sm:$0xff]
      %v294 = vld [vmem:[%s274 + $0x60] sm:$0xff]
      %v295 = vld [vmem:[%s274 + $0x68] sm:$0xff]
      %v296 = vld [vmem:[%s274 + $0x70] sm:$0xff]
      %v297 = vld [vmem:[%s274 + $0x78] sm:$0xff]
      %v298 = vld [vmem:[%s1] sm:$0xff]
      %v299 = vld [vmem:[%s1 + $0x8] sm:$0xff]
      %v300 = vld [vmem:[%s1 + $0x10] sm:$0xff]
      %v301 = vld [vmem:[%s1 + $0x18] sm:$0xff]
      %v302 = vld [vmem:[%s1 + $0x20] sm:$0xff]
      %v303 = vld [vmem:[%s1 + $0x28] sm:$0xff]
      %v304 = vld [vmem:[%s1 + $0x30] sm:$0xf]
      %v305 = vld [vmem:[%s1 + $0x38] sm:$0xf]
      %vm306 = vcmask 228352
      %v308 = vsel %vm306, %v282, 0
      %v311 = vsel %vm306, %v283, 0
      %v314 = vsel %vm306, %v284, 0
      %v317 = vsel %vm306, %v285, 0
      %v320 = vsel %vm306, %v286, 0
      %v323 = vsel %vm306, %v287, 0
      %v326 = vsel %vm306, %v288, 0
      %v329 = vsel %vm306, %v289, 0
      %v332 = vsel %vm306, %v290, 0
      %v335 = vsel %vm306, %v291, 0
      %v338 = vsel %vm306, %v292, 0
      %v341 = vsel %vm306, %v293, 0
      %v344 = vsel %vm306, %v294, 0
      %v347 = vsel %vm306, %v295, 0
      %v350 = vsel %vm306, %v296, 0
      %v353 = vsel %vm306, %v297, 0
      %vm355 = vcmask 1043456
      %v357 = vsel %vm355, %v304, 0
      %v360 = vsel %vm355, %v305, 0
      %362 = vmatprep.subr.mxu0 0.0
      %363 = vmatpush1.msra.mxu0 0.0
      %364 = vmatprep.subr.mxu0 0.0
      %365 = vmatpush1.msra.mxu0 0.0
      %366 = vmatprep.subr.mxu0 0.0
      %367 = vmatpush1.msra.mxu0 0.0
      %368 = vmatprep.subr.mxu0 0.0
      %369 = vmatpush1.msra.mxu0 0.0
      %370 = vmatprep.subr.mxu0 0.0
      %371 = vmatpush1.msra.mxu0 0.0
      %372 = vmatprep.subr.mxu0 0.0
      %373 = vmatpush1.msra.mxu0 0.0
      %374 = vmatprep.subr.mxu0 0.0
      %375 = vmatpush1.msra.mxu0 0.0
      %376 = vmatprep.subr.mxu0 0.0
      %377 = vmatpush1.msra.mxu0 0.0
      %378 = vmatprep.subr.mxu0 0.0
      %379 = vmatpush1.msra.mxu0 0.0
      %380 = vmatprep.subr.mxu0 0.0
      %381 = vmatpush1.msra.mxu0 0.0
      %382 = vmatprep.subr.mxu0 0.0
      %383 = vmatpush1.msra.mxu0 0.0
      %384 = vmatprep.subr.mxu0 0.0
      %385 = vmatpush1.msra.mxu0 0.0
      %386 = vmatprep.subr.mxu0 %v360
      %387 = vmatpush1.msra.mxu0 %v357
      %388 = vmatprep.subr.mxu0 %v303
      %389 = vmatpush1.msra.mxu0 %v302
      %390 = vmatprep.subr.mxu0 %v301
      %391 = vmatpush1.msra.mxu0 %v300
      %392 = vmatprep.subr.mxu0 %v299
      %393 = vmatpush1.msra.mxu0 %v298
      %394 = vmatprep.subr.mxu0 0.0
      %395 = vmatpush2.msra.mxu0 0.0
      %396 = vmatprep.subr.mxu0 0.0
      %397 = vmatpush2.msra.mxu0 0.0
      %398 = vmatprep.subr.mxu0 0.0
      %399 = vmatpush2.msra.mxu0 0.0
      %400 = vmatprep.subr.mxu0 0.0
      %401 = vmatpush2.msra.mxu0 0.0
      %402 = vmatprep.subr.mxu0 0.0
      %403 = vmatpush2.msra.mxu0 0.0
      %404 = vmatprep.subr.mxu0 0.0
      %405 = vmatpush2.msra.mxu0 0.0
      %406 = vmatprep.subr.mxu0 0.0
      %407 = vmatpush2.msra.mxu0 0.0
      %408 = vmatprep.subr.mxu0 0.0
      %409 = vmatpush2.msra.mxu0 0.0
      %410 = vmatprep.subr.mxu0 0.0
      %411 = vmatpush2.msra.mxu0 0.0
      %412 = vmatprep.subr.mxu0 0.0
      %413 = vmatpush2.msra.mxu0 0.0
      %414 = vmatprep.subr.mxu0 0.0
      %415 = vmatpush2.msra.mxu0 0.0
      %416 = vmatprep.subr.mxu0 0.0
      %417 = vmatpush2.msra.mxu0 0.0
      %418 = vmatprep.subr.mxu0 0.0
      %419 = vmatpush2.msra.mxu0 0.0
      %420 = vmatprep.subr.mxu0 0.0
      %421 = vmatpush2.msra.mxu0 0.0
      %422 = vmatprep.subr.mxu0 0.0
      %423 = vmatpush2.msra.mxu0 0.0
      %424 = vmatprep.subr.mxu0 0.0
      %425 = vmatpush2.msra.mxu0 0.0
      %426 = vmatprep.mubr.f32.mxu0 0.0
      %427 = vmatmul.mubr.f32.gmra.mxu0 %v308
      %v428 = vpop.f32.mrf.mxu0
      %v429 = vadd.f32 0.0, %v428
      %v430 = vpop.f32.mrf.mxu0
      %v431 = vadd.f32 0.0, %v430
      %432 = vmatprep.mubr.f32.mxu0 0.0
      %433 = vmatmul.mubr.f32.gmra.mxu0 %v311
      %v434 = vpop.f32.mrf.mxu0
      %v435 = vadd.f32 0.0, %v434
      %v436 = vpop.f32.mrf.mxu0
      %v437 = vadd.f32 0.0, %v436
      %438 = vmatprep.mubr.f32.mxu0 0.0
      %439 = vmatmul.mubr.f32.gmra.mxu0 %v314
      %v440 = vpop.f32.mrf.mxu0
      %v441 = vadd.f32 0.0, %v440
      %v442 = vpop.f32.mrf.mxu0
      %v443 = vadd.f32 0.0, %v442
      %444 = vmatprep.mubr.f32.mxu0 0.0
      %445 = vmatmul.mubr.f32.gmra.mxu0 %v317
      %v446 = vpop.f32.mrf.mxu0
      %v447 = vadd.f32 0.0, %v446
      %v448 = vpop.f32.mrf.mxu0
      %v449 = vadd.f32 0.0, %v448
      %450 = vmatprep.mubr.f32.mxu0 0.0
      %451 = vmatmul.mubr.f32.gmra.mxu0 %v320
      %v452 = vpop.f32.mrf.mxu0
      %v453 = vadd.f32 0.0, %v452
      %v454 = vpop.f32.mrf.mxu0
      %v455 = vadd.f32 0.0, %v454
      %456 = vmatprep.mubr.f32.mxu0 0.0
      %457 = vmatmul.mubr.f32.gmra.mxu0 %v323
      %v458 = vpop.f32.mrf.mxu0
      %v459 = vadd.f32 0.0, %v458
      %v460 = vpop.f32.mrf.mxu0
      %v461 = vadd.f32 0.0, %v460
      %462 = vmatprep.mubr.f32.mxu0 0.0
      %463 = vmatmul.mubr.f32.gmra.mxu0 %v326
      %v464 = vpop.f32.mrf.mxu0
      %v465 = vadd.f32 0.0, %v464
      %v466 = vpop.f32.mrf.mxu0
      %v467 = vadd.f32 0.0, %v466
      %468 = vmatprep.mubr.f32.mxu0 0.0
      %469 = vmatmul.mubr.f32.gmra.mxu0 %v329
      %v470 = vpop.f32.mrf.mxu0
      %v471 = vadd.f32 0.0, %v470
      %v472 = vpop.f32.mrf.mxu0
      %v473 = vadd.f32 0.0, %v472
      %474 = vmatprep.mubr.f32.mxu0 0.0
      %475 = vmatmul.mubr.f32.gmra.mxu0 %v332
      %v476 = vpop.f32.mrf.mxu0
      %v477 = vadd.f32 0.0, %v476
      %v478 = vpop.f32.mrf.mxu0
      %v479 = vadd.f32 0.0, %v478
      %480 = vmatprep.mubr.f32.mxu0 0.0
      %481 = vmatmul.mubr.f32.gmra.mxu0 %v335
      %v482 = vpop.f32.mrf.mxu0
      %v483 = vadd.f32 0.0, %v482
      %v484 = vpop.f32.mrf.mxu0
      %v485 = vadd.f32 0.0, %v484
      %486 = vmatprep.mubr.f32.mxu0 0.0
      %487 = vmatmul.mubr.f32.gmra.mxu0 %v338
      %v488 = vpop.f32.mrf.mxu0
      %v489 = vadd.f32 0.0, %v488
      %v490 = vpop.f32.mrf.mxu0
      %v491 = vadd.f32 0.0, %v490
      %492 = vmatprep.mubr.f32.mxu0 0.0
      %493 = vmatmul.mubr.f32.gmra.mxu0 %v341
      %v494 = vpop.f32.mrf.mxu0
      %v495 = vadd.f32 0.0, %v494
      %v496 = vpop.f32.mrf.mxu0
      %v497 = vadd.f32 0.0, %v496
      %498 = vmatprep.mubr.f32.mxu0 0.0
      %499 = vmatmul.mubr.f32.gmra.mxu0 %v344
      %v500 = vpop.f32.mrf.mxu0
      %v501 = vadd.f32 0.0, %v500
      %v502 = vpop.f32.mrf.mxu0
      %v503 = vadd.f32 0.0, %v502
      %504 = vmatprep.mubr.f32.mxu0 0.0
      %505 = vmatmul.mubr.f32.gmra.mxu0 %v347
      %v506 = vpop.f32.mrf.mxu0
      %v507 = vadd.f32 0.0, %v506
      %v508 = vpop.f32.mrf.mxu0
      %v509 = vadd.f32 0.0, %v508
      %510 = vmatprep.mubr.f32.mxu0 0.0
      %511 = vmatmul.mubr.f32.gmra.mxu0 %v350
      %v512 = vpop.f32.mrf.mxu0
      %v513 = vadd.f32 0.0, %v512
      %v514 = vpop.f32.mrf.mxu0
      %v515 = vadd.f32 0.0, %v514
      %516 = vmatprep.mubr.f32.mxu0 0.0
      %517 = vmatmul.mubr.f32.gmra.mxu0 %v353
      %v518 = vpop.f32.mrf.mxu0
      %v519 = vadd.f32 0.0, %v518
      %v520 = vpop.f32.mrf.mxu0
      %v521 = vadd.f32 0.0, %v520
      %522 = vdwg.mxu0
      %v523 = vmax.f32 %v429, 0.0
      %v524 = vmax.f32 %v435, 0.0
      %v525 = vmax.f32 %v441, 0.0
      %v526 = vmax.f32 %v447, 0.0
      %v527 = vmax.f32 %v453, 0.0
      %v528 = vmax.f32 %v459, 0.0
      %v529 = vmax.f32 %v465, 0.0
      %v530 = vmax.f32 %v471, 0.0
      %v531 = vmax.f32 %v477, 0.0
      %v532 = vmax.f32 %v483, 0.0
      %v533 = vmax.f32 %v489, 0.0
      %v534 = vmax.f32 %v495, 0.0
      %v535 = vmax.f32 %v501, 0.0
      %v536 = vmax.f32 %v507, 0.0
      %v537 = vmax.f32 %v513, 0.0
      %v538 = vmax.f32 %v519, 0.0
      %555 = vrot.lane.b32.xlu0 %v431, 32
      %v556 = vpop.permute.xlu0 %555
      %557 = vrot.lane.b32.xlu0 %v437, 32
      %v558 = vpop.permute.xlu0 %557
      %559 = vrot.lane.b32.xlu0 %v443, 32
      %v560 = vpop.permute.xlu0 %559
      %561 = vrot.lane.b32.xlu0 %v449, 32
      %v562 = vpop.permute.xlu0 %561
      %563 = vrot.lane.b32.xlu0 %v455, 32
      %v564 = vpop.permute.xlu0 %563
      %565 = vrot.lane.b32.xlu0 %v461, 32
      %v566 = vpop.permute.xlu0 %565
      %567 = vrot.lane.b32.xlu0 %v467, 32
      %v568 = vpop.permute.xlu0 %567
      %569 = vrot.lane.b32.xlu0 %v473, 32
      %v570 = vpop.permute.xlu0 %569
      %571 = vrot.lane.b32.xlu0 %v479, 32
      %v572 = vpop.permute.xlu0 %571
      %573 = vrot.lane.b32.xlu0 %v485, 32
      %v574 = vpop.permute.xlu0 %573
      %575 = vrot.lane.b32.xlu0 %v491, 32
      %v576 = vpop.permute.xlu0 %575
      %577 = vrot.lane.b32.xlu0 %v497, 32
      %v578 = vpop.permute.xlu0 %577
      %579 = vrot.lane.b32.xlu0 %v503, 32
      %v580 = vpop.permute.xlu0 %579
      %581 = vrot.lane.b32.xlu0 %v509, 32
      %v582 = vpop.permute.xlu0 %581
      %583 = vrot.lane.b32.xlu0 %v515, 32
      %v584 = vpop.permute.xlu0 %583
      %585 = vrot.lane.b32.xlu0 %v521, 32
      %v586 = vpop.permute.xlu0 %585
      %v603 = vmul.f32 %v429, %v556
      %v604 = vmul.f32 %v435, %v558
      %v605 = vmul.f32 %v441, %v560
      %v606 = vmul.f32 %v447, %v562
      %v607 = vmul.f32 %v453, %v564
      %v608 = vmul.f32 %v459, %v566
      %v609 = vmul.f32 %v465, %v568
      %v610 = vmul.f32 %v471, %v570
      %v611 = vmul.f32 %v477, %v572
      %v612 = vmul.f32 %v483, %v574
      %v613 = vmul.f32 %v489, %v576
      %v614 = vmul.f32 %v495, %v578
      %v615 = vmul.f32 %v501, %v580
      %v616 = vmul.f32 %v507, %v582
      %v617 = vmul.f32 %v513, %v584
      %v618 = vmul.f32 %v519, %v586
      %v619 = vmul.f32 %v603, 0.5
      %v620 = vmul.f32 %v604, 0.5
      %v621 = vmul.f32 %v605, 0.5
      %v622 = vmul.f32 %v606, 0.5
      %v623 = vmul.f32 %v607, 0.5
      %v624 = vmul.f32 %v608, 0.5
      %v625 = vmul.f32 %v609, 0.5
      %v626 = vmul.f32 %v610, 0.5
      %v627 = vmul.f32 %v611, 0.5
      %v628 = vmul.f32 %v612, 0.5
      %v629 = vmul.f32 %v613, 0.5
      %v630 = vmul.f32 %v614, 0.5
      %v631 = vmul.f32 %v615, 0.5
      %v632 = vmul.f32 %v616, 0.5
      %v633 = vmul.f32 %v617, 0.5
      %v634 = vmul.f32 %v618, 0.5
      %v635 = vmul.f32 %v429, %v431
      %v636 = vmul.f32 %v435, %v437
      %v637 = vmul.f32 %v441, %v443
      %v638 = vmul.f32 %v447, %v449
      %v639 = vmul.f32 %v453, %v455
      %v640 = vmul.f32 %v459, %v461
      %v641 = vmul.f32 %v465, %v467
      %v642 = vmul.f32 %v471, %v473
      %v643 = vmul.f32 %v477, %v479
      %v644 = vmul.f32 %v483, %v485
      %v645 = vmul.f32 %v489, %v491
      %v646 = vmul.f32 %v495, %v497
      %v647 = vmul.f32 %v501, %v503
      %v648 = vmul.f32 %v507, %v509
      %v649 = vmul.f32 %v513, %v515
      %v650 = vmul.f32 %v519, %v521
      %v651 = vadd.f32 %v619, %v635
      %v652 = vadd.f32 %v620, %v636
      %v653 = vadd.f32 %v621, %v637
      %v654 = vadd.f32 %v622, %v638
      %v655 = vadd.f32 %v623, %v639
      %v656 = vadd.f32 %v624, %v640
      %v657 = vadd.f32 %v625, %v641
      %v658 = vadd.f32 %v626, %v642
      %v659 = vadd.f32 %v627, %v643
      %v660 = vadd.f32 %v628, %v644
      %v661 = vadd.f32 %v629, %v645
      %v662 = vadd.f32 %v630, %v646
      %v663 = vadd.f32 %v631, %v647
      %v664 = vadd.f32 %v632, %v648
      %v665 = vadd.f32 %v633, %v649
      %v666 = vadd.f32 %v634, %v650
      %683 = vrot.lane.b32.xlu0 %v619, 96
      %v684 = vpop.permute.xlu0 %683
      %685 = vrot.lane.b32.xlu0 %v620, 96
      %v686 = vpop.permute.xlu0 %685
      %687 = vrot.lane.b32.xlu0 %v621, 96
      %v688 = vpop.permute.xlu0 %687
      %689 = vrot.lane.b32.xlu0 %v622, 96
      %v690 = vpop.permute.xlu0 %689
      %691 = vrot.lane.b32.xlu0 %v623, 96
      %v692 = vpop.permute.xlu0 %691
      %693 = vrot.lane.b32.xlu0 %v624, 96
      %v694 = vpop.permute.xlu0 %693
      %695 = vrot.lane.b32.xlu0 %v625, 96
      %v696 = vpop.permute.xlu0 %695
      %697 = vrot.lane.b32.xlu0 %v626, 96
      %v698 = vpop.permute.xlu0 %697
      %699 = vrot.lane.b32.xlu0 %v627, 96
      %v700 = vpop.permute.xlu0 %699
      %701 = vrot.lane.b32.xlu0 %v628, 96
      %v702 = vpop.permute.xlu0 %701
      %703 = vrot.lane.b32.xlu0 %v629, 96
      %v704 = vpop.permute.xlu0 %703
      %705 = vrot.lane.b32.xlu0 %v630, 96
      %v706 = vpop.permute.xlu0 %705
      %707 = vrot.lane.b32.xlu0 %v631, 96
      %v708 = vpop.permute.xlu0 %707
      %709 = vrot.lane.b32.xlu0 %v632, 96
      %v710 = vpop.permute.xlu0 %709
      %711 = vrot.lane.b32.xlu0 %v633, 96
      %v712 = vpop.permute.xlu0 %711
      %713 = vrot.lane.b32.xlu0 %v634, 96
      %v714 = vpop.permute.xlu0 %713
      %v731 = vadd.f32 %v651, %v684
      %v732 = vadd.f32 %v652, %v686
      %v733 = vadd.f32 %v653, %v688
      %v734 = vadd.f32 %v654, %v690
      %v735 = vadd.f32 %v655, %v692
      %v736 = vadd.f32 %v656, %v694
      %v737 = vadd.f32 %v657, %v696
      %v738 = vadd.f32 %v658, %v698
      %v739 = vadd.f32 %v659, %v700
      %v740 = vadd.f32 %v660, %v702
      %v741 = vadd.f32 %v661, %v704
      %v742 = vadd.f32 %v662, %v706
      %v743 = vadd.f32 %v663, %v708
      %v744 = vadd.f32 %v664, %v710
      %v745 = vadd.f32 %v665, %v712
      %v746 = vadd.f32 %v666, %v714
      %763 = vrot.lane.b32.xlu0 %v429, 96
      %v764 = vpop.permute.xlu0 %763
      %765 = vrot.lane.b32.xlu0 %v435, 96
      %v766 = vpop.permute.xlu0 %765
      %767 = vrot.lane.b32.xlu0 %v441, 96
      %v768 = vpop.permute.xlu0 %767
      %769 = vrot.lane.b32.xlu0 %v447, 96
      %v770 = vpop.permute.xlu0 %769
      %771 = vrot.lane.b32.xlu0 %v453, 96
      %v772 = vpop.permute.xlu0 %771
      %773 = vrot.lane.b32.xlu0 %v459, 96
      %v774 = vpop.permute.xlu0 %773
      %775 = vrot.lane.b32.xlu0 %v465, 96
      %v776 = vpop.permute.xlu0 %775
      %777 = vrot.lane.b32.xlu0 %v471, 96
      %v778 = vpop.permute.xlu0 %777
      %779 = vrot.lane.b32.xlu0 %v477, 96
      %v780 = vpop.permute.xlu0 %779
      %781 = vrot.lane.b32.xlu0 %v483, 96
      %v782 = vpop.permute.xlu0 %781
      %783 = vrot.lane.b32.xlu0 %v489, 96
      %v784 = vpop.permute.xlu0 %783
      %785 = vrot.lane.b32.xlu0 %v495, 96
      %v786 = vpop.permute.xlu0 %785
      %787 = vrot.lane.b32.xlu0 %v501, 96
      %v788 = vpop.permute.xlu0 %787
      %789 = vrot.lane.b32.xlu0 %v507, 96
      %v790 = vpop.permute.xlu0 %789
      %791 = vrot.lane.b32.xlu0 %v513, 96
      %v792 = vpop.permute.xlu0 %791
      %793 = vrot.lane.b32.xlu0 %v519, 96
      %v794 = vpop.permute.xlu0 %793
      %v811 = vadd.f32 %v429, %v764
      %v812 = vadd.f32 %v435, %v766
      %v813 = vadd.f32 %v441, %v768
      %v814 = vadd.f32 %v447, %v770
      %v815 = vadd.f32 %v453, %v772
      %v816 = vadd.f32 %v459, %v774
      %v817 = vadd.f32 %v465, %v776
      %v818 = vadd.f32 %v471, %v778
      %v819 = vadd.f32 %v477, %v780
      %v820 = vadd.f32 %v483, %v782
      %v821 = vadd.f32 %v489, %v784
      %v822 = vadd.f32 %v495, %v786
      %v823 = vadd.f32 %v501, %v788
      %v824 = vadd.f32 %v507, %v790
      %v825 = vadd.f32 %v513, %v792
      %v826 = vadd.f32 %v519, %v794
      %827 = vrot.lane.b32.xlu0 %v431, 96
      %v828 = vpop.permute.xlu0 %827
      %829 = vrot.lane.b32.xlu0 %v437, 96
      %v830 = vpop.permute.xlu0 %829
      %831 = vrot.lane.b32.xlu0 %v443, 96
      %v832 = vpop.permute.xlu0 %831
      %833 = vrot.lane.b32.xlu0 %v449, 96
      %v834 = vpop.permute.xlu0 %833
      %835 = vrot.lane.b32.xlu0 %v455, 96
      %v836 = vpop.permute.xlu0 %835
      %837 = vrot.lane.b32.xlu0 %v461, 96
      %v838 = vpop.permute.xlu0 %837
      %839 = vrot.lane.b32.xlu0 %v467, 96
      %v840 = vpop.permute.xlu0 %839
      %841 = vrot.lane.b32.xlu0 %v473, 96
      %v842 = vpop.permute.xlu0 %841
      %843 = vrot.lane.b32.xlu0 %v479, 96
      %v844 = vpop.permute.xlu0 %843
      %845 = vrot.lane.b32.xlu0 %v485, 96
      %v846 = vpop.permute.xlu0 %845
      %847 = vrot.lane.b32.xlu0 %v491, 96
      %v848 = vpop.permute.xlu0 %847
      %849 = vrot.lane.b32.xlu0 %v497, 96
      %v850 = vpop.permute.xlu0 %849
      %851 = vrot.lane.b32.xlu0 %v503, 96
      %v852 = vpop.permute.xlu0 %851
      %853 = vrot.lane.b32.xlu0 %v509, 96
      %v854 = vpop.permute.xlu0 %853
      %855 = vrot.lane.b32.xlu0 %v515, 96
      %v856 = vpop.permute.xlu0 %855
      %857 = vrot.lane.b32.xlu0 %v521, 96
      %v858 = vpop.permute.xlu0 %857
      %v875 = vmul.f32 %v811, %v828
      %v876 = vmul.f32 %v812, %v830
      %v877 = vmul.f32 %v813, %v832
      %v878 = vmul.f32 %v814, %v834
      %v879 = vmul.f32 %v815, %v836
      %v880 = vmul.f32 %v816, %v838
      %v881 = vmul.f32 %v817, %v840
      %v882 = vmul.f32 %v818, %v842
      %v883 = vmul.f32 %v819, %v844
      %v884 = vmul.f32 %v820, %v846
      %v885 = vmul.f32 %v821, %v848
      %v886 = vmul.f32 %v822, %v850
      %v887 = vmul.f32 %v823, %v852
      %v888 = vmul.f32 %v824, %v854
      %v889 = vmul.f32 %v825, %v856
      %v890 = vmul.f32 %v826, %v858
      %v891 = vadd.f32 %v731, %v875
      %v892 = vadd.f32 %v732, %v876
      %v893 = vadd.f32 %v733, %v877
      %v894 = vadd.f32 %v734, %v878
      %v895 = vadd.f32 %v735, %v879
      %v896 = vadd.f32 %v736, %v880
      %v897 = vadd.f32 %v737, %v881
      %v898 = vadd.f32 %v738, %v882
      %v899 = vadd.f32 %v739, %v883
      %v900 = vadd.f32 %v740, %v884
      %v901 = vadd.f32 %v741, %v885
      %v902 = vadd.f32 %v742, %v886
      %v903 = vadd.f32 %v743, %v887
      %v904 = vadd.f32 %v744, %v888
      %v905 = vadd.f32 %v745, %v889
      %v906 = vadd.f32 %v746, %v890
      %907 = vrot.lane.b32.xlu0 %v619, 64
      %v908 = vpop.permute.xlu0 %907
      %909 = vrot.lane.b32.xlu0 %v620, 64
      %v910 = vpop.permute.xlu0 %909
      %911 = vrot.lane.b32.xlu0 %v621, 64
      %v912 = vpop.permute.xlu0 %911
      %913 = vrot.lane.b32.xlu0 %v622, 64
      %v914 = vpop.permute.xlu0 %913
      %915 = vrot.lane.b32.xlu0 %v623, 64
      %v916 = vpop.permute.xlu0 %915
      %917 = vrot.lane.b32.xlu0 %v624, 64
      %v918 = vpop.permute.xlu0 %917
      %919 = vrot.lane.b32.xlu0 %v625, 64
      %v920 = vpop.permute.xlu0 %919
      %921 = vrot.lane.b32.xlu0 %v626, 64
      %v922 = vpop.permute.xlu0 %921
      %923 = vrot.lane.b32.xlu0 %v627, 64
      %v924 = vpop.permute.xlu0 %923
      %925 = vrot.lane.b32.xlu0 %v628, 64
      %v926 = vpop.permute.xlu0 %925
      %927 = vrot.lane.b32.xlu0 %v629, 64
      %v928 = vpop.permute.xlu0 %927
      %929 = vrot.lane.b32.xlu0 %v630, 64
      %v930 = vpop.permute.xlu0 %929
      %931 = vrot.lane.b32.xlu0 %v631, 64
      %v932 = vpop.permute.xlu0 %931
      %933 = vrot.lane.b32.xlu0 %v632, 64
      %v934 = vpop.permute.xlu0 %933
      %935 = vrot.lane.b32.xlu0 %v633, 64
      %v936 = vpop.permute.xlu0 %935
      %937 = vrot.lane.b32.xlu0 %v634, 64
      %v938 = vpop.permute.xlu0 %937
      %v955 = vadd.f32 %v891, %v908
      %v956 = vadd.f32 %v892, %v910
      %v957 = vadd.f32 %v893, %v912
      %v958 = vadd.f32 %v894, %v914
      %v959 = vadd.f32 %v895, %v916
      %v960 = vadd.f32 %v896, %v918
      %v961 = vadd.f32 %v897, %v920
      %v962 = vadd.f32 %v898, %v922
      %v963 = vadd.f32 %v899, %v924
      %v964 = vadd.f32 %v900, %v926
      %v965 = vadd.f32 %v901, %v928
      %v966 = vadd.f32 %v902, %v930
      %v967 = vadd.f32 %v903, %v932
      %v968 = vadd.f32 %v904, %v934
      %v969 = vadd.f32 %v905, %v936
      %v970 = vadd.f32 %v906, %v938
      %v971 = vmul.f32 %v619, 0.33333334
      %v972 = vmul.f32 %v620, 0.33333334
      %v973 = vmul.f32 %v621, 0.33333334
      %v974 = vmul.f32 %v622, 0.33333334
      %v975 = vmul.f32 %v623, 0.33333334
      %v976 = vmul.f32 %v624, 0.33333334
      %v977 = vmul.f32 %v625, 0.33333334
      %v978 = vmul.f32 %v626, 0.33333334
      %v979 = vmul.f32 %v627, 0.33333334
      %v980 = vmul.f32 %v628, 0.33333334
      %v981 = vmul.f32 %v629, 0.33333334
      %v982 = vmul.f32 %v630, 0.33333334
      %v983 = vmul.f32 %v631, 0.33333334
      %v984 = vmul.f32 %v632, 0.33333334
      %v985 = vmul.f32 %v633, 0.33333334
      %v986 = vmul.f32 %v634, 0.33333334
      %1003 = vrot.lane.b32.xlu0 %v971, 64
      %v1004 = vpop.permute.xlu0 %1003
      %1005 = vrot.lane.b32.xlu0 %v972, 64
      %v1006 = vpop.permute.xlu0 %1005
      %1007 = vrot.lane.b32.xlu0 %v973, 64
      %v1008 = vpop.permute.xlu0 %1007
      %1009 = vrot.lane.b32.xlu0 %v974, 64
      %v1010 = vpop.permute.xlu0 %1009
      %1011 = vrot.lane.b32.xlu0 %v975, 64
      %v1012 = vpop.permute.xlu0 %1011
      %1013 = vrot.lane.b32.xlu0 %v976, 64
      %v1014 = vpop.permute.xlu0 %1013
      %1015 = vrot.lane.b32.xlu0 %v977, 64
      %v1016 = vpop.permute.xlu0 %1015
      %1017 = vrot.lane.b32.xlu0 %v978, 64
      %v1018 = vpop.permute.xlu0 %1017
      %1019 = vrot.lane.b32.xlu0 %v979, 64
      %v1020 = vpop.permute.xlu0 %1019
      %1021 = vrot.lane.b32.xlu0 %v980, 64
      %v1022 = vpop.permute.xlu0 %1021
      %1023 = vrot.lane.b32.xlu0 %v981, 64
      %v1024 = vpop.permute.xlu0 %1023
      %1025 = vrot.lane.b32.xlu0 %v982, 64
      %v1026 = vpop.permute.xlu0 %1025
      %1027 = vrot.lane.b32.xlu0 %v983, 64
      %v1028 = vpop.permute.xlu0 %1027
      %1029 = vrot.lane.b32.xlu0 %v984, 64
      %v1030 = vpop.permute.xlu0 %1029
      %1031 = vrot.lane.b32.xlu0 %v985, 64
      %v1032 = vpop.permute.xlu0 %1031
      %1033 = vrot.lane.b32.xlu0 %v986, 64
      %v1034 = vpop.permute.xlu0 %1033
      %v1051 = vadd.f32 %v731, %v1004
      %v1052 = vadd.f32 %v732, %v1006
      %v1053 = vadd.f32 %v733, %v1008
      %v1054 = vadd.f32 %v734, %v1010
      %v1055 = vadd.f32 %v735, %v1012
      %v1056 = vadd.f32 %v736, %v1014
      %v1057 = vadd.f32 %v737, %v1016
      %v1058 = vadd.f32 %v738, %v1018
      %v1059 = vadd.f32 %v739, %v1020
      %v1060 = vadd.f32 %v740, %v1022
      %v1061 = vadd.f32 %v741, %v1024
      %v1062 = vadd.f32 %v742, %v1026
      %v1063 = vadd.f32 %v743, %v1028
      %v1064 = vadd.f32 %v744, %v1030
      %v1065 = vadd.f32 %v745, %v1032
      %v1066 = vadd.f32 %v746, %v1034
      %1083 = vrot.lane.b32.xlu0 %v1051, 32
      %v1084 = vpop.permute.xlu0 %1083
      %1085 = vrot.lane.b32.xlu0 %v1052, 32
      %v1086 = vpop.permute.xlu0 %1085
      %1087 = vrot.lane.b32.xlu0 %v1053, 32
      %v1088 = vpop.permute.xlu0 %1087
      %1089 = vrot.lane.b32.xlu0 %v1054, 32
      %v1090 = vpop.permute.xlu0 %1089
      %1091 = vrot.lane.b32.xlu0 %v1055, 32
      %v1092 = vpop.permute.xlu0 %1091
      %1093 = vrot.lane.b32.xlu0 %v1056, 32
      %v1094 = vpop.permute.xlu0 %1093
      %1095 = vrot.lane.b32.xlu0 %v1057, 32
      %v1096 = vpop.permute.xlu0 %1095
      %1097 = vrot.lane.b32.xlu0 %v1058, 32
      %v1098 = vpop.permute.xlu0 %1097
      %1099 = vrot.lane.b32.xlu0 %v1059, 32
      %v1100 = vpop.permute.xlu0 %1099
      %1101 = vrot.lane.b32.xlu0 %v1060, 32
      %v1102 = vpop.permute.xlu0 %1101
      %1103 = vrot.lane.b32.xlu0 %v1061, 32
      %v1104 = vpop.permute.xlu0 %1103
      %1105 = vrot.lane.b32.xlu0 %v1062, 32
      %v1106 = vpop.permute.xlu0 %1105
      %1107 = vrot.lane.b32.xlu0 %v1063, 32
      %v1108 = vpop.permute.xlu0 %1107
      %1109 = vrot.lane.b32.xlu0 %v1064, 32
      %v1110 = vpop.permute.xlu0 %1109
      %1111 = vrot.lane.b32.xlu0 %v1065, 32
      %v1112 = vpop.permute.xlu0 %1111
      %1113 = vrot.lane.b32.xlu0 %v1066, 32
      %v1114 = vpop.permute.xlu0 %1113
      %1131 = vrot.lane.b32.xlu0 %v429, 64
      %v1132 = vpop.permute.xlu0 %1131
      %1133 = vrot.lane.b32.xlu0 %v435, 64
      %v1134 = vpop.permute.xlu0 %1133
      %1135 = vrot.lane.b32.xlu0 %v441, 64
      %v1136 = vpop.permute.xlu0 %1135
      %1137 = vrot.lane.b32.xlu0 %v447, 64
      %v1138 = vpop.permute.xlu0 %1137
      %1139 = vrot.lane.b32.xlu0 %v453, 64
      %v1140 = vpop.permute.xlu0 %1139
      %1141 = vrot.lane.b32.xlu0 %v459, 64
      %v1142 = vpop.permute.xlu0 %1141
      %1143 = vrot.lane.b32.xlu0 %v465, 64
      %v1144 = vpop.permute.xlu0 %1143
      %1145 = vrot.lane.b32.xlu0 %v471, 64
      %v1146 = vpop.permute.xlu0 %1145
      %1147 = vrot.lane.b32.xlu0 %v477, 64
      %v1148 = vpop.permute.xlu0 %1147
      %1149 = vrot.lane.b32.xlu0 %v483, 64
      %v1150 = vpop.permute.xlu0 %1149
      %1151 = vrot.lane.b32.xlu0 %v489, 64
      %v1152 = vpop.permute.xlu0 %1151
      %1153 = vrot.lane.b32.xlu0 %v495, 64
      %v1154 = vpop.permute.xlu0 %1153
      %1155 = vrot.lane.b32.xlu0 %v501, 64
      %v1156 = vpop.permute.xlu0 %1155
      %1157 = vrot.lane.b32.xlu0 %v507, 64
      %v1158 = vpop.permute.xlu0 %1157
      %1159 = vrot.lane.b32.xlu0 %v513, 64
      %v1160 = vpop.permute.xlu0 %1159
      %1161 = vrot.lane.b32.xlu0 %v519, 64
      %v1162 = vpop.permute.xlu0 %1161
      %1195 = vrot.lane.b32.xlu0 %v811, 96
      %v1196 = vpop.permute.xlu0 %1195
      %1197 = vrot.lane.b32.xlu0 %v812, 96
      %v1198 = vpop.permute.xlu0 %1197
      %1199 = vrot.lane.b32.xlu0 %v813, 96
      %v1200 = vpop.permute.xlu0 %1199
      %1201 = vrot.lane.b32.xlu0 %v814, 96
      %v1202 = vpop.permute.xlu0 %1201
      %1203 = vrot.lane.b32.xlu0 %v815, 96
      %v1204 = vpop.permute.xlu0 %1203
      %1205 = vrot.lane.b32.xlu0 %v816, 96
      %v1206 = vpop.permute.xlu0 %1205
      %1207 = vrot.lane.b32.xlu0 %v817, 96
      %v1208 = vpop.permute.xlu0 %1207
      %1209 = vrot.lane.b32.xlu0 %v818, 96
      %v1210 = vpop.permute.xlu0 %1209
      %1211 = vrot.lane.b32.xlu0 %v819, 96
      %v1212 = vpop.permute.xlu0 %1211
      %1213 = vrot.lane.b32.xlu0 %v820, 96
      %v1214 = vpop.permute.xlu0 %1213
      %1215 = vrot.lane.b32.xlu0 %v821, 96
      %v1216 = vpop.permute.xlu0 %1215
      %1217 = vrot.lane.b32.xlu0 %v822, 96
      %v1218 = vpop.permute.xlu0 %1217
      %1219 = vrot.lane.b32.xlu0 %v823, 96
      %v1220 = vpop.permute.xlu0 %1219
      %1221 = vrot.lane.b32.xlu0 %v824, 96
      %v1222 = vpop.permute.xlu0 %1221
      %1223 = vrot.lane.b32.xlu0 %v825, 96
      %v1224 = vpop.permute.xlu0 %1223
      %1225 = vrot.lane.b32.xlu0 %v826, 96
      %v1226 = vpop.permute.xlu0 %1225
      %vm1227 = vcmask 261120
      %vm1228 = vcmask 523264
      %v1229 = vsel %vm1228, %v684, %v1084
      %v1230 = vsel %vm1228, %v686, %v1086
      %v1231 = vsel %vm1228, %v688, %v1088
      %v1232 = vsel %vm1228, %v690, %v1090
      %v1233 = vsel %vm1228, %v692, %v1092
      %v1234 = vsel %vm1228, %v694, %v1094
      %v1235 = vsel %vm1228, %v696, %v1096
      %v1236 = vsel %vm1228, %v698, %v1098
      %v1237 = vsel %vm1228, %v700, %v1100
      %v1238 = vsel %vm1228, %v702, %v1102
      %v1239 = vsel %vm1228, %v704, %v1104
      %v1240 = vsel %vm1228, %v706, %v1106
      %v1241 = vsel %vm1228, %v708, %v1108
      %v1242 = vsel %vm1228, %v710, %v1110
      %v1243 = vsel %vm1228, %v712, %v1112
      %v1244 = vsel %vm1228, %v714, %v1114
      %vm1245 = vcmask 785408
      %v1246 = vsel %vm1245, %v1229, %v1132
      %v1247 = vsel %vm1245, %v1230, %v1134
      %v1248 = vsel %vm1245, %v1231, %v1136
      %v1249 = vsel %vm1245, %v1232, %v1138
      %v1250 = vsel %vm1245, %v1233, %v1140
      %v1251 = vsel %vm1245, %v1234, %v1142
      %v1252 = vsel %vm1245, %v1235, %v1144
      %v1253 = vsel %vm1245, %v1236, %v1146
      %v1254 = vsel %vm1245, %v1237, %v1148
      %v1255 = vsel %vm1245, %v1238, %v1150
      %v1256 = vsel %vm1245, %v1239, %v1152
      %v1257 = vsel %vm1245, %v1240, %v1154
      %v1258 = vsel %vm1245, %v1241, %v1156
      %v1259 = vsel %vm1245, %v1242, %v1158
      %v1260 = vsel %vm1245, %v1243, %v1160
      %v1261 = vsel %vm1245, %v1244, %v1162
      %v1262 = vmul.f32 %v431, 0.33333334
      %v1263 = vmul.f32 %v437, 0.33333334
      %v1264 = vmul.f32 %v443, 0.33333334
      %v1265 = vmul.f32 %v449, 0.33333334
      %v1266 = vmul.f32 %v455, 0.33333334
      %v1267 = vmul.f32 %v461, 0.33333334
      %v1268 = vmul.f32 %v467, 0.33333334
      %v1269 = vmul.f32 %v473, 0.33333334
      %v1270 = vmul.f32 %v479, 0.33333334
      %v1271 = vmul.f32 %v485, 0.33333334
      %v1272 = vmul.f32 %v491, 0.33333334
      %v1273 = vmul.f32 %v497, 0.33333334
      %v1274 = vmul.f32 %v503, 0.33333334
      %v1275 = vmul.f32 %v509, 0.33333334
      %v1276 = vmul.f32 %v515, 0.33333334
      %v1277 = vmul.f32 %v521, 0.33333334
      %v1278 = vadd.f32 %v1262, %v828
      %v1279 = vadd.f32 %v1263, %v830
      %v1280 = vadd.f32 %v1264, %v832
      %v1281 = vadd.f32 %v1265, %v834
      %v1282 = vadd.f32 %v1266, %v836
      %v1283 = vadd.f32 %v1267, %v838
      %v1284 = vadd.f32 %v1268, %v840
      %v1285 = vadd.f32 %v1269, %v842
      %v1286 = vadd.f32 %v1270, %v844
      %v1287 = vadd.f32 %v1271, %v846
      %v1288 = vadd.f32 %v1272, %v848
      %v1289 = vadd.f32 %v1273, %v850
      %v1290 = vadd.f32 %v1274, %v852
      %v1291 = vadd.f32 %v1275, %v854
      %v1292 = vadd.f32 %v1276, %v856
      %v1293 = vadd.f32 %v1277, %v858
      %1294 = vrot.lane.b32.xlu0 %v619, 32
      %v1295 = vpop.permute.xlu0 %1294
      %1296 = vrot.lane.b32.xlu0 %v620, 32
      %v1297 = vpop.permute.xlu0 %1296
      %1298 = vrot.lane.b32.xlu0 %v621, 32
      %v1299 = vpop.permute.xlu0 %1298
      %1300 = vrot.lane.b32.xlu0 %v622, 32
      %v1301 = vpop.permute.xlu0 %1300
      %1302 = vrot.lane.b32.xlu0 %v623, 32
      %v1303 = vpop.permute.xlu0 %1302
      %1304 = vrot.lane.b32.xlu0 %v624, 32
      %v1305 = vpop.permute.xlu0 %1304
      %1306 = vrot.lane.b32.xlu0 %v625, 32
      %v1307 = vpop.permute.xlu0 %1306
      %1308 = vrot.lane.b32.xlu0 %v626, 32
      %v1309 = vpop.permute.xlu0 %1308
      %1310 = vrot.lane.b32.xlu0 %v627, 32
      %v1311 = vpop.permute.xlu0 %1310
      %1312 = vrot.lane.b32.xlu0 %v628, 32
      %v1313 = vpop.permute.xlu0 %1312
      %1314 = vrot.lane.b32.xlu0 %v629, 32
      %v1315 = vpop.permute.xlu0 %1314
      %1316 = vrot.lane.b32.xlu0 %v630, 32
      %v1317 = vpop.permute.xlu0 %1316
      %1318 = vrot.lane.b32.xlu0 %v631, 32
      %v1319 = vpop.permute.xlu0 %1318
      %1320 = vrot.lane.b32.xlu0 %v632, 32
      %v1321 = vpop.permute.xlu0 %1320
      %1322 = vrot.lane.b32.xlu0 %v633, 32
      %v1323 = vpop.permute.xlu0 %1322
      %1324 = vrot.lane.b32.xlu0 %v634, 32
      %v1325 = vpop.permute.xlu0 %1324
      %v1342 = vsel %vm1227, %v1278, %v1262
      %v1343 = vsel %vm1227, %v1279, %v1263
      %v1344 = vsel %vm1227, %v1280, %v1264
      %v1345 = vsel %vm1227, %v1281, %v1265
      %v1346 = vsel %vm1227, %v1282, %v1266
      %v1347 = vsel %vm1227, %v1283, %v1267
      %v1348 = vsel %vm1227, %v1284, %v1268
      %v1349 = vsel %vm1227, %v1285, %v1269
      %v1350 = vsel %vm1227, %v1286, %v1270
      %v1351 = vsel %vm1227, %v1287, %v1271
      %v1352 = vsel %vm1227, %v1288, %v1272
      %v1353 = vsel %vm1227, %v1289, %v1273
      %v1354 = vsel %vm1227, %v1290, %v1274
      %v1355 = vsel %vm1227, %v1291, %v1275
      %v1356 = vsel %vm1227, %v1292, %v1276
      %v1357 = vsel %vm1227, %v1293, %v1277
      %v1358 = vsel %vm1228, %v1342, %v431
      %v1359 = vsel %vm1228, %v1343, %v437
      %v1360 = vsel %vm1228, %v1344, %v443
      %v1361 = vsel %vm1228, %v1345, %v449
      %v1362 = vsel %vm1228, %v1346, %v455
      %v1363 = vsel %vm1228, %v1347, %v461
      %v1364 = vsel %vm1228, %v1348, %v467
      %v1365 = vsel %vm1228, %v1349, %v473
      %v1366 = vsel %vm1228, %v1350, %v479
      %v1367 = vsel %vm1228, %v1351, %v485
      %v1368 = vsel %vm1228, %v1352, %v491
      %v1369 = vsel %vm1228, %v1353, %v497
      %v1370 = vsel %vm1228, %v1354, %v503
      %v1371 = vsel %vm1228, %v1355, %v509
      %v1372 = vsel %vm1228, %v1356, %v515
      %v1373 = vsel %vm1228, %v1357, %v521
      %v1374 = vsel %vm1245, %v1358, %v1295
      %v1375 = vsel %vm1245, %v1359, %v1297
      %v1376 = vsel %vm1245, %v1360, %v1299
      %v1377 = vsel %vm1245, %v1361, %v1301
      %v1378 = vsel %vm1245, %v1362, %v1303
      %v1379 = vsel %vm1245, %v1363, %v1305
      %v1380 = vsel %vm1245, %v1364, %v1307
      %v1381 = vsel %vm1245, %v1365, %v1309
      %v1382 = vsel %vm1245, %v1366, %v1311
      %v1383 = vsel %vm1245, %v1367, %v1313
      %v1384 = vsel %vm1245, %v1368, %v1315
      %v1385 = vsel %vm1245, %v1369, %v1317
      %v1386 = vsel %vm1245, %v1370, %v1319
      %v1387 = vsel %vm1245, %v1371, %v1321
      %v1388 = vsel %vm1245, %v1372, %v1323
      %v1389 = vsel %vm1245, %v1373, %v1325
      %v1390 = vld [vmem:[%s2] sm:$0xff]
      %v1391 = vld [vmem:[%s2 + $0x8] sm:$0xff]
      %v1392 = vld [vmem:[%s2 + $0x10] sm:$0xff]
      %v1393 = vld [vmem:[%s2 + $0x18] sm:$0xff]
      %v1394 = vld [vmem:[%s2 + $0x20] sm:$0xff]
      %v1395 = vld [vmem:[%s2 + $0x50] sm:$0xff]
      %v1396 = vld [vmem:[%s2 + $0x58] sm:$0xff]
      %v1397 = vld [vmem:[%s2 + $0x60] sm:$0xff]
      %v1398 = vld [vmem:[%s2 + $0x68] sm:$0xff]
      %v1399 = vld [vmem:[%s2 + $0x70] sm:$0xff]
      %v1400 = vld [vmem:[%s2 + $0xa0] sm:$0xff]
      %v1401 = vld [vmem:[%s2 + $0xa8] sm:$0xff]
      %v1402 = vld [vmem:[%s2 + $0xb0] sm:$0xff]
      %v1403 = vld [vmem:[%s2 + $0xb8] sm:$0xff]
      %v1404 = vld [vmem:[%s2 + $0xc0] sm:$0xff]
      %v1405 = vld [vmem:[%s2 + $0xf0] sm:$0xff]
      %v1406 = vld [vmem:[%s2 + $0xf8] sm:$0xff]
      %v1407 = vld [vmem:[%s2 + $0x100] sm:$0xff]
      %v1408 = vld [vmem:[%s2 + $0x108] sm:$0xff]
      %v1409 = vld [vmem:[%s2 + $0x110] sm:$0xff]
      %v1410 = vld [vmem:[%s2 + $0x140] sm:$0xff]
      %v1411 = vld [vmem:[%s2 + $0x148] sm:$0xff]
      %v1412 = vld [vmem:[%s2 + $0x150] sm:$0xff]
      %v1413 = vld [vmem:[%s2 + $0x158] sm:$0xff]
      %v1414 = vld [vmem:[%s2 + $0x160] sm:$0xff]
      %v1415 = vld [vmem:[%s2 + $0x190] sm:$0xff]
      %v1416 = vld [vmem:[%s2 + $0x198] sm:$0xff]
      %v1417 = vld [vmem:[%s2 + $0x1a0] sm:$0xff]
      %v1418 = vld [vmem:[%s2 + $0x1a8] sm:$0xff]
      %v1419 = vld [vmem:[%s2 + $0x1b0] sm:$0xff]
      %v1420 = vld [vmem:[%s2 + $0x1e0] sm:$0xff]
      %v1421 = vld [vmem:[%s2 + $0x1e8] sm:$0xff]
      %v1422 = vld [vmem:[%s2 + $0x1f0] sm:$0xff]
      %v1423 = vld [vmem:[%s2 + $0x1f8] sm:$0xff]
      %v1424 = vld [vmem:[%s2 + $0x200] sm:$0xff]
      %v1425 = vld [vmem:[%s2 + $0x230] sm:$0xff]
      %v1426 = vld [vmem:[%s2 + $0x238] sm:$0xff]
      %v1427 = vld [vmem:[%s2 + $0x240] sm:$0xff]
      %v1428 = vld [vmem:[%s2 + $0x248] sm:$0xff]
      %v1429 = vld [vmem:[%s2 + $0x250] sm:$0xff]
      %v1430 = vld [vmem:[%s2 + $0x280] sm:$0xff]
      %v1431 = vld [vmem:[%s2 + $0x288] sm:$0xff]
      %v1432 = vld [vmem:[%s2 + $0x290] sm:$0xff]
      %v1433 = vld [vmem:[%s2 + $0x298] sm:$0xff]
      %v1434 = vld [vmem:[%s2 + $0x2a0] sm:$0xff]
      %v1435 = vld [vmem:[%s2 + $0x2d0] sm:$0xff]
      %v1436 = vld [vmem:[%s2 + $0x2d8] sm:$0xff]
      %v1437 = vld [vmem:[%s2 + $0x2e0] sm:$0xff]
      %v1438 = vld [vmem:[%s2 + $0x2e8] sm:$0xff]
      %v1439 = vld [vmem:[%s2 + $0x2f0] sm:$0xff]
      %v1440 = vld [vmem:[%s2 + $0x320] sm:$0xff]
      %v1441 = vld [vmem:[%s2 + $0x328] sm:$0xff]
      %v1442 = vld [vmem:[%s2 + $0x330] sm:$0xff]
      %v1443 = vld [vmem:[%s2 + $0x338] sm:$0xff]
      %v1444 = vld [vmem:[%s2 + $0x340] sm:$0xff]
      %v1445 = vld [vmem:[%s2 + $0x370] sm:$0xff]
      %v1446 = vld [vmem:[%s2 + $0x378] sm:$0xff]
      %v1447 = vld [vmem:[%s2 + $0x380] sm:$0xff]
      %v1448 = vld [vmem:[%s2 + $0x388] sm:$0xff]
      %v1449 = vld [vmem:[%s2 + $0x390] sm:$0xff]
      %v1450 = vld [vmem:[%s2 + $0x3c0] sm:$0xff]
      %v1451 = vld [vmem:[%s2 + $0x3c8] sm:$0xff]
      %v1452 = vld [vmem:[%s2 + $0x3d0] sm:$0xff]
      %v1453 = vld [vmem:[%s2 + $0x3d8] sm:$0xff]
      %v1454 = vld [vmem:[%s2 + $0x3e0] sm:$0xff]
      %v1455 = vld [vmem:[%s2 + $0x410] sm:$0xff]
      %v1456 = vld [vmem:[%s2 + $0x418] sm:$0xff]
      %v1457 = vld [vmem:[%s2 + $0x420] sm:$0xff]
      %v1458 = vld [vmem:[%s2 + $0x428] sm:$0xff]
      %v1459 = vld [vmem:[%s2 + $0x430] sm:$0xff]
      %v1460 = vld [vmem:[%s2 + $0x460] sm:$0xff]
      %v1461 = vld [vmem:[%s2 + $0x468] sm:$0xff]
      %v1462 = vld [vmem:[%s2 + $0x470] sm:$0xff]
      %v1463 = vld [vmem:[%s2 + $0x478] sm:$0xff]
      %v1464 = vld [vmem:[%s2 + $0x480] sm:$0xff]
      %v1465 = vld [vmem:[%s2 + $0x4b0] sm:$0xff]
      %v1466 = vld [vmem:[%s2 + $0x4b8] sm:$0xff]
      %v1467 = vld [vmem:[%s2 + $0x4c0] sm:$0xff]
      %v1468 = vld [vmem:[%s2 + $0x4c8] sm:$0xff]
      %v1469 = vld [vmem:[%s2 + $0x4d0] sm:$0xff]
      %v1470 = vld [vmem:[%s2 + $0x500] sm:$0xff]
      %v1471 = vld [vmem:[%s2 + $0x508] sm:$0xff]
      %v1472 = vld [vmem:[%s2 + $0x510] sm:$0xff]
      %v1473 = vld [vmem:[%s2 + $0x518] sm:$0xff]
      %v1474 = vld [vmem:[%s2 + $0x520] sm:$0xff]
      %v1475 = vld [vmem:[%s2 + $0x550] sm:$0xff]
      %v1476 = vld [vmem:[%s2 + $0x558] sm:$0xff]
      %v1477 = vld [vmem:[%s2 + $0x560] sm:$0xff]
      %v1478 = vld [vmem:[%s2 + $0x568] sm:$0xff]
      %v1479 = vld [vmem:[%s2 + $0x570] sm:$0xff]
      %v1480 = vld [vmem:[%s2 + $0x5a0] sm:$0xff]
      %v1481 = vld [vmem:[%s2 + $0x5a8] sm:$0xff]
      %v1482 = vld [vmem:[%s2 + $0x5b0] sm:$0xff]
      %v1483 = vld [vmem:[%s2 + $0x5b8] sm:$0xff]
      %v1484 = vld [vmem:[%s2 + $0x5c0] sm:$0xff]
      %v1485 = vld [vmem:[%s2 + $0x5f0] sm:$0xff]
      %v1486 = vld [vmem:[%s2 + $0x5f8] sm:$0xff]
      %v1487 = vld [vmem:[%s2 + $0x600] sm:$0xff]
      %v1488 = vld [vmem:[%s2 + $0x608] sm:$0xff]
      %v1489 = vld [vmem:[%s2 + $0x610] sm:$0xff]
      %v1490 = vsel %vm1227, %v1196, 0
      %v1492 = vsel %vm1227, %v1198, 0
      %v1494 = vsel %vm1227, %v1200, 0
      %v1496 = vsel %vm1227, %v1202, 0
      %v1498 = vsel %vm1227, %v1204, 0
      %v1500 = vsel %vm1227, %v1206, 0
      %v1502 = vsel %vm1227, %v1208, 0
      %v1504 = vsel %vm1227, %v1210, 0
      %v1506 = vsel %vm1227, %v1212, 0
      %v1508 = vsel %vm1227, %v1214, 0
      %v1510 = vsel %vm1227, %v1216, 0
      %v1512 = vsel %vm1227, %v1218, 0
      %v1514 = vsel %vm1227, %v1220, 0
      %v1516 = vsel %vm1227, %v1222, 0
      %v1518 = vsel %vm1227, %v1224, 0
      %v1520 = vsel %vm1227, %v1226, 0
      %1522 = vmatprep.subr.mxu0 %v1466
      %1523 = vmatpush1.msra.mxu0 %v1465
      %1524 = vmatprep.subr.mxu0 %v1461
      %1525 = vmatpush1.msra.mxu0 %v1460
      %1526 = vmatprep.subr.mxu0 %v1456
      %1527 = vmatpush1.msra.mxu0 %v1455
      %1528 = vmatprep.subr.mxu0 %v1451
      %1529 = vmatpush1.msra.mxu0 %v1450
      %1530 = vmatprep.subr.mxu0 %v1446
      %1531 = vmatpush1.msra.mxu0 %v1445
      %1532 = vmatprep.subr.mxu0 %v1441
      %1533 = vmatpush1.msra.mxu0 %v1440
      %1534 = vmatprep.subr.mxu0 %v1436
      %1535 = vmatpush1.msra.mxu0 %v1435
      %1536 = vmatprep.subr.mxu0 %v1431
      %1537 = vmatpush1.msra.mxu0 %v1430
      %1538 = vmatprep.subr.mxu0 %v1426
      %1539 = vmatpush1.msra.mxu0 %v1425
      %1540 = vmatprep.subr.mxu0 %v1421
      %1541 = vmatpush1.msra.mxu0 %v1420
      %1542 = vmatprep.subr.mxu0 %v1416
      %1543 = vmatpush1.msra.mxu0 %v1415
      %1544 = vmatprep.subr.mxu0 %v1411
      %1545 = vmatpush1.msra.mxu0 %v1410
      %1546 = vmatprep.subr.mxu0 %v1406
      %1547 = vmatpush1.msra.mxu0 %v1405
      %1548 = vmatprep.subr.mxu0 %v1401
      %1549 = vmatpush1.msra.mxu0 %v1400
      %1550 = vmatprep.subr.mxu0 %v1396
      %1551 = vmatpush1.msra.mxu0 %v1395
      %1552 = vmatprep.subr.mxu0 %v1391
      %1553 = vmatpush1.msra.mxu0 %v1390
      %1554 = vmatprep.subr.mxu0 0.0
      %1555 = vmatpush2.msra.mxu0 0.0
      %1556 = vmatprep.subr.mxu0 0.0
      %1557 = vmatpush2.msra.mxu0 0.0
      %1558 = vmatprep.subr.mxu0 0.0
      %1559 = vmatpush2.msra.mxu0 0.0
      %1560 = vmatprep.subr.mxu0 0.0
      %1561 = vmatpush2.msra.mxu0 0.0
      %1562 = vmatprep.subr.mxu0 0.0
      %1563 = vmatpush2.msra.mxu0 0.0
      %1564 = vmatprep.subr.mxu0 0.0
      %1565 = vmatpush2.msra.mxu0 0.0
      %1566 = vmatprep.subr.mxu0 0.0
      %1567 = vmatpush2.msra.mxu0 0.0
      %1568 = vmatprep.subr.mxu0 0.0
      %1569 = vmatpush2.msra.mxu0 0.0
      %1570 = vmatprep.subr.mxu0 0.0
      %1571 = vmatpush2.msra.mxu0 0.0
      %1572 = vmatprep.subr.mxu0 0.0
      %1573 = vmatpush2.msra.mxu0 0.0
      %1574 = vmatprep.subr.mxu0 0.0
      %1575 = vmatpush2.msra.mxu0 0.0
      %1576 = vmatprep.subr.mxu0 0.0
      %1577 = vmatpush2.msra.mxu0 0.0
      %1578 = vmatprep.subr.mxu0 %v1486
      %1579 = vmatpush2.msra.mxu0 %v1485
      %1580 = vmatprep.subr.mxu0 %v1481
      %1581 = vmatpush2.msra.mxu0 %v1480
      %1582 = vmatprep.subr.mxu0 %v1476
      %1583 = vmatpush2.msra.mxu0 %v1475
      %1584 = vmatprep.subr.mxu0 %v1471
      %1585 = vmatpush2.msra.mxu0 %v1470
      %1586 = vmatprep.mubr.f32.mxu0 %v1490
      %1587 = vmatmul.mubr.f32.gmra.mxu0 %v1246
      %v1588 = vpop.f32.mrf.mxu0
      %v1589 = vadd.f32 0.0, %v1588
      %v1590 = vpop.f32.mrf.mxu0
      %v1591 = vadd.f32 0.0, %v1590
      %1592 = vmatprep.mubr.f32.mxu0 %v1492
      %1593 = vmatmul.mubr.f32.gmra.mxu0 %v1247
      %v1594 = vpop.f32.mrf.mxu0
      %v1595 = vadd.f32 0.0, %v1594
      %v1596 = vpop.f32.mrf.mxu0
      %v1597 = vadd.f32 0.0, %v1596
      %1598 = vmatprep.mubr.f32.mxu0 %v1494
      %1599 = vmatmul.mubr.f32.gmra.mxu0 %v1248
      %v1600 = vpop.f32.mrf.mxu0
      %v1601 = vadd.f32 0.0, %v1600
      %v1602 = vpop.f32.mrf.mxu0
      %v1603 = vadd.f32 0.0, %v1602
      %1604 = vmatprep.mubr.f32.mxu0 %v1496
      %1605 = vmatmul.mubr.f32.gmra.mxu0 %v1249
      %v1606 = vpop.f32.mrf.mxu0
      %v1607 = vadd.f32 0.0, %v1606
      %v1608 = vpop.f32.mrf.mxu0
      %v1609 = vadd.f32 0.0, %v1608
      %1610 = vmatprep.mubr.f32.mxu0 %v1498
      %1611 = vmatmul.mubr.f32.gmra.mxu0 %v1250
      %v1612 = vpop.f32.mrf.mxu0
      %v1613 = vadd.f32 0.0, %v1612
      %v1614 = vpop.f32.mrf.mxu0
      %v1615 = vadd.f32 0.0, %v1614
      %1616 = vmatprep.mubr.f32.mxu0 %v1500
      %1617 = vmatmul.mubr.f32.gmra.mxu0 %v1251
      %v1618 = vpop.f32.mrf.mxu0
      %v1619 = vadd.f32 0.0, %v1618
      %v1620 = vpop.f32.mrf.mxu0
      %v1621 = vadd.f32 0.0, %v1620
      %1622 = vmatprep.mubr.f32.mxu0 %v1502
      %1623 = vmatmul.mubr.f32.gmra.mxu0 %v1252
      %v1624 = vpop.f32.mrf.mxu0
      %v1625 = vadd.f32 0.0, %v1624
      %v1626 = vpop.f32.mrf.mxu0
      %v1627 = vadd.f32 0.0, %v1626
      %1628 = vmatprep.mubr.f32.mxu0 %v1504
      %1629 = vmatmul.mubr.f32.gmra.mxu0 %v1253
      %v1630 = vpop.f32.mrf.mxu0
      %v1631 = vadd.f32 0.0, %v1630
      %v1632 = vpop.f32.mrf.mxu0
      %v1633 = vadd.f32 0.0, %v1632
      %1634 = vmatprep.mubr.f32.mxu0 %v1506
      %1635 = vmatmul.mubr.f32.gmra.mxu0 %v1254
      %v1636 = vpop.f32.mrf.mxu0
      %v1637 = vadd.f32 0.0, %v1636
      %v1638 = vpop.f32.mrf.mxu0
      %v1639 = vadd.f32 0.0, %v1638
      %1640 = vmatprep.mubr.f32.mxu0 %v1508
      %1641 = vmatmul.mubr.f32.gmra.mxu0 %v1255
      %v1642 = vpop.f32.mrf.mxu0
      %v1643 = vadd.f32 0.0, %v1642
      %v1644 = vpop.f32.mrf.mxu0
      %v1645 = vadd.f32 0.0, %v1644
      %1646 = vmatprep.mubr.f32.mxu0 %v1510
      %1647 = vmatmul.mubr.f32.gmra.mxu0 %v1256
      %v1648 = vpop.f32.mrf.mxu0
      %v1649 = vadd.f32 0.0, %v1648
      %v1650 = vpop.f32.mrf.mxu0
      %v1651 = vadd.f32 0.0, %v1650
      %1652 = vmatprep.mubr.f32.mxu0 %v1512
      %1653 = vmatmul.mubr.f32.gmra.mxu0 %v1257
      %v1654 = vpop.f32.mrf.mxu0
      %v1655 = vadd.f32 0.0, %v1654
      %v1656 = vpop.f32.mrf.mxu0
      %v1657 = vadd.f32 0.0, %v1656
      %1658 = vmatprep.mubr.f32.mxu0 %v1514
      %1659 = vmatmul.mubr.f32.gmra.mxu0 %v1258
      %v1660 = vpop.f32.mrf.mxu0
      %v1661 = vadd.f32 0.0, %v1660
      %v1662 = vpop.f32.mrf.mxu0
      %v1663 = vadd.f32 0.0, %v1662
      %1664 = vmatprep.mubr.f32.mxu0 %v1516
      %1665 = vmatmul.mubr.f32.gmra.mxu0 %v1259
      %v1666 = vpop.f32.mrf.mxu0
      %v1667 = vadd.f32 0.0, %v1666
      %v1668 = vpop.f32.mrf.mxu0
      %v1669 = vadd.f32 0.0, %v1668
      %1670 = vmatprep.mubr.f32.mxu0 %v1518
      %1671 = vmatmul.mubr.f32.gmra.mxu0 %v1260
      %v1672 = vpop.f32.mrf.mxu0
      %v1673 = vadd.f32 0.0, %v1672
      %v1674 = vpop.f32.mrf.mxu0
      %v1675 = vadd.f32 0.0, %v1674
      %1676 = vmatprep.mubr.f32.mxu0 %v1520
      %1677 = vmatmul.mubr.f32.gmra.mxu0 %v1261
      %v1678 = vpop.f32.mrf.mxu0
      %v1679 = vadd.f32 0.0, %v1678
      %v1680 = vpop.f32.mrf.mxu0
      %v1681 = vadd.f32 0.0, %v1680
      %1682 = vdwg.mxu0
      %1683 = vmatprep.subr.mxu0 %v1468
      %1684 = vmatpush1.msra.mxu0 %v1467
      %1685 = vmatprep.subr.mxu0 %v1463
      %1686 = vmatpush1.msra.mxu0 %v1462
      %1687 = vmatprep.subr.mxu0 %v1458
      %1688 = vmatpush1.msra.mxu0 %v1457
      %1689 = vmatprep.subr.mxu0 %v1453
      %1690 = vmatpush1.msra.mxu0 %v1452
      %1691 = vmatprep.subr.mxu0 %v1448
      %1692 = vmatpush1.msra.mxu0 %v1447
      %1693 = vmatprep.subr.mxu0 %v1443
      %1694 = vmatpush1.msra.mxu0 %v1442
      %1695 = vmatprep.subr.mxu0 %v1438
      %1696 = vmatpush1.msra.mxu0 %v1437
      %1697 = vmatprep.subr.mxu0 %v1433
      %1698 = vmatpush1.msra.mxu0 %v1432
      %1699 = vmatprep.subr.mxu0 %v1428
      %1700 = vmatpush1.msra.mxu0 %v1427
      %1701 = vmatprep.subr.mxu0 %v1423
      %1702 = vmatpush1.msra.mxu0 %v1422
      %1703 = vmatprep.subr.mxu0 %v1418
      %1704 = vmatpush1.msra.mxu0 %v1417
      %1705 = vmatprep.subr.mxu0 %v1413
      %1706 = vmatpush1.msra.mxu0 %v1412
      %1707 = vmatprep.subr.mxu0 %v1408
      %1708 = vmatpush1.msra.mxu0 %v1407
      %1709 = vmatprep.subr.mxu0 %v1403
      %1710 = vmatpush1.msra.mxu0 %v1402
      %1711 = vmatprep.subr.mxu0 %v1398
      %1712 = vmatpush1.msra.mxu0 %v1397
      %1713 = vmatprep.subr.mxu0 %v1393
      %1714 = vmatpush1.msra.mxu0 %v1392
      %1715 = vmatprep.subr.mxu0 0.0
      %1716 = vmatpush2.msra.mxu0 0.0
      %1717 = vmatprep.subr.mxu0 0.0
      %1718 = vmatpush2.msra.mxu0 0.0
      %1719 = vmatprep.subr.mxu0 0.0
      %1720 = vmatpush2.msra.mxu0 0.0
      %1721 = vmatprep.subr.mxu0 0.0
      %1722 = vmatpush2.msra.mxu0 0.0
      %1723 = vmatprep.subr.mxu0 0.0
      %1724 = vmatpush2.msra.mxu0 0.0
      %1725 = vmatprep.subr.mxu0 0.0
      %1726 = vmatpush2.msra.mxu0 0.0
      %1727 = vmatprep.subr.mxu0 0.0
      %1728 = vmatpush2.msra.mxu0 0.0
      %1729 = vmatprep.subr.mxu0 0.0
      %1730 = vmatpush2.msra.mxu0 0.0
      %1731 = vmatprep.subr.mxu0 0.0
      %1732 = vmatpush2.msra.mxu0 0.0
      %1733 = vmatprep.subr.mxu0 0.0
      %1734 = vmatpush2.msra.mxu0 0.0
      %1735 = vmatprep.subr.mxu0 0.0
      %1736 = vmatpush2.msra.mxu0 0.0
      %1737 = vmatprep.subr.mxu0 0.0
      %1738 = vmatpush2.msra.mxu0 0.0
      %1739 = vmatprep.subr.mxu0 %v1488
      %1740 = vmatpush2.msra.mxu0 %v1487
      %1741 = vmatprep.subr.mxu0 %v1483
      %1742 = vmatpush2.msra.mxu0 %v1482
      %1743 = vmatprep.subr.mxu0 %v1478
      %1744 = vmatpush2.msra.mxu0 %v1477
      %1745 = vmatprep.subr.mxu0 %v1473
      %1746 = vmatpush2.msra.mxu0 %v1472
      %1747 = vmatprep.mubr.f32.mxu0 %v1490
      %1748 = vmatmul.mubr.f32.gmra.mxu0 %v1246
      %v1749 = vpop.f32.mrf.mxu0
      %v1750 = vadd.f32 0.0, %v1749
      %v1751 = vpop.f32.mrf.mxu0
      %v1752 = vadd.f32 0.0, %v1751
      %1753 = vmatprep.mubr.f32.mxu0 %v1492
      %1754 = vmatmul.mubr.f32.gmra.mxu0 %v1247
      %v1755 = vpop.f32.mrf.mxu0
      %v1756 = vadd.f32 0.0, %v1755
      %v1757 = vpop.f32.mrf.mxu0
      %v1758 = vadd.f32 0.0, %v1757
      %1759 = vmatprep.mubr.f32.mxu0 %v1494
      %1760 = vmatmul.mubr.f32.gmra.mxu0 %v1248
      %v1761 = vpop.f32.mrf.mxu0
      %v1762 = vadd.f32 0.0, %v1761
      %v1763 = vpop.f32.mrf.mxu0
      %v1764 = vadd.f32 0.0, %v1763
      %1765 = vmatprep.mubr.f32.mxu0 %v1496
      %1766 = vmatmul.mubr.f32.gmra.mxu0 %v1249
      %v1767 = vpop.f32.mrf.mxu0
      %v1768 = vadd.f32 0.0, %v1767
      %v1769 = vpop.f32.mrf.mxu0
      %v1770 = vadd.f32 0.0, %v1769
      %1771 = vmatprep.mubr.f32.mxu0 %v1498
      %1772 = vmatmul.mubr.f32.gmra.mxu0 %v1250
      %v1773 = vpop.f32.mrf.mxu0
      %v1774 = vadd.f32 0.0, %v1773
      %v1775 = vpop.f32.mrf.mxu0
      %v1776 = vadd.f32 0.0, %v1775
      %1777 = vmatprep.mubr.f32.mxu0 %v1500
      %1778 = vmatmul.mubr.f32.gmra.mxu0 %v1251
      %v1779 = vpop.f32.mrf.mxu0
      %v1780 = vadd.f32 0.0, %v1779
      %v1781 = vpop.f32.mrf.mxu0
      %v1782 = vadd.f32 0.0, %v1781
      %1783 = vmatprep.mubr.f32.mxu0 %v1502
      %1784 = vmatmul.mubr.f32.gmra.mxu0 %v1252
      %v1785 = vpop.f32.mrf.mxu0
      %v1786 = vadd.f32 0.0, %v1785
      %v1787 = vpop.f32.mrf.mxu0
      %v1788 = vadd.f32 0.0, %v1787
      %1789 = vmatprep.mubr.f32.mxu0 %v1504
      %1790 = vmatmul.mubr.f32.gmra.mxu0 %v1253
      %v1791 = vpop.f32.mrf.mxu0
      %v1792 = vadd.f32 0.0, %v1791
      %v1793 = vpop.f32.mrf.mxu0
      %v1794 = vadd.f32 0.0, %v1793
      %1795 = vmatprep.mubr.f32.mxu0 %v1506
      %1796 = vmatmul.mubr.f32.gmra.mxu0 %v1254
      %v1797 = vpop.f32.mrf.mxu0
      %v1798 = vadd.f32 0.0, %v1797
      %v1799 = vpop.f32.mrf.mxu0
      %v1800 = vadd.f32 0.0, %v1799
      %1801 = vmatprep.mubr.f32.mxu0 %v1508
      %1802 = vmatmul.mubr.f32.gmra.mxu0 %v1255
      %v1803 = vpop.f32.mrf.mxu0
      %v1804 = vadd.f32 0.0, %v1803
      %v1805 = vpop.f32.mrf.mxu0
      %v1806 = vadd.f32 0.0, %v1805
      %1807 = vmatprep.mubr.f32.mxu0 %v1510
      %1808 = vmatmul.mubr.f32.gmra.mxu0 %v1256
      %v1809 = vpop.f32.mrf.mxu0
      %v1810 = vadd.f32 0.0, %v1809
      %v1811 = vpop.f32.mrf.mxu0
      %v1812 = vadd.f32 0.0, %v1811
      %1813 = vmatprep.mubr.f32.mxu0 %v1512
      %1814 = vmatmul.mubr.f32.gmra.mxu0 %v1257
      %v1815 = vpop.f32.mrf.mxu0
      %v1816 = vadd.f32 0.0, %v1815
      %v1817 = vpop.f32.mrf.mxu0
      %v1818 = vadd.f32 0.0, %v1817
      %1819 = vmatprep.mubr.f32.mxu0 %v1514
      %1820 = vmatmul.mubr.f32.gmra.mxu0 %v1258
      %v1821 = vpop.f32.mrf.mxu0
      %v1822 = vadd.f32 0.0, %v1821
      %v1823 = vpop.f32.mrf.mxu0
      %v1824 = vadd.f32 0.0, %v1823
      %1825 = vmatprep.mubr.f32.mxu0 %v1516
      %1826 = vmatmul.mubr.f32.gmra.mxu0 %v1259
      %v1827 = vpop.f32.mrf.mxu0
      %v1828 = vadd.f32 0.0, %v1827
      %v1829 = vpop.f32.mrf.mxu0
      %v1830 = vadd.f32 0.0, %v1829
      %1831 = vmatprep.mubr.f32.mxu0 %v1518
      %1832 = vmatmul.mubr.f32.gmra.mxu0 %v1260
      %v1833 = vpop.f32.mrf.mxu0
      %v1834 = vadd.f32 0.0, %v1833
      %v1835 = vpop.f32.mrf.mxu0
      %v1836 = vadd.f32 0.0, %v1835
      %1837 = vmatprep.mubr.f32.mxu0 %v1520
      %1838 = vmatmul.mubr.f32.gmra.mxu0 %v1261
      %v1839 = vpop.f32.mrf.mxu0
      %v1840 = vadd.f32 0.0, %v1839
      %v1841 = vpop.f32.mrf.mxu0
      %v1842 = vadd.f32 0.0, %v1841
      %1843 = vdwg.mxu0
      %1844 = vmatprep.subr.mxu0 0.0
      %1845 = vmatpush1.msra.mxu0 %v1469
      %1846 = vmatprep.subr.mxu0 0.0
      %1847 = vmatpush1.msra.mxu0 %v1464
      %1848 = vmatprep.subr.mxu0 0.0
      %1849 = vmatpush1.msra.mxu0 %v1459
      %1850 = vmatprep.subr.mxu0 0.0
      %1851 = vmatpush1.msra.mxu0 %v1454
      %1852 = vmatprep.subr.mxu0 0.0
      %1853 = vmatpush1.msra.mxu0 %v1449
      %1854 = vmatprep.subr.mxu0 0.0
      %1855 = vmatpush1.msra.mxu0 %v1444
      %1856 = vmatprep.subr.mxu0 0.0
      %1857 = vmatpush1.msra.mxu0 %v1439
      %1858 = vmatprep.subr.mxu0 0.0
      %1859 = vmatpush1.msra.mxu0 %v1434
      %1860 = vmatprep.subr.mxu0 0.0
      %1861 = vmatpush1.msra.mxu0 %v1429
      %1862 = vmatprep.subr.mxu0 0.0
      %1863 = vmatpush1.msra.mxu0 %v1424
      %1864 = vmatprep.subr.mxu0 0.0
      %1865 = vmatpush1.msra.mxu0 %v1419
      %1866 = vmatprep.subr.mxu0 0.0
      %1867 = vmatpush1.msra.mxu0 %v1414
      %1868 = vmatprep.subr.mxu0 0.0
      %1869 = vmatpush1.msra.mxu0 %v1409
      %1870 = vmatprep.subr.mxu0 0.0
      %1871 = vmatpush1.msra.mxu0 %v1404
      %1872 = vmatprep.subr.mxu0 0.0
      %1873 = vmatpush1.msra.mxu0 %v1399
      %1874 = vmatprep.subr.mxu0 0.0
      %1875 = vmatpush1.msra.mxu0 %v1394
      %1876 = vmatprep.subr.mxu0 0.0
      %1877 = vmatpush2.msra.mxu0 0.0
      %1878 = vmatprep.subr.mxu0 0.0
      %1879 = vmatpush2.msra.mxu0 0.0
      %1880 = vmatprep.subr.mxu0 0.0
      %1881 = vmatpush2.msra.mxu0 0.0
      %1882 = vmatprep.subr.mxu0 0.0
      %1883 = vmatpush2.msra.mxu0 0.0
      %1884 = vmatprep.subr.mxu0 0.0
      %1885 = vmatpush2.msra.mxu0 0.0
      %1886 = vmatprep.subr.mxu0 0.0
      %1887 = vmatpush2.msra.mxu0 0.0
      %1888 = vmatprep.subr.mxu0 0.0
      %1889 = vmatpush2.msra.mxu0 0.0
      %1890 = vmatprep.subr.mxu0 0.0
      %1891 = vmatpush2.msra.mxu0 0.0
      %1892 = vmatprep.subr.mxu0 0.0
      %1893 = vmatpush2.msra.mxu0 0.0
      %1894 = vmatprep.subr.mxu0 0.0
      %1895 = vmatpush2.msra.mxu0 0.0
      %1896 = vmatprep.subr.mxu0 0.0
      %1897 = vmatpush2.msra.mxu0 0.0
      %1898 = vmatprep.subr.mxu0 0.0
      %1899 = vmatpush2.msra.mxu0 0.0
      %1900 = vmatprep.subr.mxu0 0.0
      %1901 = vmatpush2.msra.mxu0 %v1489
      %1902 = vmatprep.subr.mxu0 0.0
      %1903 = vmatpush2.msra.mxu0 %v1484
      %1904 = vmatprep.subr.mxu0 0.0
      %1905 = vmatpush2.msra.mxu0 %v1479
      %1906 = vmatprep.subr.mxu0 0.0
      %1907 = vmatpush2.msra.mxu0 %v1474
      %1908 = vmatprep.mubr.f32.mxu0 %v1490
      %1909 = vmatmul.mubr.f32.gmra.mxu0 %v1246
      %v1910 = vpop.f32.mrf.mxu0
      %v1911 = vadd.f32 0.0, %v1910
      %v1912 = vpop.f32.mrf.mxu0
      %1913 = vmatprep.mubr.f32.mxu0 %v1492
      %1914 = vmatmul.mubr.f32.gmra.mxu0 %v1247
      %v1915 = vpop.f32.mrf.mxu0
      %v1916 = vadd.f32 0.0, %v1915
      %v1917 = vpop.f32.mrf.mxu0
      %1918 = vmatprep.mubr.f32.mxu0 %v1494
      %1919 = vmatmul.mubr.f32.gmra.mxu0 %v1248
      %v1920 = vpop.f32.mrf.mxu0
      %v1921 = vadd.f32 0.0, %v1920
      %v1922 = vpop.f32.mrf.mxu0
      %1923 = vmatprep.mubr.f32.mxu0 %v1496
      %1924 = vmatmul.mubr.f32.gmra.mxu0 %v1249
      %v1925 = vpop.f32.mrf.mxu0
      %v1926 = vadd.f32 0.0, %v1925
      %v1927 = vpop.f32.mrf.mxu0
      %1928 = vmatprep.mubr.f32.mxu0 %v1498
      %1929 = vmatmul.mubr.f32.gmra.mxu0 %v1250
      %v1930 = vpop.f32.mrf.mxu0
      %v1931 = vadd.f32 0.0, %v1930
      %v1932 = vpop.f32.mrf.mxu0
      %1933 = vmatprep.mubr.f32.mxu0 %v1500
      %1934 = vmatmul.mubr.f32.gmra.mxu0 %v1251
      %v1935 = vpop.f32.mrf.mxu0
      %v1936 = vadd.f32 0.0, %v1935
      %v1937 = vpop.f32.mrf.mxu0
      %1938 = vmatprep.mubr.f32.mxu0 %v1502
      %1939 = vmatmul.mubr.f32.gmra.mxu0 %v1252
      %v1940 = vpop.f32.mrf.mxu0
      %v1941 = vadd.f32 0.0, %v1940
      %v1942 = vpop.f32.mrf.mxu0
      %1943 = vmatprep.mubr.f32.mxu0 %v1504
      %1944 = vmatmul.mubr.f32.gmra.mxu0 %v1253
      %v1945 = vpop.f32.mrf.mxu0
      %v1946 = vadd.f32 0.0, %v1945
      %v1947 = vpop.f32.mrf.mxu0
      %1948 = vmatprep.mubr.f32.mxu0 %v1506
      %1949 = vmatmul.mubr.f32.gmra.mxu0 %v1254
      %v1950 = vpop.f32.mrf.mxu0
      %v1951 = vadd.f32 0.0, %v1950
      %v1952 = vpop.f32.mrf.mxu0
      %1953 = vmatprep.mubr.f32.mxu0 %v1508
      %1954 = vmatmul.mubr.f32.gmra.mxu0 %v1255
      %v1955 = vpop.f32.mrf.mxu0
      %v1956 = vadd.f32 0.0, %v1955
      %v1957 = vpop.f32.mrf.mxu0
      %1958 = vmatprep.mubr.f32.mxu0 %v1510
      %1959 = vmatmul.mubr.f32.gmra.mxu0 %v1256
      %v1960 = vpop.f32.mrf.mxu0
      %v1961 = vadd.f32 0.0, %v1960
      %v1962 = vpop.f32.mrf.mxu0
      %1963 = vmatprep.mubr.f32.mxu0 %v1512
      %1964 = vmatmul.mubr.f32.gmra.mxu0 %v1257
      %v1965 = vpop.f32.mrf.mxu0
      %v1966 = vadd.f32 0.0, %v1965
      %v1967 = vpop.f32.mrf.mxu0
      %1968 = vmatprep.mubr.f32.mxu0 %v1514
      %1969 = vmatmul.mubr.f32.gmra.mxu0 %v1258
      %v1970 = vpop.f32.mrf.mxu0
      %v1971 = vadd.f32 0.0, %v1970
      %v1972 = vpop.f32.mrf.mxu0
      %1973 = vmatprep.mubr.f32.mxu0 %v1516
      %1974 = vmatmul.mubr.f32.gmra.mxu0 %v1259
      %v1975 = vpop.f32.mrf.mxu0
      %v1976 = vadd.f32 0.0, %v1975
      %v1977 = vpop.f32.mrf.mxu0
      %1978 = vmatprep.mubr.f32.mxu0 %v1518
      %1979 = vmatmul.mubr.f32.gmra.mxu0 %v1260
      %v1980 = vpop.f32.mrf.mxu0
      %v1981 = vadd.f32 0.0, %v1980
      %v1982 = vpop.f32.mrf.mxu0
      %1983 = vmatprep.mubr.f32.mxu0 %v1520
      %1984 = vmatmul.mubr.f32.gmra.mxu0 %v1261
      %v1985 = vpop.f32.mrf.mxu0
      %v1986 = vadd.f32 0.0, %v1985
      %v1987 = vpop.f32.mrf.mxu0
      %1988 = vdwg.mxu0
      %v1989 = vld [vmem:[%s2 + $0x28] sm:$0xff]
      %v1990 = vld [vmem:[%s2 + $0x30] sm:$0xff]
      %v1991 = vld [vmem:[%s2 + $0x38] sm:$0xff]
      %v1992 = vld [vmem:[%s2 + $0x40] sm:$0xff]
      %v1993 = vld [vmem:[%s2 + $0x48] sm:$0xff]
      %v1994 = vld [vmem:[%s2 + $0x78] sm:$0xff]
      %v1995 = vld [vmem:[%s2 + $0x80] sm:$0xff]
      %v1996 = vld [vmem:[%s2 + $0x88] sm:$0xff]
      %v1997 = vld [vmem:[%s2 + $0x90] sm:$0xff]
      %v1998 = vld [vmem:[%s2 + $0x98] sm:$0xff]
      %v1999 = vld [vmem:[%s2 + $0xc8] sm:$0xff]
      %v2000 = vld [vmem:[%s2 + $0xd0] sm:$0xff]
      %v2001 = vld [vmem:[%s2 + $0xd8] sm:$0xff]
      %v2002 = vld [vmem:[%s2 + $0xe0] sm:$0xff]
      %v2003 = vld [vmem:[%s2 + $0xe8] sm:$0xff]
      %v2004 = vld [vmem:[%s2 + $0x118] sm:$0xff]
      %v2005 = vld [vmem:[%s2 + $0x120] sm:$0xff]
      %v2006 = vld [vmem:[%s2 + $0x128] sm:$0xff]
      %v2007 = vld [vmem:[%s2 + $0x130] sm:$0xff]
      %v2008 = vld [vmem:[%s2 + $0x138] sm:$0xff]
      %v2009 = vld [vmem:[%s2 + $0x168] sm:$0xff]
      %v2010 = vld [vmem:[%s2 + $0x170] sm:$0xff]
      %v2011 = vld [vmem:[%s2 + $0x178] sm:$0xff]
      %v2012 = vld [vmem:[%s2 + $0x180] sm:$0xff]
      %v2013 = vld [vmem:[%s2 + $0x188] sm:$0xff]
      %v2014 = vld [vmem:[%s2 + $0x1b8] sm:$0xff]
      %v2015 = vld [vmem:[%s2 + $0x1c0] sm:$0xff]
      %v2016 = vld [vmem:[%s2 + $0x1c8] sm:$0xff]
      %v2017 = vld [vmem:[%s2 + $0x1d0] sm:$0xff]
      %v2018 = vld [vmem:[%s2 + $0x1d8] sm:$0xff]
      %v2019 = vld [vmem:[%s2 + $0x208] sm:$0xff]
      %v2020 = vld [vmem:[%s2 + $0x210] sm:$0xff]
      %v2021 = vld [vmem:[%s2 + $0x218] sm:$0xff]
      %v2022 = vld [vmem:[%s2 + $0x220] sm:$0xff]
      %v2023 = vld [vmem:[%s2 + $0x228] sm:$0xff]
      %v2024 = vld [vmem:[%s2 + $0x258] sm:$0xff]
      %v2025 = vld [vmem:[%s2 + $0x260] sm:$0xff]
      %v2026 = vld [vmem:[%s2 + $0x268] sm:$0xff]
      %v2027 = vld [vmem:[%s2 + $0x270] sm:$0xff]
      %v2028 = vld [vmem:[%s2 + $0x278] sm:$0xff]
      %v2029 = vld [vmem:[%s2 + $0x2a8] sm:$0xff]
      %v2030 = vld [vmem:[%s2 + $0x2b0] sm:$0xff]
      %v2031 = vld [vmem:[%s2 + $0x2b8] sm:$0xff]
      %v2032 = vld [vmem:[%s2 + $0x2c0] sm:$0xff]
      %v2033 = vld [vmem:[%s2 + $0x2c8] sm:$0xff]
      %v2034 = vld [vmem:[%s2 + $0x2f8] sm:$0xff]
      %v2035 = vld [vmem:[%s2 + $0x300] sm:$0xff]
      %v2036 = vld [vmem:[%s2 + $0x308] sm:$0xff]
      %v2037 = vld [vmem:[%s2 + $0x310] sm:$0xff]
      %v2038 = vld [vmem:[%s2 + $0x318] sm:$0xff]
      %v2039 = vld [vmem:[%s2 + $0x348] sm:$0xff]
      %v2040 = vld [vmem:[%s2 + $0x350] sm:$0xff]
      %v2041 = vld [vmem:[%s2 + $0x358] sm:$0xff]
      %v2042 = vld [vmem:[%s2 + $0x360] sm:$0xff]
      %v2043 = vld [vmem:[%s2 + $0x368] sm:$0xff]
      %v2044 = vld [vmem:[%s2 + $0x398] sm:$0xff]
      %v2045 = vld [vmem:[%s2 + $0x3a0] sm:$0xff]
      %v2046 = vld [vmem:[%s2 + $0x3a8] sm:$0xff]
      %v2047 = vld [vmem:[%s2 + $0x3b0] sm:$0xff]
      %v2048 = vld [vmem:[%s2 + $0x3b8] sm:$0xff]
      %v2049 = vld [vmem:[%s2 + $0x3e8] sm:$0xff]
      %v2050 = vld [vmem:[%s2 + $0x3f0] sm:$0xff]
      %v2051 = vld [vmem:[%s2 + $0x3f8] sm:$0xff]
      %v2052 = vld [vmem:[%s2 + $0x400] sm:$0xff]
      %v2053 = vld [vmem:[%s2 + $0x408] sm:$0xff]
      %v2054 = vld [vmem:[%s2 + $0x438] sm:$0xff]
      %v2055 = vld [vmem:[%s2 + $0x440] sm:$0xff]
      %v2056 = vld [vmem:[%s2 + $0x448] sm:$0xff]
      %v2057 = vld [vmem:[%s2 + $0x450] sm:$0xff]
      %v2058 = vld [vmem:[%s2 + $0x458] sm:$0xff]
      %v2059 = vld [vmem:[%s2 + $0x488] sm:$0xff]
      %v2060 = vld [vmem:[%s2 + $0x490] sm:$0xff]
      %v2061 = vld [vmem:[%s2 + $0x498] sm:$0xff]
      %v2062 = vld [vmem:[%s2 + $0x4a0] sm:$0xff]
      %v2063 = vld [vmem:[%s2 + $0x4a8] sm:$0xff]
      %v2064 = vld [vmem:[%s2 + $0x4d8] sm:$0xff]
      %v2065 = vld [vmem:[%s2 + $0x4e0] sm:$0xff]
      %v2066 = vld [vmem:[%s2 + $0x4e8] sm:$0xff]
      %v2067 = vld [vmem:[%s2 + $0x4f0] sm:$0xff]
      %v2068 = vld [vmem:[%s2 + $0x4f8] sm:$0xff]
      %v2069 = vld [vmem:[%s2 + $0x528] sm:$0xff]
      %v2070 = vld [vmem:[%s2 + $0x530] sm:$0xff]
      %v2071 = vld [vmem:[%s2 + $0x538] sm:$0xff]
      %v2072 = vld [vmem:[%s2 + $0x540] sm:$0xff]
      %v2073 = vld [vmem:[%s2 + $0x548] sm:$0xff]
      %v2074 = vld [vmem:[%s2 + $0x578] sm:$0xff]
      %v2075 = vld [vmem:[%s2 + $0x580] sm:$0xff]
      %v2076 = vld [vmem:[%s2 + $0x588] sm:$0xff]
      %v2077 = vld [vmem:[%s2 + $0x590] sm:$0xff]
      %v2078 = vld [vmem:[%s2 + $0x598] sm:$0xff]
      %v2079 = vld [vmem:[%s2 + $0x5c8] sm:$0xff]
      %v2080 = vld [vmem:[%s2 + $0x5d0] sm:$0xff]
      %v2081 = vld [vmem:[%s2 + $0x5d8] sm:$0xff]
      %v2082 = vld [vmem:[%s2 + $0x5e0] sm:$0xff]
      %v2083 = vld [vmem:[%s2 + $0x5e8] sm:$0xff]
      %v2084 = vld [vmem:[%s2 + $0x618] sm:$0xff]
      %v2085 = vld [vmem:[%s2 + $0x620] sm:$0xff]
      %v2086 = vld [vmem:[%s2 + $0x628] sm:$0xff]
      %v2087 = vld [vmem:[%s2 + $0x630] sm:$0xff]
      %v2088 = vld [vmem:[%s2 + $0x638] sm:$0xff]
      %v2089 = vsel %vm1227, %v1295, 0
      %v2091 = vsel %vm1227, %v1297, 0
      %v2093 = vsel %vm1227, %v1299, 0
      %v2095 = vsel %vm1227, %v1301, 0
      %v2097 = vsel %vm1227, %v1303, 0
      %v2099 = vsel %vm1227, %v1305, 0
      %v2101 = vsel %vm1227, %v1307, 0
      %v2103 = vsel %vm1227, %v1309, 0
      %v2105 = vsel %vm1227, %v1311, 0
      %v2107 = vsel %vm1227, %v1313, 0
      %v2109 = vsel %vm1227, %v1315, 0
      %v2111 = vsel %vm1227, %v1317, 0
      %v2113 = vsel %vm1227, %v1319, 0
      %v2115 = vsel %vm1227, %v1321, 0
      %v2117 = vsel %vm1227, %v1323, 0
      %v2119 = vsel %vm1227, %v1325, 0
      %2121 = vmatprep.subr.mxu0 %v2065
      %2122 = vmatpush1.msra.mxu0 %v2064
      %2123 = vmatprep.subr.mxu0 %v2060
      %2124 = vmatpush1.msra.mxu0 %v2059
      %2125 = vmatprep.subr.mxu0 %v2055
      %2126 = vmatpush1.msra.mxu0 %v2054
      %2127 = vmatprep.subr.mxu0 %v2050
      %2128 = vmatpush1.msra.mxu0 %v2049
      %2129 = vmatprep.subr.mxu0 %v2045
      %2130 = vmatpush1.msra.mxu0 %v2044
      %2131 = vmatprep.subr.mxu0 %v2040
      %2132 = vmatpush1.msra.mxu0 %v2039
      %2133 = vmatprep.subr.mxu0 %v2035
      %2134 = vmatpush1.msra.mxu0 %v2034
      %2135 = vmatprep.subr.mxu0 %v2030
      %2136 = vmatpush1.msra.mxu0 %v2029
      %2137 = vmatprep.subr.mxu0 %v2025
      %2138 = vmatpush1.msra.mxu0 %v2024
      %2139 = vmatprep.subr.mxu0 %v2020
      %2140 = vmatpush1.msra.mxu0 %v2019
      %2141 = vmatprep.subr.mxu0 %v2015
      %2142 = vmatpush1.msra.mxu0 %v2014
      %2143 = vmatprep.subr.mxu0 %v2010
      %2144 = vmatpush1.msra.mxu0 %v2009
      %2145 = vmatprep.subr.mxu0 %v2005
      %2146 = vmatpush1.msra.mxu0 %v2004
      %2147 = vmatprep.subr.mxu0 %v2000
      %2148 = vmatpush1.msra.mxu0 %v1999
      %2149 = vmatprep.subr.mxu0 %v1995
      %2150 = vmatpush1.msra.mxu0 %v1994
      %2151 = vmatprep.subr.mxu0 %v1990
      %2152 = vmatpush1.msra.mxu0 %v1989
      %2153 = vmatprep.subr.mxu0 0.0
      %2154 = vmatpush2.msra.mxu0 0.0
      %2155 = vmatprep.subr.mxu0 0.0
      %2156 = vmatpush2.msra.mxu0 0.0
      %2157 = vmatprep.subr.mxu0 0.0
      %2158 = vmatpush2.msra.mxu0 0.0
      %2159 = vmatprep.subr.mxu0 0.0
      %2160 = vmatpush2.msra.mxu0 0.0
      %2161 = vmatprep.subr.mxu0 0.0
      %2162 = vmatpush2.msra.mxu0 0.0
      %2163 = vmatprep.subr.mxu0 0.0
      %2164 = vmatpush2.msra.mxu0 0.0
      %2165 = vmatprep.subr.mxu0 0.0
      %2166 = vmatpush2.msra.mxu0 0.0
      %2167 = vmatprep.subr.mxu0 0.0
      %2168 = vmatpush2.msra.mxu0 0.0
      %2169 = vmatprep.subr.mxu0 0.0
      %2170 = vmatpush2.msra.mxu0 0.0
      %2171 = vmatprep.subr.mxu0 0.0
      %2172 = vmatpush2.msra.mxu0 0.0
      %2173 = vmatprep.subr.mxu0 0.0
      %2174 = vmatpush2.msra.mxu0 0.0
      %2175 = vmatprep.subr.mxu0 0.0
      %2176 = vmatpush2.msra.mxu0 0.0
      %2177 = vmatprep.subr.mxu0 %v2085
      %2178 = vmatpush2.msra.mxu0 %v2084
      %2179 = vmatprep.subr.mxu0 %v2080
      %2180 = vmatpush2.msra.mxu0 %v2079
      %2181 = vmatprep.subr.mxu0 %v2075
      %2182 = vmatpush2.msra.mxu0 %v2074
      %2183 = vmatprep.subr.mxu0 %v2070
      %2184 = vmatpush2.msra.mxu0 %v2069
      %2185 = vmatprep.mubr.f32.mxu0 %v2089
      %2186 = vmatmul.mubr.f32.gmra.mxu0 %v1374
      %v2187 = vpop.f32.mrf.mxu0
      %v2188 = vadd.f32 0.0, %v2187
      %v2189 = vpop.f32.mrf.mxu0
      %v2190 = vadd.f32 0.0, %v2189
      %2191 = vmatprep.mubr.f32.mxu0 %v2091
      %2192 = vmatmul.mubr.f32.gmra.mxu0 %v1375
      %v2193 = vpop.f32.mrf.mxu0
      %v2194 = vadd.f32 0.0, %v2193
      %v2195 = vpop.f32.mrf.mxu0
      %v2196 = vadd.f32 0.0, %v2195
      %2197 = vmatprep.mubr.f32.mxu0 %v2093
      %2198 = vmatmul.mubr.f32.gmra.mxu0 %v1376
      %v2199 = vpop.f32.mrf.mxu0
      %v2200 = vadd.f32 0.0, %v2199
      %v2201 = vpop.f32.mrf.mxu0
      %v2202 = vadd.f32 0.0, %v2201
      %2203 = vmatprep.mubr.f32.mxu0 %v2095
      %2204 = vmatmul.mubr.f32.gmra.mxu0 %v1377
      %v2205 = vpop.f32.mrf.mxu0
      %v2206 = vadd.f32 0.0, %v2205
      %v2207 = vpop.f32.mrf.mxu0
      %v2208 = vadd.f32 0.0, %v2207
      %2209 = vmatprep.mubr.f32.mxu0 %v2097
      %2210 = vmatmul.mubr.f32.gmra.mxu0 %v1378
      %v2211 = vpop.f32.mrf.mxu0
      %v2212 = vadd.f32 0.0, %v2211
      %v2213 = vpop.f32.mrf.mxu0
      %v2214 = vadd.f32 0.0, %v2213
      %2215 = vmatprep.mubr.f32.mxu0 %v2099
      %2216 = vmatmul.mubr.f32.gmra.mxu0 %v1379
      %v2217 = vpop.f32.mrf.mxu0
      %v2218 = vadd.f32 0.0, %v2217
      %v2219 = vpop.f32.mrf.mxu0
      %v2220 = vadd.f32 0.0, %v2219
      %2221 = vmatprep.mubr.f32.mxu0 %v2101
      %2222 = vmatmul.mubr.f32.gmra.mxu0 %v1380
      %v2223 = vpop.f32.mrf.mxu0
      %v2224 = vadd.f32 0.0, %v2223
      %v2225 = vpop.f32.mrf.mxu0
      %v2226 = vadd.f32 0.0, %v2225
      %2227 = vmatprep.mubr.f32.mxu0 %v2103
      %2228 = vmatmul.mubr.f32.gmra.mxu0 %v1381
      %v2229 = vpop.f32.mrf.mxu0
      %v2230 = vadd.f32 0.0, %v2229
      %v2231 = vpop.f32.mrf.mxu0
      %v2232 = vadd.f32 0.0, %v2231
      %2233 = vmatprep.mubr.f32.mxu0 %v2105
      %2234 = vmatmul.mubr.f32.gmra.mxu0 %v1382
      %v2235 = vpop.f32.mrf.mxu0
      %v2236 = vadd.f32 0.0, %v2235
      %v2237 = vpop.f32.mrf.mxu0
      %v2238 = vadd.f32 0.0, %v2237
      %2239 = vmatprep.mubr.f32.mxu0 %v2107
      %2240 = vmatmul.mubr.f32.gmra.mxu0 %v1383
      %v2241 = vpop.f32.mrf.mxu0
      %v2242 = vadd.f32 0.0, %v2241
      %v2243 = vpop.f32.mrf.mxu0
      %v2244 = vadd.f32 0.0, %v2243
      %2245 = vmatprep.mubr.f32.mxu0 %v2109
      %2246 = vmatmul.mubr.f32.gmra.mxu0 %v1384
      %v2247 = vpop.f32.mrf.mxu0
      %v2248 = vadd.f32 0.0, %v2247
      %v2249 = vpop.f32.mrf.mxu0
      %v2250 = vadd.f32 0.0, %v2249
      %2251 = vmatprep.mubr.f32.mxu0 %v2111
      %2252 = vmatmul.mubr.f32.gmra.mxu0 %v1385
      %v2253 = vpop.f32.mrf.mxu0
      %v2254 = vadd.f32 0.0, %v2253
      %v2255 = vpop.f32.mrf.mxu0
      %v2256 = vadd.f32 0.0, %v2255
      %2257 = vmatprep.mubr.f32.mxu0 %v2113
      %2258 = vmatmul.mubr.f32.gmra.mxu0 %v1386
      %v2259 = vpop.f32.mrf.mxu0
      %v2260 = vadd.f32 0.0, %v2259
      %v2261 = vpop.f32.mrf.mxu0
      %v2262 = vadd.f32 0.0, %v2261
      %2263 = vmatprep.mubr.f32.mxu0 %v2115
      %2264 = vmatmul.mubr.f32.gmra.mxu0 %v1387
      %v2265 = vpop.f32.mrf.mxu0
      %v2266 = vadd.f32 0.0, %v2265
      %v2267 = vpop.f32.mrf.mxu0
      %v2268 = vadd.f32 0.0, %v2267
      %2269 = vmatprep.mubr.f32.mxu0 %v2117
      %2270 = vmatmul.mubr.f32.gmra.mxu0 %v1388
      %v2271 = vpop.f32.mrf.mxu0
      %v2272 = vadd.f32 0.0, %v2271
      %v2273 = vpop.f32.mrf.mxu0
      %v2274 = vadd.f32 0.0, %v2273
      %2275 = vmatprep.mubr.f32.mxu0 %v2119
      %2276 = vmatmul.mubr.f32.gmra.mxu0 %v1389
      %v2277 = vpop.f32.mrf.mxu0
      %v2278 = vadd.f32 0.0, %v2277
      %v2279 = vpop.f32.mrf.mxu0
      %v2280 = vadd.f32 0.0, %v2279
      %2281 = vdwg.mxu0
      %2282 = vmatprep.subr.mxu0 %v2067
      %2283 = vmatpush1.msra.mxu0 %v2066
      %2284 = vmatprep.subr.mxu0 %v2062
      %2285 = vmatpush1.msra.mxu0 %v2061
      %2286 = vmatprep.subr.mxu0 %v2057
      %2287 = vmatpush1.msra.mxu0 %v2056
      %2288 = vmatprep.subr.mxu0 %v2052
      %2289 = vmatpush1.msra.mxu0 %v2051
      %2290 = vmatprep.subr.mxu0 %v2047
      %2291 = vmatpush1.msra.mxu0 %v2046
      %2292 = vmatprep.subr.mxu0 %v2042
      %2293 = vmatpush1.msra.mxu0 %v2041
      %2294 = vmatprep.subr.mxu0 %v2037
      %2295 = vmatpush1.msra.mxu0 %v2036
      %2296 = vmatprep.subr.mxu0 %v2032
      %2297 = vmatpush1.msra.mxu0 %v2031
      %2298 = vmatprep.subr.mxu0 %v2027
      %2299 = vmatpush1.msra.mxu0 %v2026
      %2300 = vmatprep.subr.mxu0 %v2022
      %2301 = vmatpush1.msra.mxu0 %v2021
      %2302 = vmatprep.subr.mxu0 %v2017
      %2303 = vmatpush1.msra.mxu0 %v2016
      %2304 = vmatprep.subr.mxu0 %v2012
      %2305 = vmatpush1.msra.mxu0 %v2011
      %2306 = vmatprep.subr.mxu0 %v2007
      %2307 = vmatpush1.msra.mxu0 %v2006
      %2308 = vmatprep.subr.mxu0 %v2002
      %2309 = vmatpush1.msra.mxu0 %v2001
      %2310 = vmatprep.subr.mxu0 %v1997
      %2311 = vmatpush1.msra.mxu0 %v1996
      %2312 = vmatprep.subr.mxu0 %v1992
      %2313 = vmatpush1.msra.mxu0 %v1991
      %2314 = vmatprep.subr.mxu0 0.0
      %2315 = vmatpush2.msra.mxu0 0.0
      %2316 = vmatprep.subr.mxu0 0.0
      %2317 = vmatpush2.msra.mxu0 0.0
      %2318 = vmatprep.subr.mxu0 0.0
      %2319 = vmatpush2.msra.mxu0 0.0
      %2320 = vmatprep.subr.mxu0 0.0
      %2321 = vmatpush2.msra.mxu0 0.0
      %2322 = vmatprep.subr.mxu0 0.0
      %2323 = vmatpush2.msra.mxu0 0.0
      %2324 = vmatprep.subr.mxu0 0.0
      %2325 = vmatpush2.msra.mxu0 0.0
      %2326 = vmatprep.subr.mxu0 0.0
      %2327 = vmatpush2.msra.mxu0 0.0
      %2328 = vmatprep.subr.mxu0 0.0
      %2329 = vmatpush2.msra.mxu0 0.0
      %2330 = vmatprep.subr.mxu0 0.0
      %2331 = vmatpush2.msra.mxu0 0.0
      %2332 = vmatprep.subr.mxu0 0.0
      %2333 = vmatpush2.msra.mxu0 0.0
      %2334 = vmatprep.subr.mxu0 0.0
      %2335 = vmatpush2.msra.mxu0 0.0
      %2336 = vmatprep.subr.mxu0 0.0
      %2337 = vmatpush2.msra.mxu0 0.0
      %2338 = vmatprep.subr.mxu0 %v2087
      %2339 = vmatpush2.msra.mxu0 %v2086
      %2340 = vmatprep.subr.mxu0 %v2082
      %2341 = vmatpush2.msra.mxu0 %v2081
      %2342 = vmatprep.subr.mxu0 %v2077
      %2343 = vmatpush2.msra.mxu0 %v2076
      %2344 = vmatprep.subr.mxu0 %v2072
      %2345 = vmatpush2.msra.mxu0 %v2071
      %2346 = vmatprep.mubr.f32.mxu0 %v2089
      %2347 = vmatmul.mubr.f32.gmra.mxu0 %v1374
      %v2348 = vpop.f32.mrf.mxu0
      %v2349 = vadd.f32 0.0, %v2348
      %v2350 = vpop.f32.mrf.mxu0
      %v2351 = vadd.f32 0.0, %v2350
      %2352 = vmatprep.mubr.f32.mxu0 %v2091
      %2353 = vmatmul.mubr.f32.gmra.mxu0 %v1375
      %v2354 = vpop.f32.mrf.mxu0
      %v2355 = vadd.f32 0.0, %v2354
      %v2356 = vpop.f32.mrf.mxu0
      %v2357 = vadd.f32 0.0, %v2356
      %2358 = vmatprep.mubr.f32.mxu0 %v2093
      %2359 = vmatmul.mubr.f32.gmra.mxu0 %v1376
      %v2360 = vpop.f32.mrf.mxu0
      %v2361 = vadd.f32 0.0, %v2360
      %v2362 = vpop.f32.mrf.mxu0
      %v2363 = vadd.f32 0.0, %v2362
      %2364 = vmatprep.mubr.f32.mxu0 %v2095
      %2365 = vmatmul.mubr.f32.gmra.mxu0 %v1377
      %v2366 = vpop.f32.mrf.mxu0
      %v2367 = vadd.f32 0.0, %v2366
      %v2368 = vpop.f32.mrf.mxu0
      %v2369 = vadd.f32 0.0, %v2368
      %2370 = vmatprep.mubr.f32.mxu0 %v2097
      %2371 = vmatmul.mubr.f32.gmra.mxu0 %v1378
      %v2372 = vpop.f32.mrf.mxu0
      %v2373 = vadd.f32 0.0, %v2372
      %v2374 = vpop.f32.mrf.mxu0
      %v2375 = vadd.f32 0.0, %v2374
      %2376 = vmatprep.mubr.f32.mxu0 %v2099
      %2377 = vmatmul.mubr.f32.gmra.mxu0 %v1379
      %v2378 = vpop.f32.mrf.mxu0
      %v2379 = vadd.f32 0.0, %v2378
      %v2380 = vpop.f32.mrf.mxu0
      %v2381 = vadd.f32 0.0, %v2380
      %2382 = vmatprep.mubr.f32.mxu0 %v2101
      %2383 = vmatmul.mubr.f32.gmra.mxu0 %v1380
      %v2384 = vpop.f32.mrf.mxu0
      %v2385 = vadd.f32 0.0, %v2384
      %v2386 = vpop.f32.mrf.mxu0
      %v2387 = vadd.f32 0.0, %v2386
      %2388 = vmatprep.mubr.f32.mxu0 %v2103
      %2389 = vmatmul.mubr.f32.gmra.mxu0 %v1381
      %v2390 = vpop.f32.mrf.mxu0
      %v2391 = vadd.f32 0.0, %v2390
      %v2392 = vpop.f32.mrf.mxu0
      %v2393 = vadd.f32 0.0, %v2392
      %2394 = vmatprep.mubr.f32.mxu0 %v2105
      %2395 = vmatmul.mubr.f32.gmra.mxu0 %v1382
      %v2396 = vpop.f32.mrf.mxu0
      %v2397 = vadd.f32 0.0, %v2396
      %v2398 = vpop.f32.mrf.mxu0
      %v2399 = vadd.f32 0.0, %v2398
      %2400 = vmatprep.mubr.f32.mxu0 %v2107
      %2401 = vmatmul.mubr.f32.gmra.mxu0 %v1383
      %v2402 = vpop.f32.mrf.mxu0
      %v2403 = vadd.f32 0.0, %v2402
      %v2404 = vpop.f32.mrf.mxu0
      %v2405 = vadd.f32 0.0, %v2404
      %2406 = vmatprep.mubr.f32.mxu0 %v2109
      %2407 = vmatmul.mubr.f32.gmra.mxu0 %v1384
      %v2408 = vpop.f32.mrf.mxu0
      %v2409 = vadd.f32 0.0, %v2408
      %v2410 = vpop.f32.mrf.mxu0
      %v2411 = vadd.f32 0.0, %v2410
      %2412 = vmatprep.mubr.f32.mxu0 %v2111
      %2413 = vmatmul.mubr.f32.gmra.mxu0 %v1385
      %v2414 = vpop.f32.mrf.mxu0
      %v2415 = vadd.f32 0.0, %v2414
      %v2416 = vpop.f32.mrf.mxu0
      %v2417 = vadd.f32 0.0, %v2416
      %2418 = vmatprep.mubr.f32.mxu0 %v2113
      %2419 = vmatmul.mubr.f32.gmra.mxu0 %v1386
      %v2420 = vpop.f32.mrf.mxu0
      %v2421 = vadd.f32 0.0, %v2420
      %v2422 = vpop.f32.mrf.mxu0
      %v2423 = vadd.f32 0.0, %v2422
      %2424 = vmatprep.mubr.f32.mxu0 %v2115
      %2425 = vmatmul.mubr.f32.gmra.mxu0 %v1387
      %v2426 = vpop.f32.mrf.mxu0
      %v2427 = vadd.f32 0.0, %v2426
      %v2428 = vpop.f32.mrf.mxu0
      %v2429 = vadd.f32 0.0, %v2428
      %2430 = vmatprep.mubr.f32.mxu0 %v2117
      %2431 = vmatmul.mubr.f32.gmra.mxu0 %v1388
      %v2432 = vpop.f32.mrf.mxu0
      %v2433 = vadd.f32 0.0, %v2432
      %v2434 = vpop.f32.mrf.mxu0
      %v2435 = vadd.f32 0.0, %v2434
      %2436 = vmatprep.mubr.f32.mxu0 %v2119
      %2437 = vmatmul.mubr.f32.gmra.mxu0 %v1389
      %v2438 = vpop.f32.mrf.mxu0
      %v2439 = vadd.f32 0.0, %v2438
      %v2440 = vpop.f32.mrf.mxu0
      %v2441 = vadd.f32 0.0, %v2440
      %2442 = vdwg.mxu0
      %2443 = vmatprep.subr.mxu0 0.0
      %2444 = vmatpush1.msra.mxu0 %v2068
      %2445 = vmatprep.subr.mxu0 0.0
      %2446 = vmatpush1.msra.mxu0 %v2063
      %2447 = vmatprep.subr.mxu0 0.0
      %2448 = vmatpush1.msra.mxu0 %v2058
      %2449 = vmatprep.subr.mxu0 0.0
      %2450 = vmatpush1.msra.mxu0 %v2053
      %2451 = vmatprep.subr.mxu0 0.0
      %2452 = vmatpush1.msra.mxu0 %v2048
      %2453 = vmatprep.subr.mxu0 0.0
      %2454 = vmatpush1.msra.mxu0 %v2043
      %2455 = vmatprep.subr.mxu0 0.0
      %2456 = vmatpush1.msra.mxu0 %v2038
      %2457 = vmatprep.subr.mxu0 0.0
      %2458 = vmatpush1.msra.mxu0 %v2033
      %2459 = vmatprep.subr.mxu0 0.0
      %2460 = vmatpush1.msra.mxu0 %v2028
      %2461 = vmatprep.subr.mxu0 0.0
      %2462 = vmatpush1.msra.mxu0 %v2023
      %2463 = vmatprep.subr.mxu0 0.0
      %2464 = vmatpush1.msra.mxu0 %v2018
      %2465 = vmatprep.subr.mxu0 0.0
      %2466 = vmatpush1.msra.mxu0 %v2013
      %2467 = vmatprep.subr.mxu0 0.0
      %2468 = vmatpush1.msra.mxu0 %v2008
      %2469 = vmatprep.subr.mxu0 0.0
      %2470 = vmatpush1.msra.mxu0 %v2003
      %2471 = vmatprep.subr.mxu0 0.0
      %2472 = vmatpush1.msra.mxu0 %v1998
      %2473 = vmatprep.subr.mxu0 0.0
      %2474 = vmatpush1.msra.mxu0 %v1993
      %2475 = vmatprep.subr.mxu0 0.0
      %2476 = vmatpush2.msra.mxu0 0.0
      %2477 = vmatprep.subr.mxu0 0.0
      %2478 = vmatpush2.msra.mxu0 0.0
      %2479 = vmatprep.subr.mxu0 0.0
      %2480 = vmatpush2.msra.mxu0 0.0
      %2481 = vmatprep.subr.mxu0 0.0
      %2482 = vmatpush2.msra.mxu0 0.0
      %2483 = vmatprep.subr.mxu0 0.0
      %2484 = vmatpush2.msra.mxu0 0.0
      %2485 = vmatprep.subr.mxu0 0.0
      %2486 = vmatpush2.msra.mxu0 0.0
      %2487 = vmatprep.subr.mxu0 0.0
      %2488 = vmatpush2.msra.mxu0 0.0
      %2489 = vmatprep.subr.mxu0 0.0
      %2490 = vmatpush2.msra.mxu0 0.0
      %2491 = vmatprep.subr.mxu0 0.0
      %2492 = vmatpush2.msra.mxu0 0.0
      %2493 = vmatprep.subr.mxu0 0.0
      %2494 = vmatpush2.msra.mxu0 0.0
      %2495 = vmatprep.subr.mxu0 0.0
      %2496 = vmatpush2.msra.mxu0 0.0
      %2497 = vmatprep.subr.mxu0 0.0
      %2498 = vmatpush2.msra.mxu0 0.0
      %2499 = vmatprep.subr.mxu0 0.0
      %2500 = vmatpush2.msra.mxu0 %v2088
      %2501 = vmatprep.subr.mxu0 0.0
      %2502 = vmatpush2.msra.mxu0 %v2083
      %2503 = vmatprep.subr.mxu0 0.0
      %2504 = vmatpush2.msra.mxu0 %v2078
      %2505 = vmatprep.subr.mxu0 0.0
      %2506 = vmatpush2.msra.mxu0 %v2073
      %2507 = vmatprep.mubr.f32.mxu0 %v2089
      %2508 = vmatmul.mubr.f32.gmra.mxu0 %v1374
      %v2509 = vpop.f32.mrf.mxu0
      %v2510 = vadd.f32 0.0, %v2509
      %v2511 = vpop.f32.mrf.mxu0
      %2512 = vmatprep.mubr.f32.mxu0 %v2091
      %2513 = vmatmul.mubr.f32.gmra.mxu0 %v1375
      %v2514 = vpop.f32.mrf.mxu0
      %v2515 = vadd.f32 0.0, %v2514
      %v2516 = vpop.f32.mrf.mxu0
      %2517 = vmatprep.mubr.f32.mxu0 %v2093
      %2518 = vmatmul.mubr.f32.gmra.mxu0 %v1376
      %v2519 = vpop.f32.mrf.mxu0
      %v2520 = vadd.f32 0.0, %v2519
      %v2521 = vpop.f32.mrf.mxu0
      %2522 = vmatprep.mubr.f32.mxu0 %v2095
      %2523 = vmatmul.mubr.f32.gmra.mxu0 %v1377
      %v2524 = vpop.f32.mrf.mxu0
      %v2525 = vadd.f32 0.0, %v2524
      %v2526 = vpop.f32.mrf.mxu0
      %2527 = vmatprep.mubr.f32.mxu0 %v2097
      %2528 = vmatmul.mubr.f32.gmra.mxu0 %v1378
      %v2529 = vpop.f32.mrf.mxu0
      %v2530 = vadd.f32 0.0, %v2529
      %v2531 = vpop.f32.mrf.mxu0
      %2532 = vmatprep.mubr.f32.mxu0 %v2099
      %2533 = vmatmul.mubr.f32.gmra.mxu0 %v1379
      %v2534 = vpop.f32.mrf.mxu0
      %v2535 = vadd.f32 0.0, %v2534
      %v2536 = vpop.f32.mrf.mxu0
      %2537 = vmatprep.mubr.f32.mxu0 %v2101
      %2538 = vmatmul.mubr.f32.gmra.mxu0 %v1380
      %v2539 = vpop.f32.mrf.mxu0
      %v2540 = vadd.f32 0.0, %v2539
      %v2541 = vpop.f32.mrf.mxu0
      %2542 = vmatprep.mubr.f32.mxu0 %v2103
      %2543 = vmatmul.mubr.f32.gmra.mxu0 %v1381
      %v2544 = vpop.f32.mrf.mxu0
      %v2545 = vadd.f32 0.0, %v2544
      %v2546 = vpop.f32.mrf.mxu0
      %2547 = vmatprep.mubr.f32.mxu0 %v2105
      %2548 = vmatmul.mubr.f32.gmra.mxu0 %v1382
      %v2549 = vpop.f32.mrf.mxu0
      %v2550 = vadd.f32 0.0, %v2549
      %v2551 = vpop.f32.mrf.mxu0
      %2552 = vmatprep.mubr.f32.mxu0 %v2107
      %2553 = vmatmul.mubr.f32.gmra.mxu0 %v1383
      %v2554 = vpop.f32.mrf.mxu0
      %v2555 = vadd.f32 0.0, %v2554
      %v2556 = vpop.f32.mrf.mxu0
      %2557 = vmatprep.mubr.f32.mxu0 %v2109
      %2558 = vmatmul.mubr.f32.gmra.mxu0 %v1384
      %v2559 = vpop.f32.mrf.mxu0
      %v2560 = vadd.f32 0.0, %v2559
      %v2561 = vpop.f32.mrf.mxu0
      %2562 = vmatprep.mubr.f32.mxu0 %v2111
      %2563 = vmatmul.mubr.f32.gmra.mxu0 %v1385
      %v2564 = vpop.f32.mrf.mxu0
      %v2565 = vadd.f32 0.0, %v2564
      %v2566 = vpop.f32.mrf.mxu0
      %2567 = vmatprep.mubr.f32.mxu0 %v2113
      %2568 = vmatmul.mubr.f32.gmra.mxu0 %v1386
      %v2569 = vpop.f32.mrf.mxu0
      %v2570 = vadd.f32 0.0, %v2569
      %v2571 = vpop.f32.mrf.mxu0
      %2572 = vmatprep.mubr.f32.mxu0 %v2115
      %2573 = vmatmul.mubr.f32.gmra.mxu0 %v1387
      %v2574 = vpop.f32.mrf.mxu0
      %v2575 = vadd.f32 0.0, %v2574
      %v2576 = vpop.f32.mrf.mxu0
      %2577 = vmatprep.mubr.f32.mxu0 %v2117
      %2578 = vmatmul.mubr.f32.gmra.mxu0 %v1388
      %v2579 = vpop.f32.mrf.mxu0
      %v2580 = vadd.f32 0.0, %v2579
      %v2581 = vpop.f32.mrf.mxu0
      %2582 = vmatprep.mubr.f32.mxu0 %v2119
      %2583 = vmatmul.mubr.f32.gmra.mxu0 %v1389
      %v2584 = vpop.f32.mrf.mxu0
      %v2585 = vadd.f32 0.0, %v2584
      %v2586 = vpop.f32.mrf.mxu0
      %2587 = vdwg.mxu0
      %v2588 = vmul.f32 %v1589, %v2188
      %v2589 = vmul.f32 %v1591, %v2190
      %v2590 = vmul.f32 %v1750, %v2349
      %v2591 = vmul.f32 %v1752, %v2351
      %v2592 = vmul.f32 %v1911, %v2510
      %v2593 = vmul.f32 %v1595, %v2194
      %v2594 = vmul.f32 %v1597, %v2196
      %v2595 = vmul.f32 %v1756, %v2355
      %v2596 = vmul.f32 %v1758, %v2357
      %v2597 = vmul.f32 %v1916, %v2515
      %v2598 = vmul.f32 %v1601, %v2200
      %v2599 = vmul.f32 %v1603, %v2202
      %v2600 = vmul.f32 %v1762, %v2361
      %v2601 = vmul.f32 %v1764, %v2363
      %v2602 = vmul.f32 %v1921, %v2520
      %v2603 = vmul.f32 %v1607, %v2206
      %v2604 = vmul.f32 %v1609, %v2208
      %v2605 = vmul.f32 %v1768, %v2367
      %v2606 = vmul.f32 %v1770, %v2369
      %v2607 = vmul.f32 %v1926, %v2525
      %v2608 = vmul.f32 %v1613, %v2212
      %v2609 = vmul.f32 %v1615, %v2214
      %v2610 = vmul.f32 %v1774, %v2373
      %v2611 = vmul.f32 %v1776, %v2375
      %v2612 = vmul.f32 %v1931, %v2530
      %v2613 = vmul.f32 %v1619, %v2218
      %v2614 = vmul.f32 %v1621, %v2220
      %v2615 = vmul.f32 %v1780, %v2379
      %v2616 = vmul.f32 %v1782, %v2381
      %v2617 = vmul.f32 %v1936, %v2535
      %v2618 = vmul.f32 %v1625, %v2224
      %v2619 = vmul.f32 %v1627, %v2226
      %v2620 = vmul.f32 %v1786, %v2385
      %v2621 = vmul.f32 %v1788, %v2387
      %v2622 = vmul.f32 %v1941, %v2540
      %v2623 = vmul.f32 %v1631, %v2230
      %v2624 = vmul.f32 %v1633, %v2232
      %v2625 = vmul.f32 %v1792, %v2391
      %v2626 = vmul.f32 %v1794, %v2393
      %v2627 = vmul.f32 %v1946, %v2545
      %v2628 = vmul.f32 %v1637, %v2236
      %v2629 = vmul.f32 %v1639, %v2238
      %v2630 = vmul.f32 %v1798, %v2397
      %v2631 = vmul.f32 %v1800, %v2399
      %v2632 = vmul.f32 %v1951, %v2550
      %v2633 = vmul.f32 %v1643, %v2242
      %v2634 = vmul.f32 %v1645, %v2244
      %v2635 = vmul.f32 %v1804, %v2403
      %v2636 = vmul.f32 %v1806, %v2405
      %v2637 = vmul.f32 %v1956, %v2555
      %v2638 = vmul.f32 %v1649, %v2248
      %v2639 = vmul.f32 %v1651, %v2250
      %v2640 = vmul.f32 %v1810, %v2409
      %v2641 = vmul.f32 %v1812, %v2411
      %v2642 = vmul.f32 %v1961, %v2560
      %v2643 = vmul.f32 %v1655, %v2254
      %v2644 = vmul.f32 %v1657, %v2256
      %v2645 = vmul.f32 %v1816, %v2415
      %v2646 = vmul.f32 %v1818, %v2417
      %v2647 = vmul.f32 %v1966, %v2565
      %v2648 = vmul.f32 %v1661, %v2260
      %v2649 = vmul.f32 %v1663, %v2262
      %v2650 = vmul.f32 %v1822, %v2421
      %v2651 = vmul.f32 %v1824, %v2423
      %v2652 = vmul.f32 %v1971, %v2570
      %v2653 = vmul.f32 %v1667, %v2266
      %v2654 = vmul.f32 %v1669, %v2268
      %v2655 = vmul.f32 %v1828, %v2427
      %v2656 = vmul.f32 %v1830, %v2429
      %v2657 = vmul.f32 %v1976, %v2575
      %v2658 = vmul.f32 %v1673, %v2272
      %v2659 = vmul.f32 %v1675, %v2274
      %v2660 = vmul.f32 %v1834, %v2433
      %v2661 = vmul.f32 %v1836, %v2435
      %v2662 = vmul.f32 %v1981, %v2580
      %v2663 = vmul.f32 %v1679, %v2278
      %v2664 = vmul.f32 %v1681, %v2280
      %v2665 = vmul.f32 %v1840, %v2439
      %v2666 = vmul.f32 %v1842, %v2441
      %v2667 = vmul.f32 %v1986, %v2585
      %v2668 = vadd.f32 %v2588, %v2589
      %v2669 = vadd.f32 %v2593, %v2594
      %v2670 = vadd.f32 %v2598, %v2599
      %v2671 = vadd.f32 %v2603, %v2604
      %v2672 = vadd.f32 %v2608, %v2609
      %v2673 = vadd.f32 %v2613, %v2614
      %v2674 = vadd.f32 %v2618, %v2619
      %v2675 = vadd.f32 %v2623, %v2624
      %v2676 = vadd.f32 %v2628, %v2629
      %v2677 = vadd.f32 %v2633, %v2634
      %v2678 = vadd.f32 %v2638, %v2639
      %v2679 = vadd.f32 %v2643, %v2644
      %v2680 = vadd.f32 %v2648, %v2649
      %v2681 = vadd.f32 %v2653, %v2654
      %v2682 = vadd.f32 %v2658, %v2659
      %v2683 = vadd.f32 %v2663, %v2664
      %v2684 = vadd.f32 %v2668, %v2590
      %v2685 = vadd.f32 %v2669, %v2595
      %v2686 = vadd.f32 %v2670, %v2600
      %v2687 = vadd.f32 %v2671, %v2605
      %v2688 = vadd.f32 %v2672, %v2610
      %v2689 = vadd.f32 %v2673, %v2615
      %v2690 = vadd.f32 %v2674, %v2620
      %v2691 = vadd.f32 %v2675, %v2625
      %v2692 = vadd.f32 %v2676, %v2630
      %v2693 = vadd.f32 %v2677, %v2635
      %v2694 = vadd.f32 %v2678, %v2640
      %v2695 = vadd.f32 %v2679, %v2645
      %v2696 = vadd.f32 %v2680, %v2650
      %v2697 = vadd.f32 %v2681, %v2655
      %v2698 = vadd.f32 %v2682, %v2660
      %v2699 = vadd.f32 %v2683, %v2665
      %v2700 = vadd.f32 %v2684, %v2591
      %v2701 = vadd.f32 %v2685, %v2596
      %v2702 = vadd.f32 %v2686, %v2601
      %v2703 = vadd.f32 %v2687, %v2606
      %v2704 = vadd.f32 %v2688, %v2611
      %v2705 = vadd.f32 %v2689, %v2616
      %v2706 = vadd.f32 %v2690, %v2621
      %v2707 = vadd.f32 %v2691, %v2626
      %v2708 = vadd.f32 %v2692, %v2631
      %v2709 = vadd.f32 %v2693, %v2636
      %v2710 = vadd.f32 %v2694, %v2641
      %v2711 = vadd.f32 %v2695, %v2646
      %v2712 = vadd.f32 %v2696, %v2651
      %v2713 = vadd.f32 %v2697, %v2656
      %v2714 = vadd.f32 %v2698, %v2661
      %v2715 = vadd.f32 %v2699, %v2666
      %v2716 = vadd.f32 %v2700, %v2592
      %v2717 = vadd.f32 %v2701, %v2597
      %v2718 = vadd.f32 %v2702, %v2602
      %v2719 = vadd.f32 %v2703, %v2607
      %v2720 = vadd.f32 %v2704, %v2612
      %v2721 = vadd.f32 %v2705, %v2617
      %v2722 = vadd.f32 %v2706, %v2622
      %v2723 = vadd.f32 %v2707, %v2627
      %v2724 = vadd.f32 %v2708, %v2632
      %v2725 = vadd.f32 %v2709, %v2637
      %v2726 = vadd.f32 %v2710, %v2642
      %v2727 = vadd.f32 %v2711, %v2647
      %v2728 = vadd.f32 %v2712, %v2652
      %v2729 = vadd.f32 %v2713, %v2657
      %v2730 = vadd.f32 %v2714, %v2662
      %v2731 = vadd.f32 %v2715, %v2667
      %v2732 = vld [vmem:[%s3] sm:$0xff]
      %v2733 = vld [vmem:[%s3 + $0x8] sm:$0xff]
      %v2734 = vld [vmem:[%s3 + $0x10] sm:$0xff]
      %v2735 = vld [vmem:[%s3 + $0x18] sm:$0xff]
      %v2736 = vld [vmem:[%s3 + $0x20] sm:$0xff]
      %v2737 = vld [vmem:[%s3 + $0x28] sm:$0xff]
      %v2738 = vld [vmem:[%s3 + $0x30] sm:$0xff]
      %v2739 = vld [vmem:[%s3 + $0x38] sm:$0xff]
      %v2740 = vld [vmem:[%s3 + $0x40] sm:$0xff]
      %v2741 = vld [vmem:[%s3 + $0x48] sm:$0xff]
      %v2742 = vld [vmem:[%s3 + $0x50] sm:$0xff]
      %v2743 = vld [vmem:[%s3 + $0x58] sm:$0xff]
      %v2744 = vld [vmem:[%s3 + $0x60] sm:$0xff]
      %v2745 = vld [vmem:[%s3 + $0x68] sm:$0xff]
      %v2746 = vld [vmem:[%s3 + $0x70] sm:$0xff]
      %v2747 = vld [vmem:[%s3 + $0x78] sm:$0xff]
      %v2748 = vld [vmem:[%s3 + $0x80] sm:$0xff]
      %v2749 = vld [vmem:[%s3 + $0x88] sm:$0xff]
      %v2750 = vld [vmem:[%s3 + $0x90] sm:$0xff]
      %v2751 = vld [vmem:[%s3 + $0x98] sm:$0xff]
      %2768 = vrot.lane.b32.xlu0 %v955, 96
      %v2769 = vpop.permute.xlu0 %2768
      %2770 = vrot.lane.b32.xlu0 %v956, 96
      %v2771 = vpop.permute.xlu0 %2770
      %2772 = vrot.lane.b32.xlu0 %v957, 96
      %v2773 = vpop.permute.xlu0 %2772
      %2774 = vrot.lane.b32.xlu0 %v958, 96
      %v2775 = vpop.permute.xlu0 %2774
      %2776 = vrot.lane.b32.xlu0 %v959, 96
      %v2777 = vpop.permute.xlu0 %2776
      %2778 = vrot.lane.b32.xlu0 %v960, 96
      %v2779 = vpop.permute.xlu0 %2778
      %2780 = vrot.lane.b32.xlu0 %v961, 96
      %v2781 = vpop.permute.xlu0 %2780
      %2782 = vrot.lane.b32.xlu0 %v962, 96
      %v2783 = vpop.permute.xlu0 %2782
      %2784 = vrot.lane.b32.xlu0 %v963, 96
      %v2785 = vpop.permute.xlu0 %2784
      %2786 = vrot.lane.b32.xlu0 %v964, 96
      %v2787 = vpop.permute.xlu0 %2786
      %2788 = vrot.lane.b32.xlu0 %v965, 96
      %v2789 = vpop.permute.xlu0 %2788
      %2790 = vrot.lane.b32.xlu0 %v966, 96
      %v2791 = vpop.permute.xlu0 %2790
      %2792 = vrot.lane.b32.xlu0 %v967, 96
      %v2793 = vpop.permute.xlu0 %2792
      %2794 = vrot.lane.b32.xlu0 %v968, 96
      %v2795 = vpop.permute.xlu0 %2794
      %2796 = vrot.lane.b32.xlu0 %v969, 96
      %v2797 = vpop.permute.xlu0 %2796
      %2798 = vrot.lane.b32.xlu0 %v970, 96
      %v2799 = vpop.permute.xlu0 %2798
      %v2800 = vsel %vm1227, %v2769, 0
      %v2802 = vsel %vm1227, %v2771, 0
      %v2804 = vsel %vm1227, %v2773, 0
      %v2806 = vsel %vm1227, %v2775, 0
      %v2808 = vsel %vm1227, %v2777, 0
      %v2810 = vsel %vm1227, %v2779, 0
      %v2812 = vsel %vm1227, %v2781, 0
      %v2814 = vsel %vm1227, %v2783, 0
      %v2816 = vsel %vm1227, %v2785, 0
      %v2818 = vsel %vm1227, %v2787, 0
      %v2820 = vsel %vm1227, %v2789, 0
      %v2822 = vsel %vm1227, %v2791, 0
      %v2824 = vsel %vm1227, %v2793, 0
      %v2826 = vsel %vm1227, %v2795, 0
      %v2828 = vsel %vm1227, %v2797, 0
      %v2830 = vsel %vm1227, %v2799, 0
      %2832 = vmatprep.subr.mxu0 0.0
      %2833 = vmatpush1.msra.mxu0 0.0
      %2834 = vmatprep.subr.mxu0 0.0
      %2835 = vmatpush1.msra.mxu0 0.0
      %2836 = vmatprep.subr.mxu0 0.0
      %2837 = vmatpush1.msra.mxu0 0.0
      %2838 = vmatprep.subr.mxu0 0.0
      %2839 = vmatpush1.msra.mxu0 0.0
      %2840 = vmatprep.subr.mxu0 0.0
      %2841 = vmatpush1.msra.mxu0 0.0
      %2842 = vmatprep.subr.mxu0 0.0
      %2843 = vmatpush1.msra.mxu0 0.0
      %2844 = vmatprep.subr.mxu0 0.0
      %2845 = vmatpush1.msra.mxu0 0.0
      %2846 = vmatprep.subr.mxu0 0.0
      %2847 = vmatpush1.msra.mxu0 0.0
      %2848 = vmatprep.subr.mxu0 0.0
      %2849 = vmatpush1.msra.mxu0 0.0
      %2850 = vmatprep.subr.mxu0 0.0
      %2851 = vmatpush1.msra.mxu0 0.0
      %2852 = vmatprep.subr.mxu0 0.0
      %2853 = vmatpush1.msra.mxu0 0.0
      %2854 = vmatprep.subr.mxu0 0.0
      %2855 = vmatpush1.msra.mxu0 0.0
      %2856 = vmatprep.subr.mxu0 0.0
      %2857 = vmatpush1.msra.mxu0 %v2735
      %2858 = vmatprep.subr.mxu0 0.0
      %2859 = vmatpush1.msra.mxu0 %v2734
      %2860 = vmatprep.subr.mxu0 0.0
      %2861 = vmatpush1.msra.mxu0 %v2733
      %2862 = vmatprep.subr.mxu0 0.0
      %2863 = vmatpush1.msra.mxu0 %v2732
      %2864 = vmatprep.subr.mxu0 0.0
      %2865 = vmatpush2.msra.mxu0 0.0
      %2866 = vmatprep.subr.mxu0 0.0
      %2867 = vmatpush2.msra.mxu0 0.0
      %2868 = vmatprep.subr.mxu0 0.0
      %2869 = vmatpush2.msra.mxu0 0.0
      %2870 = vmatprep.subr.mxu0 0.0
      %2871 = vmatpush2.msra.mxu0 0.0
      %2872 = vmatprep.subr.mxu0 0.0
      %2873 = vmatpush2.msra.mxu0 0.0
      %2874 = vmatprep.subr.mxu0 0.0
      %2875 = vmatpush2.msra.mxu0 0.0
      %2876 = vmatprep.subr.mxu0 0.0
      %2877 = vmatpush2.msra.mxu0 0.0
      %2878 = vmatprep.subr.mxu0 0.0
      %2879 = vmatpush2.msra.mxu0 0.0
      %2880 = vmatprep.subr.mxu0 0.0
      %2881 = vmatpush2.msra.mxu0 0.0
      %2882 = vmatprep.subr.mxu0 0.0
      %2883 = vmatpush2.msra.mxu0 0.0
      %2884 = vmatprep.subr.mxu0 0.0
      %2885 = vmatpush2.msra.mxu0 0.0
      %2886 = vmatprep.subr.mxu0 0.0
      %2887 = vmatpush2.msra.mxu0 0.0
      %2888 = vmatprep.subr.mxu0 0.0
      %2889 = vmatpush2.msra.mxu0 0.0
      %2890 = vmatprep.subr.mxu0 0.0
      %2891 = vmatpush2.msra.mxu0 0.0
      %2892 = vmatprep.subr.mxu0 0.0
      %2893 = vmatpush2.msra.mxu0 0.0
      %2894 = vmatprep.subr.mxu0 0.0
      %2895 = vmatpush2.msra.mxu0 0.0
      %2896 = vmatprep.mubr.f32.mxu0 0.0
      %2897 = vmatmul.mubr.f32.gmra.mxu0 %v2800
      %v2898 = vpop.f32.mrf.mxu0
      %v2899 = vadd.f32 0.0, %v2898
      %v2900 = vpop.f32.mrf.mxu0
      %2901 = vmatprep.mubr.f32.mxu0 0.0
      %2902 = vmatmul.mubr.f32.gmra.mxu0 %v2802
      %v2903 = vpop.f32.mrf.mxu0
      %v2904 = vadd.f32 0.0, %v2903
      %v2905 = vpop.f32.mrf.mxu0
      %2906 = vmatprep.mubr.f32.mxu0 0.0
      %2907 = vmatmul.mubr.f32.gmra.mxu0 %v2804
      %v2908 = vpop.f32.mrf.mxu0
      %v2909 = vadd.f32 0.0, %v2908
      %v2910 = vpop.f32.mrf.mxu0
      %2911 = vmatprep.mubr.f32.mxu0 0.0
      %2912 = vmatmul.mubr.f32.gmra.mxu0 %v2806
      %v2913 = vpop.f32.mrf.mxu0
      %v2914 = vadd.f32 0.0, %v2913
      %v2915 = vpop.f32.mrf.mxu0
      %2916 = vmatprep.mubr.f32.mxu0 0.0
      %2917 = vmatmul.mubr.f32.gmra.mxu0 %v2808
      %v2918 = vpop.f32.mrf.mxu0
      %v2919 = vadd.f32 0.0, %v2918
      %v2920 = vpop.f32.mrf.mxu0
      %2921 = vmatprep.mubr.f32.mxu0 0.0
      %2922 = vmatmul.mubr.f32.gmra.mxu0 %v2810
      %v2923 = vpop.f32.mrf.mxu0
      %v2924 = vadd.f32 0.0, %v2923
      %v2925 = vpop.f32.mrf.mxu0
      %2926 = vmatprep.mubr.f32.mxu0 0.0
      %2927 = vmatmul.mubr.f32.gmra.mxu0 %v2812
      %v2928 = vpop.f32.mrf.mxu0
      %v2929 = vadd.f32 0.0, %v2928
      %v2930 = vpop.f32.mrf.mxu0
      %2931 = vmatprep.mubr.f32.mxu0 0.0
      %2932 = vmatmul.mubr.f32.gmra.mxu0 %v2814
      %v2933 = vpop.f32.mrf.mxu0
      %v2934 = vadd.f32 0.0, %v2933
      %v2935 = vpop.f32.mrf.mxu0
      %2936 = vmatprep.mubr.f32.mxu0 0.0
      %2937 = vmatmul.mubr.f32.gmra.mxu0 %v2816
      %v2938 = vpop.f32.mrf.mxu0
      %v2939 = vadd.f32 0.0, %v2938
      %v2940 = vpop.f32.mrf.mxu0
      %2941 = vmatprep.mubr.f32.mxu0 0.0
      %2942 = vmatmul.mubr.f32.gmra.mxu0 %v2818
      %v2943 = vpop.f32.mrf.mxu0
      %v2944 = vadd.f32 0.0, %v2943
      %v2945 = vpop.f32.mrf.mxu0
      %2946 = vmatprep.mubr.f32.mxu0 0.0
      %2947 = vmatmul.mubr.f32.gmra.mxu0 %v2820
      %v2948 = vpop.f32.mrf.mxu0
      %v2949 = vadd.f32 0.0, %v2948
      %v2950 = vpop.f32.mrf.mxu0
      %2951 = vmatprep.mubr.f32.mxu0 0.0
      %2952 = vmatmul.mubr.f32.gmra.mxu0 %v2822
      %v2953 = vpop.f32.mrf.mxu0
      %v2954 = vadd.f32 0.0, %v2953
      %v2955 = vpop.f32.mrf.mxu0
      %2956 = vmatprep.mubr.f32.mxu0 0.0
      %2957 = vmatmul.mubr.f32.gmra.mxu0 %v2824
      %v2958 = vpop.f32.mrf.mxu0
      %v2959 = vadd.f32 0.0, %v2958
      %v2960 = vpop.f32.mrf.mxu0
      %2961 = vmatprep.mubr.f32.mxu0 0.0
      %2962 = vmatmul.mubr.f32.gmra.mxu0 %v2826
      %v2963 = vpop.f32.mrf.mxu0
      %v2964 = vadd.f32 0.0, %v2963
      %v2965 = vpop.f32.mrf.mxu0
      %2966 = vmatprep.mubr.f32.mxu0 0.0
      %2967 = vmatmul.mubr.f32.gmra.mxu0 %v2828
      %v2968 = vpop.f32.mrf.mxu0
      %v2969 = vadd.f32 0.0, %v2968
      %v2970 = vpop.f32.mrf.mxu0
      %2971 = vmatprep.mubr.f32.mxu0 0.0
      %2972 = vmatmul.mubr.f32.gmra.mxu0 %v2830
      %v2973 = vpop.f32.mrf.mxu0
      %v2974 = vadd.f32 0.0, %v2973
      %v2975 = vpop.f32.mrf.mxu0
      %2976 = vdwg.mxu0
      %2993 = vrot.lane.b32.xlu0 %v2899, 16
      %v2994 = vpop.permute.xlu0 %2993
      %2995 = vrot.lane.b32.xlu0 %v2904, 16
      %v2996 = vpop.permute.xlu0 %2995
      %2997 = vrot.lane.b32.xlu0 %v2909, 16
      %v2998 = vpop.permute.xlu0 %2997
      %2999 = vrot.lane.b32.xlu0 %v2914, 16
      %v3000 = vpop.permute.xlu0 %2999
      %3001 = vrot.lane.b32.xlu0 %v2919, 16
      %v3002 = vpop.permute.xlu0 %3001
      %3003 = vrot.lane.b32.xlu0 %v2924, 16
      %v3004 = vpop.permute.xlu0 %3003
      %3005 = vrot.lane.b32.xlu0 %v2929, 16
      %v3006 = vpop.permute.xlu0 %3005
      %3007 = vrot.lane.b32.xlu0 %v2934, 16
      %v3008 = vpop.permute.xlu0 %3007
      %3009 = vrot.lane.b32.xlu0 %v2939, 16
      %v3010 = vpop.permute.xlu0 %3009
      %3011 = vrot.lane.b32.xlu0 %v2944, 16
      %v3012 = vpop.permute.xlu0 %3011
      %3013 = vrot.lane.b32.xlu0 %v2949, 16
      %v3014 = vpop.permute.xlu0 %3013
      %3015 = vrot.lane.b32.xlu0 %v2954, 16
      %v3016 = vpop.permute.xlu0 %3015
      %3017 = vrot.lane.b32.xlu0 %v2959, 16
      %v3018 = vpop.permute.xlu0 %3017
      %3019 = vrot.lane.b32.xlu0 %v2964, 16
      %v3020 = vpop.permute.xlu0 %3019
      %3021 = vrot.lane.b32.xlu0 %v2969, 16
      %v3022 = vpop.permute.xlu0 %3021
      %3023 = vrot.lane.b32.xlu0 %v2974, 16
      %v3024 = vpop.permute.xlu0 %3023
      %v3041 = vadd.f32 %v429, %v2994
      %v3042 = vadd.f32 %v435, %v2996
      %v3043 = vadd.f32 %v441, %v2998
      %v3044 = vadd.f32 %v447, %v3000
      %v3045 = vadd.f32 %v453, %v3002
      %v3046 = vadd.f32 %v459, %v3004
      %v3047 = vadd.f32 %v465, %v3006
      %v3048 = vadd.f32 %v471, %v3008
      %v3049 = vadd.f32 %v477, %v3010
      %v3050 = vadd.f32 %v483, %v3012
      %v3051 = vadd.f32 %v489, %v3014
      %v3052 = vadd.f32 %v495, %v3016
      %v3053 = vadd.f32 %v501, %v3018
      %v3054 = vadd.f32 %v507, %v3020
      %v3055 = vadd.f32 %v513, %v3022
      %v3056 = vadd.f32 %v519, %v3024
      %3057 = vmatprep.subr.mxu0 0.0
      %3058 = vmatpush1.msra.mxu0 %v2751
      %3059 = vmatprep.subr.mxu0 0.0
      %3060 = vmatpush1.msra.mxu0 %v2750
      %3061 = vmatprep.subr.mxu0 0.0
      %3062 = vmatpush1.msra.mxu0 %v2749
      %3063 = vmatprep.subr.mxu0 0.0
      %3064 = vmatpush1.msra.mxu0 %v2748
      %3065 = vmatprep.subr.mxu0 0.0
      %3066 = vmatpush1.msra.mxu0 %v2747
      %3067 = vmatprep.subr.mxu0 0.0
      %3068 = vmatpush1.msra.mxu0 %v2746
      %3069 = vmatprep.subr.mxu0 0.0
      %3070 = vmatpush1.msra.mxu0 %v2745
      %3071 = vmatprep.subr.mxu0 0.0
      %3072 = vmatpush1.msra.mxu0 %v2744
      %3073 = vmatprep.subr.mxu0 0.0
      %3074 = vmatpush1.msra.mxu0 %v2743
      %3075 = vmatprep.subr.mxu0 0.0
      %3076 = vmatpush1.msra.mxu0 %v2742
      %3077 = vmatprep.subr.mxu0 0.0
      %3078 = vmatpush1.msra.mxu0 %v2741
      %3079 = vmatprep.subr.mxu0 0.0
      %3080 = vmatpush1.msra.mxu0 %v2740
      %3081 = vmatprep.subr.mxu0 0.0
      %3082 = vmatpush1.msra.mxu0 %v2739
      %3083 = vmatprep.subr.mxu0 0.0
      %3084 = vmatpush1.msra.mxu0 %v2738
      %3085 = vmatprep.subr.mxu0 0.0
      %3086 = vmatpush1.msra.mxu0 %v2737
      %3087 = vmatprep.subr.mxu0 0.0
      %3088 = vmatpush1.msra.mxu0 %v2736
      %3089 = vmatprep.subr.mxu0 0.0
      %3090 = vmatpush2.msra.mxu0 0.0
      %3091 = vmatprep.subr.mxu0 0.0
      %3092 = vmatpush2.msra.mxu0 0.0
      %3093 = vmatprep.subr.mxu0 0.0
      %3094 = vmatpush2.msra.mxu0 0.0
      %3095 = vmatprep.subr.mxu0 0.0
      %3096 = vmatpush2.msra.mxu0 0.0
      %3097 = vmatprep.subr.mxu0 0.0
      %3098 = vmatpush2.msra.mxu0 0.0
      %3099 = vmatprep.subr.mxu0 0.0
      %3100 = vmatpush2.msra.mxu0 0.0
      %3101 = vmatprep.subr.mxu0 0.0
      %3102 = vmatpush2.msra.mxu0 0.0
      %3103 = vmatprep.subr.mxu0 0.0
      %3104 = vmatpush2.msra.mxu0 0.0
      %3105 = vmatprep.subr.mxu0 0.0
      %3106 = vmatpush2.msra.mxu0 0.0
      %3107 = vmatprep.subr.mxu0 0.0
      %3108 = vmatpush2.msra.mxu0 0.0
      %3109 = vmatprep.subr.mxu0 0.0
      %3110 = vmatpush2.msra.mxu0 0.0
      %3111 = vmatprep.subr.mxu0 0.0
      %3112 = vmatpush2.msra.mxu0 0.0
      %3113 = vmatprep.subr.mxu0 0.0
      %3114 = vmatpush2.msra.mxu0 0.0
      %3115 = vmatprep.subr.mxu0 0.0
      %3116 = vmatpush2.msra.mxu0 0.0
      %3117 = vmatprep.subr.mxu0 0.0
      %3118 = vmatpush2.msra.mxu0 0.0
      %3119 = vmatprep.subr.mxu0 0.0
      %3120 = vmatpush2.msra.mxu0 0.0
      %3121 = vmatprep.mubr.f32.mxu0 0.0
      %3122 = vmatmul.mubr.f32.gmra.mxu0 %v2716
      %v3123 = vpop.f32.mrf.mxu0
      %v3124 = vadd.f32 0.0, %v3123
      %v3125 = vpop.f32.mrf.mxu0
      %3126 = vmatprep.mubr.f32.mxu0 0.0
      %3127 = vmatmul.mubr.f32.gmra.mxu0 %v2717
      %v3128 = vpop.f32.mrf.mxu0
      %v3129 = vadd.f32 0.0, %v3128
      %v3130 = vpop.f32.mrf.mxu0
      %3131 = vmatprep.mubr.f32.mxu0 0.0
      %3132 = vmatmul.mubr.f32.gmra.mxu0 %v2718
      %v3133 = vpop.f32.mrf.mxu0
      %v3134 = vadd.f32 0.0, %v3133
      %v3135 = vpop.f32.mrf.mxu0
      %3136 = vmatprep.mubr.f32.mxu0 0.0
      %3137 = vmatmul.mubr.f32.gmra.mxu0 %v2719
      %v3138 = vpop.f32.mrf.mxu0
      %v3139 = vadd.f32 0.0, %v3138
      %v3140 = vpop.f32.mrf.mxu0
      %3141 = vmatprep.mubr.f32.mxu0 0.0
      %3142 = vmatmul.mubr.f32.gmra.mxu0 %v2720
      %v3143 = vpop.f32.mrf.mxu0
      %v3144 = vadd.f32 0.0, %v3143
      %v3145 = vpop.f32.mrf.mxu0
      %3146 = vmatprep.mubr.f32.mxu0 0.0
      %3147 = vmatmul.mubr.f32.gmra.mxu0 %v2721
      %v3148 = vpop.f32.mrf.mxu0
      %v3149 = vadd.f32 0.0, %v3148
      %v3150 = vpop.f32.mrf.mxu0
      %3151 = vmatprep.mubr.f32.mxu0 0.0
      %3152 = vmatmul.mubr.f32.gmra.mxu0 %v2722
      %v3153 = vpop.f32.mrf.mxu0
      %v3154 = vadd.f32 0.0, %v3153
      %v3155 = vpop.f32.mrf.mxu0
      %3156 = vmatprep.mubr.f32.mxu0 0.0
      %3157 = vmatmul.mubr.f32.gmra.mxu0 %v2723
      %v3158 = vpop.f32.mrf.mxu0
      %v3159 = vadd.f32 0.0, %v3158
      %v3160 = vpop.f32.mrf.mxu0
      %3161 = vmatprep.mubr.f32.mxu0 0.0
      %3162 = vmatmul.mubr.f32.gmra.mxu0 %v2724
      %v3163 = vpop.f32.mrf.mxu0
      %v3164 = vadd.f32 0.0, %v3163
      %v3165 = vpop.f32.mrf.mxu0
      %3166 = vmatprep.mubr.f32.mxu0 0.0
      %3167 = vmatmul.mubr.f32.gmra.mxu0 %v2725
      %v3168 = vpop.f32.mrf.mxu0
      %v3169 = vadd.f32 0.0, %v3168
      %v3170 = vpop.f32.mrf.mxu0
      %3171 = vmatprep.mubr.f32.mxu0 0.0
      %3172 = vmatmul.mubr.f32.gmra.mxu0 %v2726
      %v3173 = vpop.f32.mrf.mxu0
      %v3174 = vadd.f32 0.0, %v3173
      %v3175 = vpop.f32.mrf.mxu0
      %3176 = vmatprep.mubr.f32.mxu0 0.0
      %3177 = vmatmul.mubr.f32.gmra.mxu0 %v2727
      %v3178 = vpop.f32.mrf.mxu0
      %v3179 = vadd.f32 0.0, %v3178
      %v3180 = vpop.f32.mrf.mxu0
      %3181 = vmatprep.mubr.f32.mxu0 0.0
      %3182 = vmatmul.mubr.f32.gmra.mxu0 %v2728
      %v3183 = vpop.f32.mrf.mxu0
      %v3184 = vadd.f32 0.0, %v3183
      %v3185 = vpop.f32.mrf.mxu0
      %3186 = vmatprep.mubr.f32.mxu0 0.0
      %3187 = vmatmul.mubr.f32.gmra.mxu0 %v2729
      %v3188 = vpop.f32.mrf.mxu0
      %v3189 = vadd.f32 0.0, %v3188
      %v3190 = vpop.f32.mrf.mxu0
      %3191 = vmatprep.mubr.f32.mxu0 0.0
      %3192 = vmatmul.mubr.f32.gmra.mxu0 %v2730
      %v3193 = vpop.f32.mrf.mxu0
      %v3194 = vadd.f32 0.0, %v3193
      %v3195 = vpop.f32.mrf.mxu0
      %3196 = vmatprep.mubr.f32.mxu0 0.0
      %3197 = vmatmul.mubr.f32.gmra.mxu0 %v2731
      %v3198 = vpop.f32.mrf.mxu0
      %v3199 = vadd.f32 0.0, %v3198
      %v3200 = vpop.f32.mrf.mxu0
      %3201 = vdwg.mxu0
      %3218 = vrot.lane.b32.xlu0 %v3124, 16
      %v3219 = vpop.permute.xlu0 %3218
      %3220 = vrot.lane.b32.xlu0 %v3129, 16
      %v3221 = vpop.permute.xlu0 %3220
      %3222 = vrot.lane.b32.xlu0 %v3134, 16
      %v3223 = vpop.permute.xlu0 %3222
      %3224 = vrot.lane.b32.xlu0 %v3139, 16
      %v3225 = vpop.permute.xlu0 %3224
      %3226 = vrot.lane.b32.xlu0 %v3144, 16
      %v3227 = vpop.permute.xlu0 %3226
      %3228 = vrot.lane.b32.xlu0 %v3149, 16
      %v3229 = vpop.permute.xlu0 %3228
      %3230 = vrot.lane.b32.xlu0 %v3154, 16
      %v3231 = vpop.permute.xlu0 %3230
      %3232 = vrot.lane.b32.xlu0 %v3159, 16
      %v3233 = vpop.permute.xlu0 %3232
      %3234 = vrot.lane.b32.xlu0 %v3164, 16
      %v3235 = vpop.permute.xlu0 %3234
      %3236 = vrot.lane.b32.xlu0 %v3169, 16
      %v3237 = vpop.permute.xlu0 %3236
      %3238 = vrot.lane.b32.xlu0 %v3174, 16
      %v3239 = vpop.permute.xlu0 %3238
      %3240 = vrot.lane.b32.xlu0 %v3179, 16
      %v3241 = vpop.permute.xlu0 %3240
      %3242 = vrot.lane.b32.xlu0 %v3184, 16
      %v3243 = vpop.permute.xlu0 %3242
      %3244 = vrot.lane.b32.xlu0 %v3189, 16
      %v3245 = vpop.permute.xlu0 %3244
      %3246 = vrot.lane.b32.xlu0 %v3194, 16
      %v3247 = vpop.permute.xlu0 %3246
      %3248 = vrot.lane.b32.xlu0 %v3199, 16
      %v3249 = vpop.permute.xlu0 %3248
      %v3266 = vadd.f32 %v3041, %v3219
      %v3267 = vadd.f32 %v3042, %v3221
      %v3268 = vadd.f32 %v3043, %v3223
      %v3269 = vadd.f32 %v3044, %v3225
      %v3270 = vadd.f32 %v3045, %v3227
      %v3271 = vadd.f32 %v3046, %v3229
      %v3272 = vadd.f32 %v3047, %v3231
      %v3273 = vadd.f32 %v3048, %v3233
      %v3274 = vadd.f32 %v3049, %v3235
      %v3275 = vadd.f32 %v3050, %v3237
      %v3276 = vadd.f32 %v3051, %v3239
      %v3277 = vadd.f32 %v3052, %v3241
      %v3278 = vadd.f32 %v3053, %v3243
      %v3279 = vadd.f32 %v3054, %v3245
      %v3280 = vadd.f32 %v3055, %v3247
      %v3281 = vadd.f32 %v3056, %v3249
      %v3282 = vmax.f32 %v3266, 0.0
      %v3283 = vmax.f32 %v3267, 0.0
      %v3284 = vmax.f32 %v3268, 0.0
      %v3285 = vmax.f32 %v3269, 0.0
      %v3286 = vmax.f32 %v3270, 0.0
      %v3287 = vmax.f32 %v3271, 0.0
      %v3288 = vmax.f32 %v3272, 0.0
      %v3289 = vmax.f32 %v3273, 0.0
      %v3290 = vmax.f32 %v3274, 0.0
      %v3291 = vmax.f32 %v3275, 0.0
      %v3292 = vmax.f32 %v3276, 0.0
      %v3293 = vmax.f32 %v3277, 0.0
      %v3294 = vmax.f32 %v3278, 0.0
      %v3295 = vmax.f32 %v3279, 0.0
      %v3296 = vmax.f32 %v3280, 0.0
      %v3297 = vmax.f32 %v3281, 0.0
      %v3298 = vld [vmem:[%s4] sm:$0xff]
      %v3299 = vld [vmem:[%s4 + $0x8] sm:$0xff]
      %v3300 = vld [vmem:[%s4 + $0x10] sm:$0xff]
      %v3301 = vld [vmem:[%s4 + $0x18] sm:$0xff]
      %3318 = vrot.lane.b32.xlu0 %v3282, 112
      %v3319 = vpop.permute.xlu0 %3318
      %3320 = vrot.lane.b32.xlu0 %v3283, 112
      %v3321 = vpop.permute.xlu0 %3320
      %3322 = vrot.lane.b32.xlu0 %v3284, 112
      %v3323 = vpop.permute.xlu0 %3322
      %3324 = vrot.lane.b32.xlu0 %v3285, 112
      %v3325 = vpop.permute.xlu0 %3324
      %3326 = vrot.lane.b32.xlu0 %v3286, 112
      %v3327 = vpop.permute.xlu0 %3326
      %3328 = vrot.lane.b32.xlu0 %v3287, 112
      %v3329 = vpop.permute.xlu0 %3328
      %3330 = vrot.lane.b32.xlu0 %v3288, 112
      %v3331 = vpop.permute.xlu0 %3330
      %3332 = vrot.lane.b32.xlu0 %v3289, 112
      %v3333 = vpop.permute.xlu0 %3332
      %3334 = vrot.lane.b32.xlu0 %v3290, 112
      %v3335 = vpop.permute.xlu0 %3334
      %3336 = vrot.lane.b32.xlu0 %v3291, 112
      %v3337 = vpop.permute.xlu0 %3336
      %3338 = vrot.lane.b32.xlu0 %v3292, 112
      %v3339 = vpop.permute.xlu0 %3338
      %3340 = vrot.lane.b32.xlu0 %v3293, 112
      %v3341 = vpop.permute.xlu0 %3340
      %3342 = vrot.lane.b32.xlu0 %v3294, 112
      %v3343 = vpop.permute.xlu0 %3342
      %3344 = vrot.lane.b32.xlu0 %v3295, 112
      %v3345 = vpop.permute.xlu0 %3344
      %3346 = vrot.lane.b32.xlu0 %v3296, 112
      %v3347 = vpop.permute.xlu0 %3346
      %3348 = vrot.lane.b32.xlu0 %v3297, 112
      %v3349 = vpop.permute.xlu0 %3348
      %vm3350 = vcmask 130048
      %v3351 = vsel %vm3350, %v3319, 0
      %v3353 = vsel %vm3350, %v3321, 0
      %v3355 = vsel %vm3350, %v3323, 0
      %v3357 = vsel %vm3350, %v3325, 0
      %v3359 = vsel %vm3350, %v3327, 0
      %v3361 = vsel %vm3350, %v3329, 0
      %v3363 = vsel %vm3350, %v3331, 0
      %v3365 = vsel %vm3350, %v3333, 0
      %v3367 = vsel %vm3350, %v3335, 0
      %v3369 = vsel %vm3350, %v3337, 0
      %v3371 = vsel %vm3350, %v3339, 0
      %v3373 = vsel %vm3350, %v3341, 0
      %v3375 = vsel %vm3350, %v3343, 0
      %v3377 = vsel %vm3350, %v3345, 0
      %v3379 = vsel %vm3350, %v3347, 0
      %v3381 = vsel %vm3350, %v3349, 0
      %3383 = vmatprep.subr.mxu0 0.0
      %3384 = vmatpush1.msra.mxu0 0.0
      %3385 = vmatprep.subr.mxu0 0.0
      %3386 = vmatpush1.msra.mxu0 0.0
      %3387 = vmatprep.subr.mxu0 0.0
      %3388 = vmatpush1.msra.mxu0 0.0
      %3389 = vmatprep.subr.mxu0 0.0
      %3390 = vmatpush1.msra.mxu0 0.0
      %3391 = vmatprep.subr.mxu0 0.0
      %3392 = vmatpush1.msra.mxu0 0.0
      %3393 = vmatprep.subr.mxu0 0.0
      %3394 = vmatpush1.msra.mxu0 0.0
      %3395 = vmatprep.subr.mxu0 0.0
      %3396 = vmatpush1.msra.mxu0 0.0
      %3397 = vmatprep.subr.mxu0 0.0
      %3398 = vmatpush1.msra.mxu0 0.0
      %3399 = vmatprep.subr.mxu0 0.0
      %3400 = vmatpush1.msra.mxu0 0.0
      %3401 = vmatprep.subr.mxu0 0.0
      %3402 = vmatpush1.msra.mxu0 0.0
      %3403 = vmatprep.subr.mxu0 0.0
      %3404 = vmatpush1.msra.mxu0 0.0
      %3405 = vmatprep.subr.mxu0 0.0
      %3406 = vmatpush1.msra.mxu0 0.0
      %3407 = vmatprep.subr.mxu0 0.0
      %3408 = vmatpush1.msra.mxu0 0.0
      %3409 = vmatprep.subr.mxu0 0.0
      %3410 = vmatpush1.msra.mxu0 0.0
      %3411 = vmatprep.subr.mxu0 0.0
      %3412 = vmatpush1.msra.mxu0 %v3301
      %3413 = vmatprep.subr.mxu0 0.0
      %3414 = vmatpush1.msra.mxu0 %v3300
      %3415 = vmatprep.subr.mxu0 0.0
      %3416 = vmatpush2.msra.mxu0 0.0
      %3417 = vmatprep.subr.mxu0 0.0
      %3418 = vmatpush2.msra.mxu0 0.0
      %3419 = vmatprep.subr.mxu0 0.0
      %3420 = vmatpush2.msra.mxu0 0.0
      %3421 = vmatprep.subr.mxu0 0.0
      %3422 = vmatpush2.msra.mxu0 0.0
      %3423 = vmatprep.subr.mxu0 0.0
      %3424 = vmatpush2.msra.mxu0 0.0
      %3425 = vmatprep.subr.mxu0 0.0
      %3426 = vmatpush2.msra.mxu0 0.0
      %3427 = vmatprep.subr.mxu0 0.0
      %3428 = vmatpush2.msra.mxu0 0.0
      %3429 = vmatprep.subr.mxu0 0.0
      %3430 = vmatpush2.msra.mxu0 0.0
      %3431 = vmatprep.subr.mxu0 0.0
      %3432 = vmatpush2.msra.mxu0 0.0
      %3433 = vmatprep.subr.mxu0 0.0
      %3434 = vmatpush2.msra.mxu0 0.0
      %3435 = vmatprep.subr.mxu0 0.0
      %3436 = vmatpush2.msra.mxu0 0.0
      %3437 = vmatprep.subr.mxu0 0.0
      %3438 = vmatpush2.msra.mxu0 0.0
      %3439 = vmatprep.subr.mxu0 0.0
      %3440 = vmatpush2.msra.mxu0 0.0
      %3441 = vmatprep.subr.mxu0 0.0
      %3442 = vmatpush2.msra.mxu0 0.0
      %3443 = vmatprep.subr.mxu0 0.0
      %3444 = vmatpush2.msra.mxu0 0.0
      %3445 = vmatprep.subr.mxu0 0.0
      %3446 = vmatpush2.msra.mxu0 0.0
      %3447 = vmatprep.mubr.f32.mxu0 0.0
      %3448 = vmatmul.mubr.f32.gmra.mxu0 %v3351
      %v3449 = vpop.f32.mrf.mxu0
      %v3450 = vadd.f32 0.0, %v3449
      %v3451 = vpop.f32.mrf.mxu0
      %3452 = vmatprep.mubr.f32.mxu0 0.0
      %3453 = vmatmul.mubr.f32.gmra.mxu0 %v3353
      %v3454 = vpop.f32.mrf.mxu0
      %v3455 = vadd.f32 0.0, %v3454
      %v3456 = vpop.f32.mrf.mxu0
      %3457 = vmatprep.mubr.f32.mxu0 0.0
      %3458 = vmatmul.mubr.f32.gmra.mxu0 %v3355
      %v3459 = vpop.f32.mrf.mxu0
      %v3460 = vadd.f32 0.0, %v3459
      %v3461 = vpop.f32.mrf.mxu0
      %3462 = vmatprep.mubr.f32.mxu0 0.0
      %3463 = vmatmul.mubr.f32.gmra.mxu0 %v3357
      %v3464 = vpop.f32.mrf.mxu0
      %v3465 = vadd.f32 0.0, %v3464
      %v3466 = vpop.f32.mrf.mxu0
      %3467 = vmatprep.mubr.f32.mxu0 0.0
      %3468 = vmatmul.mubr.f32.gmra.mxu0 %v3359
      %v3469 = vpop.f32.mrf.mxu0
      %v3470 = vadd.f32 0.0, %v3469
      %v3471 = vpop.f32.mrf.mxu0
      %3472 = vmatprep.mubr.f32.mxu0 0.0
      %3473 = vmatmul.mubr.f32.gmra.mxu0 %v3361
      %v3474 = vpop.f32.mrf.mxu0
      %v3475 = vadd.f32 0.0, %v3474
      %v3476 = vpop.f32.mrf.mxu0
      %3477 = vmatprep.mubr.f32.mxu0 0.0
      %3478 = vmatmul.mubr.f32.gmra.mxu0 %v3363
      %v3479 = vpop.f32.mrf.mxu0
      %v3480 = vadd.f32 0.0, %v3479
      %v3481 = vpop.f32.mrf.mxu0
      %3482 = vmatprep.mubr.f32.mxu0 0.0
      %3483 = vmatmul.mubr.f32.gmra.mxu0 %v3365
      %v3484 = vpop.f32.mrf.mxu0
      %v3485 = vadd.f32 0.0, %v3484
      %v3486 = vpop.f32.mrf.mxu0
      %3487 = vmatprep.mubr.f32.mxu0 0.0
      %3488 = vmatmul.mubr.f32.gmra.mxu0 %v3367
      %v3489 = vpop.f32.mrf.mxu0
      %v3490 = vadd.f32 0.0, %v3489
      %v3491 = vpop.f32.mrf.mxu0
      %3492 = vmatprep.mubr.f32.mxu0 0.0
      %3493 = vmatmul.mubr.f32.gmra.mxu0 %v3369
      %v3494 = vpop.f32.mrf.mxu0
      %v3495 = vadd.f32 0.0, %v3494
      %v3496 = vpop.f32.mrf.mxu0
      %3497 = vmatprep.mubr.f32.mxu0 0.0
      %3498 = vmatmul.mubr.f32.gmra.mxu0 %v3371
      %v3499 = vpop.f32.mrf.mxu0
      %v3500 = vadd.f32 0.0, %v3499
      %v3501 = vpop.f32.mrf.mxu0
      %3502 = vmatprep.mubr.f32.mxu0 0.0
      %3503 = vmatmul.mubr.f32.gmra.mxu0 %v3373
      %v3504 = vpop.f32.mrf.mxu0
      %v3505 = vadd.f32 0.0, %v3504
      %v3506 = vpop.f32.mrf.mxu0
      %3507 = vmatprep.mubr.f32.mxu0 0.0
      %3508 = vmatmul.mubr.f32.gmra.mxu0 %v3375
      %v3509 = vpop.f32.mrf.mxu0
      %v3510 = vadd.f32 0.0, %v3509
      %v3511 = vpop.f32.mrf.mxu0
      %3512 = vmatprep.mubr.f32.mxu0 0.0
      %3513 = vmatmul.mubr.f32.gmra.mxu0 %v3377
      %v3514 = vpop.f32.mrf.mxu0
      %v3515 = vadd.f32 0.0, %v3514
      %v3516 = vpop.f32.mrf.mxu0
      %3517 = vmatprep.mubr.f32.mxu0 0.0
      %3518 = vmatmul.mubr.f32.gmra.mxu0 %v3379
      %v3519 = vpop.f32.mrf.mxu0
      %v3520 = vadd.f32 0.0, %v3519
      %v3521 = vpop.f32.mrf.mxu0
      %3522 = vmatprep.mubr.f32.mxu0 0.0
      %3523 = vmatmul.mubr.f32.gmra.mxu0 %v3381
      %v3524 = vpop.f32.mrf.mxu0
      %v3525 = vadd.f32 0.0, %v3524
      %v3526 = vpop.f32.mrf.mxu0
      %3527 = vdwg.mxu0
      %v3529 = vsel %vm3350, %v523, 0
      %v3532 = vsel %vm3350, %v524, 0
      %v3535 = vsel %vm3350, %v525, 0
      %v3538 = vsel %vm3350, %v526, 0
      %v3541 = vsel %vm3350, %v527, 0
      %v3544 = vsel %vm3350, %v528, 0
      %v3547 = vsel %vm3350, %v529, 0
      %v3550 = vsel %vm3350, %v530, 0
      %v3553 = vsel %vm3350, %v531, 0
      %v3556 = vsel %vm3350, %v532, 0
      %v3559 = vsel %vm3350, %v533, 0
      %v3562 = vsel %vm3350, %v534, 0
      %v3565 = vsel %vm3350, %v535, 0
      %v3568 = vsel %vm3350, %v536, 0
      %v3571 = vsel %vm3350, %v537, 0
      %v3574 = vsel %vm3350, %v538, 0
      %3576 = vmatprep.subr.mxu0 0.0
      %3577 = vmatpush1.msra.mxu0 0.0
      %3578 = vmatprep.subr.mxu0 0.0
      %3579 = vmatpush1.msra.mxu0 0.0
      %3580 = vmatprep.subr.mxu0 0.0
      %3581 = vmatpush1.msra.mxu0 0.0
      %3582 = vmatprep.subr.mxu0 0.0
      %3583 = vmatpush1.msra.mxu0 0.0
      %3584 = vmatprep.subr.mxu0 0.0
      %3585 = vmatpush1.msra.mxu0 0.0
      %3586 = vmatprep.subr.mxu0 0.0
      %3587 = vmatpush1.msra.mxu0 0.0
      %3588 = vmatprep.subr.mxu0 0.0
      %3589 = vmatpush1.msra.mxu0 0.0
      %3590 = vmatprep.subr.mxu0 0.0
      %3591 = vmatpush1.msra.mxu0 0.0
      %3592 = vmatprep.subr.mxu0 0.0
      %3593 = vmatpush1.msra.mxu0 0.0
      %3594 = vmatprep.subr.mxu0 0.0
      %3595 = vmatpush1.msra.mxu0 0.0
      %3596 = vmatprep.subr.mxu0 0.0
      %3597 = vmatpush1.msra.mxu0 0.0
      %3598 = vmatprep.subr.mxu0 0.0
      %3599 = vmatpush1.msra.mxu0 0.0
      %3600 = vmatprep.subr.mxu0 0.0
      %3601 = vmatpush1.msra.mxu0 0.0
      %3602 = vmatprep.subr.mxu0 0.0
      %3603 = vmatpush1.msra.mxu0 0.0
      %3604 = vmatprep.subr.mxu0 0.0
      %3605 = vmatpush1.msra.mxu0 %v3299
      %3606 = vmatprep.subr.mxu0 0.0
      %3607 = vmatpush1.msra.mxu0 %v3298
      %3608 = vmatprep.subr.mxu0 0.0
      %3609 = vmatpush2.msra.mxu0 0.0
      %3610 = vmatprep.subr.mxu0 0.0
      %3611 = vmatpush2.msra.mxu0 0.0
      %3612 = vmatprep.subr.mxu0 0.0
      %3613 = vmatpush2.msra.mxu0 0.0
      %3614 = vmatprep.subr.mxu0 0.0
      %3615 = vmatpush2.msra.mxu0 0.0
      %3616 = vmatprep.subr.mxu0 0.0
      %3617 = vmatpush2.msra.mxu0 0.0
      %3618 = vmatprep.subr.mxu0 0.0
      %3619 = vmatpush2.msra.mxu0 0.0
      %3620 = vmatprep.subr.mxu0 0.0
      %3621 = vmatpush2.msra.mxu0 0.0
      %3622 = vmatprep.subr.mxu0 0.0
      %3623 = vmatpush2.msra.mxu0 0.0
      %3624 = vmatprep.subr.mxu0 0.0
      %3625 = vmatpush2.msra.mxu0 0.0
      %3626 = vmatprep.subr.mxu0 0.0
      %3627 = vmatpush2.msra.mxu0 0.0
      %3628 = vmatprep.subr.mxu0 0.0
      %3629 = vmatpush2.msra.mxu0 0.0
      %3630 = vmatprep.subr.mxu0 0.0
      %3631 = vmatpush2.msra.mxu0 0.0
      %3632 = vmatprep.subr.mxu0 0.0
      %3633 = vmatpush2.msra.mxu0 0.0
      %3634 = vmatprep.subr.mxu0 0.0
      %3635 = vmatpush2.msra.mxu0 0.0
      %3636 = vmatprep.subr.mxu0 0.0
      %3637 = vmatpush2.msra.mxu0 0.0
      %3638 = vmatprep.subr.mxu0 0.0
      %3639 = vmatpush2.msra.mxu0 0.0
      %3640 = vmatprep.mubr.f32.mxu0 0.0
      %3641 = vmatmul.mubr.f32.gmra.mxu0 %v3529
      %v3642 = vpop.f32.mrf.mxu0
      %v3643 = vadd.f32 %v3450, %v3642
      %v3644 = vpop.f32.mrf.mxu0
      %3645 = vmatprep.mubr.f32.mxu0 0.0
      %3646 = vmatmul.mubr.f32.gmra.mxu0 %v3532
      %v3647 = vpop.f32.mrf.mxu0
      %v3648 = vadd.f32 %v3455, %v3647
      %v3649 = vpop.f32.mrf.mxu0
      %3650 = vmatprep.mubr.f32.mxu0 0.0
      %3651 = vmatmul.mubr.f32.gmra.mxu0 %v3535
      %v3652 = vpop.f32.mrf.mxu0
      %v3653 = vadd.f32 %v3460, %v3652
      %v3654 = vpop.f32.mrf.mxu0
      %3655 = vmatprep.mubr.f32.mxu0 0.0
      %3656 = vmatmul.mubr.f32.gmra.mxu0 %v3538
      %v3657 = vpop.f32.mrf.mxu0
      %v3658 = vadd.f32 %v3465, %v3657
      %v3659 = vpop.f32.mrf.mxu0
      %3660 = vmatprep.mubr.f32.mxu0 0.0
      %3661 = vmatmul.mubr.f32.gmra.mxu0 %v3541
      %v3662 = vpop.f32.mrf.mxu0
      %v3663 = vadd.f32 %v3470, %v3662
      %v3664 = vpop.f32.mrf.mxu0
      %3665 = vmatprep.mubr.f32.mxu0 0.0
      %3666 = vmatmul.mubr.f32.gmra.mxu0 %v3544
      %v3667 = vpop.f32.mrf.mxu0
      %v3668 = vadd.f32 %v3475, %v3667
      %v3669 = vpop.f32.mrf.mxu0
      %3670 = vmatprep.mubr.f32.mxu0 0.0
      %3671 = vmatmul.mubr.f32.gmra.mxu0 %v3547
      %v3672 = vpop.f32.mrf.mxu0
      %v3673 = vadd.f32 %v3480, %v3672
      %v3674 = vpop.f32.mrf.mxu0
      %3675 = vmatprep.mubr.f32.mxu0 0.0
      %3676 = vmatmul.mubr.f32.gmra.mxu0 %v3550
      %v3677 = vpop.f32.mrf.mxu0
      %v3678 = vadd.f32 %v3485, %v3677
      %v3679 = vpop.f32.mrf.mxu0
      %3680 = vmatprep.mubr.f32.mxu0 0.0
      %3681 = vmatmul.mubr.f32.gmra.mxu0 %v3553
      %v3682 = vpop.f32.mrf.mxu0
      %v3683 = vadd.f32 %v3490, %v3682
      %v3684 = vpop.f32.mrf.mxu0
      %3685 = vmatprep.mubr.f32.mxu0 0.0
      %3686 = vmatmul.mubr.f32.gmra.mxu0 %v3556
      %v3687 = vpop.f32.mrf.mxu0
      %v3688 = vadd.f32 %v3495, %v3687
      %v3689 = vpop.f32.mrf.mxu0
      %3690 = vmatprep.mubr.f32.mxu0 0.0
      %3691 = vmatmul.mubr.f32.gmra.mxu0 %v3559
      %v3692 = vpop.f32.mrf.mxu0
      %v3693 = vadd.f32 %v3500, %v3692
      %v3694 = vpop.f32.mrf.mxu0
      %3695 = vmatprep.mubr.f32.mxu0 0.0
      %3696 = vmatmul.mubr.f32.gmra.mxu0 %v3562
      %v3697 = vpop.f32.mrf.mxu0
      %v3698 = vadd.f32 %v3505, %v3697
      %v3699 = vpop.f32.mrf.mxu0
      %3700 = vmatprep.mubr.f32.mxu0 0.0
      %3701 = vmatmul.mubr.f32.gmra.mxu0 %v3565
      %v3702 = vpop.f32.mrf.mxu0
      %v3703 = vadd.f32 %v3510, %v3702
      %v3704 = vpop.f32.mrf.mxu0
      %3705 = vmatprep.mubr.f32.mxu0 0.0
      %3706 = vmatmul.mubr.f32.gmra.mxu0 %v3568
      %v3707 = vpop.f32.mrf.mxu0
      %v3708 = vadd.f32 %v3515, %v3707
      %v3709 = vpop.f32.mrf.mxu0
      %3710 = vmatprep.mubr.f32.mxu0 0.0
      %3711 = vmatmul.mubr.f32.gmra.mxu0 %v3571
      %v3712 = vpop.f32.mrf.mxu0
      %v3713 = vadd.f32 %v3520, %v3712
      %v3714 = vpop.f32.mrf.mxu0
      %3715 = vmatprep.mubr.f32.mxu0 0.0
      %3716 = vmatmul.mubr.f32.gmra.mxu0 %v3574
      %v3717 = vpop.f32.mrf.mxu0
      %v3718 = vadd.f32 %v3525, %v3717
      %v3719 = vpop.f32.mrf.mxu0
      %3720 = vdwg.mxu0
      %v3721 = vld [vmem:[%s5] sm:$0x1]
      %v3723 = vlaneseq
      %v3724 = vshrl.u32 %v3723, 7
      %v3725 = vsub.s32 0, %v3724
      %v3726 = vrot.slane %v3721, %v3725
      %v3728 = vadd.f32 %v3643, %v3726
      %v3729 = vadd.f32 %v3648, %v3726
      %v3730 = vadd.f32 %v3653, %v3726
      %v3731 = vadd.f32 %v3658, %v3726
      %v3732 = vadd.f32 %v3663, %v3726
      %v3733 = vadd.f32 %v3668, %v3726
      %v3734 = vadd.f32 %v3673, %v3726
      %v3735 = vadd.f32 %v3678, %v3726
      %v3736 = vadd.f32 %v3683, %v3726
      %v3737 = vadd.f32 %v3688, %v3726
      %v3738 = vadd.f32 %v3693, %v3726
      %v3739 = vadd.f32 %v3698, %v3726
      %v3740 = vadd.f32 %v3703, %v3726
      %v3741 = vadd.f32 %v3708, %v3726
      %v3742 = vadd.f32 %v3713, %v3726
      %v3743 = vadd.f32 %v3718, %v3726
      %v3744 = vmax.f32 %v3728, 0.0
      %v3745 = vmax.f32 %v3729, 0.0
      %v3746 = vmax.f32 %v3730, 0.0
      %v3747 = vmax.f32 %v3731, 0.0
      %v3748 = vmax.f32 %v3732, 0.0
      %v3749 = vmax.f32 %v3733, 0.0
      %v3750 = vmax.f32 %v3734, 0.0
      %v3751 = vmax.f32 %v3735, 0.0
      %v3752 = vmax.f32 %v3736, 0.0
      %v3753 = vmax.f32 %v3737, 0.0
      %v3754 = vmax.f32 %v3738, 0.0
      %v3755 = vmax.f32 %v3739, 0.0
      %v3756 = vmax.f32 %v3740, 0.0
      %v3757 = vmax.f32 %v3741, 0.0
      %v3758 = vmax.f32 %v3742, 0.0
      %v3759 = vmax.f32 %v3743, 0.0
      %v3760 = vld [vmem:[%s6] sm:$0x1]
      %v3762 = vlaneseq
      %v3763 = vshrl.u32 %v3762, 7
      %v3764 = vsub.s32 0, %v3763
      %v3765 = vrot.slane %v3760, %v3764
      %v3767 = vadd.f32 %v3744, %v3765
      %v3768 = vadd.f32 %v3745, %v3765
      %v3769 = vadd.f32 %v3746, %v3765
      %v3770 = vadd.f32 %v3747, %v3765
      %v3771 = vadd.f32 %v3748, %v3765
      %v3772 = vadd.f32 %v3749, %v3765
      %v3773 = vadd.f32 %v3750, %v3765
      %v3774 = vadd.f32 %v3751, %v3765
      %v3775 = vadd.f32 %v3752, %v3765
      %v3776 = vadd.f32 %v3753, %v3765
      %v3777 = vadd.f32 %v3754, %v3765
      %v3778 = vadd.f32 %v3755, %v3765
      %v3779 = vadd.f32 %v3756, %v3765
      %v3780 = vadd.f32 %v3757, %v3765
      %v3781 = vadd.f32 %v3758, %v3765
      %v3782 = vadd.f32 %v3759, %v3765
      %3783 = vst [vmem:[%s280] sm:$0xff] %v3767
      %3784 = vst [vmem:[%s280 + $0x8] sm:$0xff] %v3768
      %3785 = vst [vmem:[%s280 + $0x10] sm:$0xff] %v3769
      %3786 = vst [vmem:[%s280 + $0x18] sm:$0xff] %v3770
      %3787 = vst [vmem:[%s280 + $0x20] sm:$0xff] %v3771
      %3788 = vst [vmem:[%s280 + $0x28] sm:$0xff] %v3772
      %3789 = vst [vmem:[%s280 + $0x30] sm:$0xff] %v3773
      %3790 = vst [vmem:[%s280 + $0x38] sm:$0xff] %v3774
      %3791 = vst [vmem:[%s280 + $0x40] sm:$0xff] %v3775
      %3792 = vst [vmem:[%s280 + $0x48] sm:$0xff] %v3776
      %3793 = vst [vmem:[%s280 + $0x50] sm:$0xff] %v3777
      %3794 = vst [vmem:[%s280 + $0x58] sm:$0xff] %v3778
      %3795 = vst [vmem:[%s280 + $0x60] sm:$0xff] %v3779
      %3796 = vst [vmem:[%s280 + $0x68] sm:$0xff] %v3780
      %3797 = vst [vmem:[%s280 + $0x70] sm:$0xff] %v3781
      %3798 = vst [vmem:[%s280 + $0x78] sm:$0xff] %v3782
      %s3799 = smul.u32 16, %s18
      %p3800 = scmp.lt.s32.totalorder %s3799, 31
      %s3801 = scalar_select %p3800, %s3799, 31
      %s3802 = smul.addr %s3801, 8
      %s3803 = scalar_lea.vmem %s7, %s3802
      // Predicated region
      $region49: #{stem2_forward.1} parent=47 // pred_check
        %p3804 = pneg %p188
      $region50: #{stem2_forward.1} parent=47 // pred_check_branch
        %3806 = sbr.rel (%p3804) target = $region52
      $region51: #{stem2_forward.1} parent=47 // pred_region
        %s3807 = smul.u32 16, %s18
      $region52: #{stem2_forward.1} parent=47 // pred_fallthru
        _
    $region48: #{stem2_forward.1} parent=5 // pred_fallthru
      _
    %p3808 = scmp.le.s32.totalorder 2, %s13
    // Predicated region
    $region53: #{stem2_forward.1} parent=5 // pred_check
      %p3809 = pneg %p3808
    $region54: #{stem2_forward.1} parent=5 // pred_check_branch
      %3811 = sbr.rel (%p3809) target = $region56
    $region55: #{stem2_forward.1} parent=5 // pred_region
      %s3812 = ssub.s32 %s13, 2
      // Predicated region
      $region57: #{stem2_forward.1} parent=55 // pred_check
        %p3813 = pneg %p194
      $region58: #{stem2_forward.1} parent=55 // pred_check_branch
        %3815 = sbr.rel (%p3813) target = $region60
      $region59: #{stem2_forward.1} parent=55 // pred_region
        %s3816 = smul.u32 16, %s19
        %p3817 = scmp.lt.s32.totalorder %s3816, 31
        %s3818 = scalar_select %p3817, %s3816, 31
        %s3819 = smul.addr %s3818, 8
        %s3820 = scalar_lea.vmem %s7, %s3819
      $region60: #{stem2_forward.1} parent=55 // pred_fallthru
        _
    $region56: #{stem2_forward.1} parent=5 // pred_fallthru
      _
  $region6: #{stem2_forward.1} parent=0 // loop_footer
    %s17 = sadd.s32 1, %s13
  $region7: #{stem2_forward.1} parent=0 // loop_footer_branch
    %12 = sbr.rel target = $region3
  $region8: #{stem2_forward.1} parent=0 // loop_exit
    _

</llo_original>
